<compile_context>
chip_gen: v7x
topology: tpu7x:2x2x1
jax: 0.10.0
libtpu: 0.0.40
codegen_flags: <defaults>
</compile_context>

<pallas_src>
import functools

import jax
import jax.numpy as jnp
from jax.experimental import pallas as pl
from jax.experimental.pallas import tpu as pltpu

EPS = 1e-5

_COMPILER_PARAMS = pltpu.CompilerParams(
    dimension_semantics=("parallel",),      # image axis -> both TCs on v7x
    vmem_limit_bytes=32 * 1024 * 1024,
)


# ----------------------------------------------------------------------------
# Kernels
# ----------------------------------------------------------------------------
def _conv_stats_kernel(x_ref, w_ref, out_ref, st_ref, *, stride, ho, wo):
    """3x3 conv (implicit im2col: 9 shifted matmuls) + per-image channel stats.

    stride == 1: x_ref is (1, Ho+2, Wo+2, Cin) bf16 (zero-padded image).
    stride == 2: x_ref is (1, 4, (H+2)//2, (W+2)//2, Cin) bf16, the 4-phase
                 space-to-depth view of the padded image, so all window reads
                 are contiguous slices (no strided slicing in-kernel).
    w_ref:  (9, Cin, Cout) bf16 taps.
    out_ref:(1, Ho, Wo, Cout) f32 raw conv output.
    st_ref: (1, 2, Cout) f32 -> [sum, sum-of-squares] for this image.
    """
    cin = w_ref.shape[1]
    cout = w_ref.shape[2]
    acc = jnp.zeros((ho * wo, cout), jnp.float32)
    for kh in range(3):
        for kw in range(3):
            if stride == 1:
                win = x_ref[0, kh:kh + ho, kw:kw + wo, :]
            else:
                p = (kh % 2) * 2 + (kw % 2)
                r0 = kh // 2
                c0 = kw // 2
                win = x_ref[0, p, r0:r0 + ho, c0:c0 + wo, :]
            acc = acc + jnp.dot(win.reshape(ho * wo, cin),
                                w_ref[kh * 3 + kw],
                                preferred_element_type=jnp.float32)
    out_ref[0] = acc.reshape(ho, wo, cout)
    st_ref[0, 0:1, :] = jnp.sum(acc, axis=0, keepdims=True)
    st_ref[0, 1:2, :] = jnp.sum(acc * acc, axis=0, keepdims=True)


def _bn_relu_conv_stats_kernel(c1_ref, scale_ref, shift_ref, w_ref,
                               out_ref, st2_ref, pad_ref):
    """Fused: bn1-apply (folded scale/shift) + relu + 3x3 stride-1 conv2 + stats2.

    c1_ref:    (1, Ho, Wo, C1) f32 raw conv1 output of this image
    scale_ref: (1, C1) f32 folded batch-norm scale   (gamma / sqrt(var+eps))
    shift_ref: (1, C1) f32 folded batch-norm shift   (beta - mean*scale)
    w_ref:     (9, C1, C2) bf16
    pad_ref:   VMEM scratch (Ho+2, Wo+2, C1) f32 holding the zero-padded,
               normalized+relu'd activation (keeps it out of HBM entirely).
    """
    ho, wo, c1 = c1_ref.shape[1], c1_ref.shape[2], c1_ref.shape[3]
    c2 = out_ref.shape[3]
    y = jnp.maximum(c1_ref[0] * scale_ref[...] + shift_ref[...], 0.0)
    pad_ref[...] = jnp.zeros_like(pad_ref)
    pad_ref[1:ho + 1, 1:wo + 1, :] = y
    acc = jnp.zeros((ho * wo, c2), jnp.float32)
    for kh in range(3):
        for kw in range(3):
            win = pad_ref[kh:kh + ho, kw:kw + wo, :].astype(jnp.bfloat16)
            acc = acc + jnp.dot(win.reshape(ho * wo, c1),
                                w_ref[kh * 3 + kw],
                                preferred_element_type=jnp.float32)
    out_ref[0] = acc.reshape(ho, wo, c2)
    st2_ref[0, 0:1, :] = jnp.sum(acc, axis=0, keepdims=True)
    st2_ref[0, 1:2, :] = jnp.sum(acc * acc, axis=0, keepdims=True)


def _bn_residual_kernel(c2_ref, scale_ref, shift_ref, sc_ref, out_ref, *, mode):
    """Fused: bn2-apply (folded scale/shift) + shortcut add + final relu.

    mode == "identity":    sc_ref is (1, Ho, Wo, C2)     (the block input)
    mode == "avgpool":     sc_ref is (1, 4, Ho, Wo, C2)  4-phase block input;
                           AvgPool2d(2) == mean of the 4 phases.
    mode == "avgpool_pad": like "avgpool" with Cin == C2 // 2; the pooled
                           shortcut is concatenated with zeros along channels
                           (the torch.cat(..., zeros) branch) before the add.
    """
    y = c2_ref[0] * scale_ref[...] + shift_ref[...]
    if mode == "identity":
        sc = sc_ref[0]
    else:
        sc = (sc_ref[0, 0] + sc_ref[0, 1] + sc_ref[0, 2] + sc_ref[0, 3]) * 0.25
        if mode == "avgpool_pad":
            sc = jnp.concatenate([sc, jnp.zeros_like(sc)], axis=-1)
    out_ref[0] = jnp.maximum(y + sc, 0.0)


# ----------------------------------------------------------------------------
# Wrappers (layout-only glue: transpose / pad / phase split / BN fold)
# ----------------------------------------------------------------------------
def _phase_split(x):
    """(N, H, W, C) -> (N, 4, H//2, W//2, C); phase p = 2*(row%2) + (col%2)."""
    n, h, w, c = x.shape
    x = x.reshape(n, h // 2, 2, w // 2, 2, c)
    x = jnp.transpose(x, (0, 2, 4, 1, 3, 5))
    return x.reshape(n, 4, h // 2, w // 2, c)


def _fold_bn(stats, gamma, beta, count):
    """Fold per-image [sum, sumsq] stats into per-channel scale/shift (1, C)."""
    s = jnp.sum(stats[:, 0, :], axis=0, keepdims=True)
    ss = jnp.sum(stats[:, 1, :], axis=0, keepdims=True)
    mean = s * (1.0 / count)
    var = jnp.maximum(ss * (1.0 / count) - mean * mean, 0.0)
    scale = gamma * jax.lax.rsqrt(var + EPS)
    shift = beta - mean * scale
    return scale, shift


def _conv_stats(x_nhwc, w_taps, stride):
    """3x3 conv, pad=1, stride in {1,2}; returns (raw f32 out, per-image stats)."""
    n, h, w, cin = x_nhwc.shape
    cout = w_taps.shape[2]
    ho = (h + 2 - 3) // stride + 1
    wo = (w + 2 - 3) // stride + 1
    xp = jnp.pad(x_nhwc, ((0, 0), (1, 1), (1, 1), (0, 0))).astype(jnp.bfloat16)
    if stride == 1:
        x_in = xp
        x_spec = pl.BlockSpec((1, h + 2, w + 2, cin), lambda i: (i, 0, 0, 0))
    else:
        assert stride == 2 and h % 2 == 0 and w % 2 == 0
        x_in = _phase_split(xp)
        x_spec = pl.BlockSpec((1, 4, (h + 2) // 2, (w + 2) // 2, cin),
                              lambda i: (i, 0, 0, 0, 0))
    conv, stats = pl.pallas_call(
        functools.partial(_conv_stats_kernel, stride=stride, ho=ho, wo=wo),
        grid=(n,),
        in_specs=[x_spec,
                  pl.BlockSpec((9, cin, cout), lambda i: (0, 0, 0))],
        out_specs=(pl.BlockSpec((1, ho, wo, cout), lambda i: (i, 0, 0, 0)),
                   pl.BlockSpec((1, 2, cout), lambda i: (i, 0, 0))),
        out_shape=(jax.ShapeDtypeStruct((n, ho, wo, cout), jnp.float32),
                   jax.ShapeDtypeStruct((n, 2, cout), jnp.float32)),
        compiler_params=_COMPILER_PARAMS,
    )(x_in, w_taps)
    return conv, stats, ho, wo


@functools.partial(jax.jit, static_argnames=("stride",))
def basic_block_forward(params, x_nchw, *, stride):
    """BasicBlock forward (train-mode BN).  x in NCHW like torch; returns NCHW."""
    in_planes = params["conv1_w_taps"].shape[1]
    planes = params["conv1_w_taps"].shape[2]
    x = jnp.transpose(x_nchw, (0, 2, 3, 1)).astype(jnp.float32)     # NHWC
    n, h, w, _ = x.shape

    # ---- conv1 + per-image BN1 stats ------------------------------------
    c1, st1, ho, wo = _conv_stats(x, params["conv1_w_taps"], stride)
    count = float(n * ho * wo)              # BN element count per channel
    bn1_scale, bn1_shift = _fold_bn(st1, params["bn1_g"], params["bn1_b"], count)

    # ---- bn1 + relu + conv2 (stride 1) + per-image BN2 stats, fused ------
    c2, st2 = pl.pallas_call(
        _bn_relu_conv_stats_kernel,
        grid=(n,),
        in_specs=[pl.BlockSpec((1, ho, wo, planes), lambda i: (i, 0, 0, 0)),
                  pl.BlockSpec((1, planes), lambda i: (0, 0)),
                  pl.BlockSpec((1, planes), lambda i: (0, 0)),
                  pl.BlockSpec((9, planes, planes), lambda i: (0, 0, 0))],
        out_specs=(pl.BlockSpec((1, ho, wo, planes), lambda i: (i, 0, 0, 0)),
                   pl.BlockSpec((1, 2, planes), lambda i: (i, 0, 0))),
        out_shape=(jax.ShapeDtypeStruct((n, ho, wo, planes), jnp.float32),
                   jax.ShapeDtypeStruct((n, 2, planes), jnp.float32)),
        scratch_shapes=[pltpu.VMEM((ho + 2, wo + 2, planes), jnp.float32)],
        compiler_params=_COMPILER_PARAMS,
    )(c1, bn1_scale, bn1_shift, params["conv2_w_taps"])

    bn2_scale, bn2_shift = _fold_bn(st2, params["bn2_g"], params["bn2_b"], count)

    # ---- bn2 + shortcut add + relu ---------------------------------------
    if stride == 1 and in_planes == planes:
        mode = "identity"
        sc_in = x
        sc_spec = pl.BlockSpec((1, h, w, in_planes), lambda i: (i, 0, 0, 0))
    else:
        assert stride == 2 and h % 2 == 0 and w % 2 == 0
        mode = "avgpool" if in_planes == planes else "avgpool_pad"
        if mode == "avgpool_pad":
            assert planes == 2 * in_planes, "torch.cat zero-pad needs planes == 2*in_planes"
        sc_in = _phase_split(x)             # (N, 4, H//2, W//2, Cin)
        sc_spec = pl.BlockSpec((1, 4, h // 2, w // 2, in_planes),
                               lambda i: (i, 0, 0, 0, 0))

    out = pl.pallas_call(
        functools.partial(_bn_residual_kernel, mode=mode),
        grid=(n,),
        in_specs=[pl.BlockSpec((1, ho, wo, planes), lambda i: (i, 0, 0, 0)),
                  pl.BlockSpec((1, planes), lambda i: (0, 0)),
                  pl.BlockSpec((1, planes), lambda i: (0, 0)),
                  sc_spec],
        out_specs=pl.BlockSpec((1, ho, wo, planes), lambda i: (i, 0, 0, 0)),
        out_shape=jax.ShapeDtypeStruct((n, ho, wo, planes), jnp.float32),
        compiler_params=_COMPILER_PARAMS,
    )(c2, bn2_scale, bn2_shift, sc_in)

    return jnp.transpose(out, (0, 3, 1, 2))                          # NCHW


# ----------------------------------------------------------------------------
# Parameter init (torch-default BN affine; weight layout precomputed once)
# ----------------------------------------------------------------------------
def init_block_params(key, in_planes, planes):
    k1, k2 = jax.random.split(key)

    def conv_taps(k, cin, cout):
        # torch layout (Cout, Cin, 3, 3) -> (kh*3+kw, Cin, Cout) bf16 taps.
        w = jax.random.normal(k, (cout, cin, 3, 3), jnp.float32) * 0.05
        return jnp.transpose(w, (2, 3, 1, 0)).reshape(9, cin, cout).astype(jnp.bfloat16)

    return {
        "conv1_w_taps": conv_taps(k1, in_planes, planes),
        "conv2_w_taps": conv_taps(k2, planes, planes),
        "bn1_g": jnp.ones((1, planes), jnp.float32),
        "bn1_b": jnp.zeros((1, planes), jnp.float32),
        "bn2_g": jnp.ones((1, planes), jnp.float32),
        "bn2_b": jnp.zeros((1, planes), jnp.float32),
    }


# ----------------------------------------------------------------------------
# Pure-JAX reference (same bf16-rounded weights) for correctness checking
# ----------------------------------------------------------------------------
def reference_block(params, x_nchw, stride):
    def taps_to_oihw(t):
        cin, cout = t.shape[1], t.shape[2]
        return jnp.transpose(t.astype(jnp.float32).reshape(3, 3, cin, cout),
                             (3, 2, 0, 1))

    def conv(x, w, s):
        return jax.lax.conv_general_dilated(
            x, w, (s, s), ((1, 1), (1, 1)),
            dimension_numbers=("NCHW", "OIHW", "NCHW"))

    def bn(x, g, b):
        m = jnp.mean(x, axis=(0, 2, 3), keepdims=True)
        v = jnp.mean((x - m) ** 2, axis=(0, 2, 3), keepdims=True)
        return ((x - m) * jax.lax.rsqrt(v + EPS) * g.reshape(1, -1, 1, 1)
                + b.reshape(1, -1, 1, 1))

    w1 = taps_to_oihw(params["conv1_w_taps"])
    w2 = taps_to_oihw(params["conv2_w_taps"])
    in_planes, planes = w1.shape[1], w1.shape[0]
    out = jax.nn.relu(bn(conv(x_nchw, w1, stride),
                         params["bn1_g"], params["bn1_b"]))
    out = bn(conv(out, w2, 1), params["bn2_g"], params["bn2_b"])
    if stride != 1 or in_planes != planes:
        sc = jax.lax.reduce_window(x_nchw, 0.0, jax.lax.add,
                                   (1, 1, 2, 2), (1, 1, 2, 2), "VALID") * 0.25
        if in_planes != planes:
            sc = jnp.concatenate([sc, jnp.zeros_like(sc)], axis=1)
    else:
        sc = x_nchw
    return jax.nn.relu(out + sc)


# ----------------------------------------------------------------------------
if __name__ == "__main__":
    key = jax.random.PRNGKey(0)
    kx, kp1, kp2 = jax.random.split(key, 3)

    x = jax.random.normal(kx, (2, 64, 16, 16), jnp.float32)   # NCHW like torch

    # Down-sampling block: stride=2, planes = 2*in_planes  -> is_padding branch
    # (AvgPool2d(2) shortcut concatenated with zeros along channels).
    params = init_block_params(kp1, 64, 128)
    out = basic_block_forward(params, x, stride=2)
    jax.block_until_ready(out)
    assert out.shape == (2, 128, 8, 8)
    assert bool(jnp.all(jnp.isfinite(out)))
    ref = reference_block(params, x, 2)
    err = float(jnp.max(jnp.abs(out - ref)))
    assert err < 0.1, f"mismatch vs reference (pad shortcut): {err}"

    # Identity-shortcut block: stride=1, in_planes == planes.
    params_id = init_block_params(kp2, 64, 64)
    out_id = basic_block_forward(params_id, x, stride=1)
    jax.block_until_ready(out_id)
    assert out_id.shape == (2, 64, 16, 16)
    assert bool(jnp.all(jnp.isfinite(out_id)))
    ref_id = reference_block(params_id, x, 1)
    err_id = float(jnp.max(jnp.abs(out_id - ref_id)))
    assert err_id < 0.1, f"mismatch vs reference (identity shortcut): {err_id}"

    print("KERNEL_OK")
</pallas_src>

<mosaic_0001>
module attributes {stable_mosaic.version = 11 : i64} {
  func.func @_conv_stats_kernel(%arg0: i32, %arg1: memref<1x4x9x9x64xbf16, #tpu.memory_space<vmem>>, %arg2: memref<9x64x128xbf16, #tpu.memory_space<vmem>>, %arg3: memref<1x8x8x128xf32, #tpu.memory_space<vmem>>, %arg4: memref<1x2x128xf32, #tpu.memory_space<vmem>>) attributes {dimension_semantics = [#tpu.dimension_semantics<parallel>], iteration_bounds = array<i64: 2>, scalar_prefetch = 0 : i64, scratch_operands = 0 : i64, tpu.core_type = #tpu.core_type<tc>, window_params = [{transform_indices = @transform_0, window_bounds = array<i64: 1, 4, 9, 9, 64>}, {pipeline_mode = #tpu.pipeline_mode<synchronous>, transform_indices = @transform_1, window_bounds = array<i64: 9, 64, 128>}, {transform_indices = @transform_2, window_bounds = array<i64: 1, 8, 8, 128>}, {transform_indices = @transform_3, window_bounds = array<i64: 1, 2, 128>}]} {
    %cst = arith.constant 0.000000e+00 : f32
    %0 = vector.broadcast %cst : f32 to vector<64x128xf32>
    %c0 = arith.constant 0 : index
    %c0_0 = arith.constant 0 : index
    %c0_1 = arith.constant 0 : index
    %c0_2 = arith.constant 0 : index
    %c0_3 = arith.constant 0 : index
    %1 = vector.load %arg1[%c0, %c0_0, %c0_1, %c0_2, %c0_3] : memref<1x4x9x9x64xbf16, #tpu.memory_space<vmem>>, vector<1x1x8x8x64xbf16>
    %2 = vector.shape_cast %1 : vector<1x1x8x8x64xbf16> to vector<8x8x64xbf16>
    %3 = vector.shape_cast %2 : vector<8x8x64xbf16> to vector<64x64xbf16>
    %c0_4 = arith.constant 0 : index
    %c0_5 = arith.constant 0 : index
    %c0_6 = arith.constant 0 : index
    %4 = vector.load %arg2[%c0_4, %c0_5, %c0_6] : memref<9x64x128xbf16, #tpu.memory_space<vmem>>, vector<1x64x128xbf16>
    %5 = vector.shape_cast %4 : vector<1x64x128xbf16> to vector<64x128xbf16>
    %cst_7 = arith.constant dense<0.000000e+00> : vector<64x128xf32>
    %6 = tpu.matmul %3, %5, %cst_7 {dimension_numbers = #tpu.dot_dimension_numbers<[1], [0], [0], [1], [0, 0, 1, 1], [], []>} : vector<64x64xbf16>, vector<64x128xbf16>, vector<64x128xf32> -> vector<64x128xf32>
    %7 = arith.addf %0, %6 : vector<64x128xf32>
    %c0_8 = arith.constant 0 : index
    %c1 = arith.constant 1 : index
    %c0_9 = arith.constant 0 : index
    %c0_10 = arith.constant 0 : index
    %c0_11 = arith.constant 0 : index
    %8 = vector.load %arg1[%c0_8, %c1, %c0_9, %c0_10, %c0_11] : memref<1x4x9x9x64xbf16, #tpu.memory_space<vmem>>, vector<1x1x8x8x64xbf16>
    %9 = vector.shape_cast %8 : vector<1x1x8x8x64xbf16> to vector<8x8x64xbf16>
    %10 = vector.shape_cast %9 : vector<8x8x64xbf16> to vector<64x64xbf16>
    %c1_12 = arith.constant 1 : index
    %c0_13 = arith.constant 0 : index
    %c0_14 = arith.constant 0 : index
    %11 = vector.load %arg2[%c1_12, %c0_13, %c0_14] : memref<9x64x128xbf16, #tpu.memory_space<vmem>>, vector<1x64x128xbf16>
    %12 = vector.shape_cast %11 : vector<1x64x128xbf16> to vector<64x128xbf16>
    %cst_15 = arith.constant dense<0.000000e+00> : vector<64x128xf32>
    %13 = tpu.matmul %10, %12, %cst_15 {dimension_numbers = #tpu.dot_dimension_numbers<[1], [0], [0], [1], [0, 0, 1, 1], [], []>} : vector<64x64xbf16>, vector<64x128xbf16>, vector<64x128xf32> -> vector<64x128xf32>
    %14 = arith.addf %7, %13 : vector<64x128xf32>
    %c0_16 = arith.constant 0 : index
    %c0_17 = arith.constant 0 : index
    %c0_18 = arith.constant 0 : index
    %c1_19 = arith.constant 1 : index
    %c0_20 = arith.constant 0 : index
    %15 = vector.load %arg1[%c0_16, %c0_17, %c0_18, %c1_19, %c0_20] : memref<1x4x9x9x64xbf16, #tpu.memory_space<vmem>>, vector<1x1x8x8x64xbf16>
    %16 = vector.shape_cast %15 : vector<1x1x8x8x64xbf16> to vector<8x8x64xbf16>
    %17 = vector.shape_cast %16 : vector<8x8x64xbf16> to vector<64x64xbf16>
    %c2 = arith.constant 2 : index
    %c0_21 = arith.constant 0 : index
    %c0_22 = arith.constant 0 : index
    %18 = vector.load %arg2[%c2, %c0_21, %c0_22] : memref<9x64x128xbf16, #tpu.memory_space<vmem>>, vector<1x64x128xbf16>
    %19 = vector.shape_cast %18 : vector<1x64x128xbf16> to vector<64x128xbf16>
    %cst_23 = arith.constant dense<0.000000e+00> : vector<64x128xf32>
    %20 = tpu.matmul %17, %19, %cst_23 {dimension_numbers = #tpu.dot_dimension_numbers<[1], [0], [0], [1], [0, 0, 1, 1], [], []>} : vector<64x64xbf16>, vector<64x128xbf16>, vector<64x128xf32> -> vector<64x128xf32>
    %21 = arith.addf %14, %20 : vector<64x128xf32>
    %c0_24 = arith.constant 0 : index
    %c2_25 = arith.constant 2 : index
    %c0_26 = arith.constant 0 : index
    %c0_27 = arith.constant 0 : index
    %c0_28 = arith.constant 0 : index
    %22 = vector.load %arg1[%c0_24, %c2_25, %c0_26, %c0_27, %c0_28] : memref<1x4x9x9x64xbf16, #tpu.memory_space<vmem>>, vector<1x1x8x8x64xbf16>
    %23 = vector.shape_cast %22 : vector<1x1x8x8x64xbf16> to vector<8x8x64xbf16>
    %24 = vector.shape_cast %23 : vector<8x8x64xbf16> to vector<64x64xbf16>
    %c3 = arith.constant 3 : index
    %c0_29 = arith.constant 0 : index
    %c0_30 = arith.constant 0 : index
    %25 = vector.load %arg2[%c3, %c0_29, %c0_30] : memref<9x64x128xbf16, #tpu.memory_space<vmem>>, vector<1x64x128xbf16>
    %26 = vector.shape_cast %25 : vector<1x64x128xbf16> to vector<64x128xbf16>
    %cst_31 = arith.constant dense<0.000000e+00> : vector<64x128xf32>
    %27 = tpu.matmul %24, %26, %cst_31 {dimension_numbers = #tpu.dot_dimension_numbers<[1], [0], [0], [1], [0, 0, 1, 1], [], []>} : vector<64x64xbf16>, vector<64x128xbf16>, vector<64x128xf32> -> vector<64x128xf32>
    %28 = arith.addf %21, %27 : vector<64x128xf32>
    %c0_32 = arith.constant 0 : index
    %c3_33 = arith.constant 3 : index
    %c0_34 = arith.constant 0 : index
    %c0_35 = arith.constant 0 : index
    %c0_36 = arith.constant 0 : index
    %29 = vector.load %arg1[%c0_32, %c3_33, %c0_34, %c0_35, %c0_36] : memref<1x4x9x9x64xbf16, #tpu.memory_space<vmem>>, vector<1x1x8x8x64xbf16>
    %30 = vector.shape_cast %29 : vector<1x1x8x8x64xbf16> to vector<8x8x64xbf16>
    %31 = vector.shape_cast %30 : vector<8x8x64xbf16> to vector<64x64xbf16>
    %c4 = arith.constant 4 : index
    %c0_37 = arith.constant 0 : index
    %c0_38 = arith.constant 0 : index
    %32 = vector.load %arg2[%c4, %c0_37, %c0_38] : memref<9x64x128xbf16, #tpu.memory_space<vmem>>, vector<1x64x128xbf16>
    %33 = vector.shape_cast %32 : vector<1x64x128xbf16> to vector<64x128xbf16>
    %cst_39 = arith.constant dense<0.000000e+00> : vector<64x128xf32>
    %34 = tpu.matmul %31, %33, %cst_39 {dimension_numbers = #tpu.dot_dimension_numbers<[1], [0], [0], [1], [0, 0, 1, 1], [], []>} : vector<64x64xbf16>, vector<64x128xbf16>, vector<64x128xf32> -> vector<64x128xf32>
    %35 = arith.addf %28, %34 : vector<64x128xf32>
    %c0_40 = arith.constant 0 : index
    %c2_41 = arith.constant 2 : index
    %c0_42 = arith.constant 0 : index
    %c1_43 = arith.constant 1 : index
    %c0_44 = arith.constant 0 : index
    %36 = vector.load %arg1[%c0_40, %c2_41, %c0_42, %c1_43, %c0_44] : memref<1x4x9x9x64xbf16, #tpu.memory_space<vmem>>, vector<1x1x8x8x64xbf16>
    %37 = vector.shape_cast %36 : vector<1x1x8x8x64xbf16> to vector<8x8x64xbf16>
    %38 = vector.shape_cast %37 : vector<8x8x64xbf16> to vector<64x64xbf16>
    %c5 = arith.constant 5 : index
    %c0_45 = arith.constant 0 : index
    %c0_46 = arith.constant 0 : index
    %39 = vector.load %arg2[%c5, %c0_45, %c0_46] : memref<9x64x128xbf16, #tpu.memory_space<vmem>>, vector<1x64x128xbf16>
    %40 = vector.shape_cast %39 : vector<1x64x128xbf16> to vector<64x128xbf16>
    %cst_47 = arith.constant dense<0.000000e+00> : vector<64x128xf32>
    %41 = tpu.matmul %38, %40, %cst_47 {dimension_numbers = #tpu.dot_dimension_numbers<[1], [0], [0], [1], [0, 0, 1, 1], [], []>} : vector<64x64xbf16>, vector<64x128xbf16>, vector<64x128xf32> -> vector<64x128xf32>
    %42 = arith.addf %35, %41 : vector<64x128xf32>
    %c0_48 = arith.constant 0 : index
    %c0_49 = arith.constant 0 : index
    %c1_50 = arith.constant 1 : index
    %c0_51 = arith.constant 0 : index
    %c0_52 = arith.constant 0 : index
    %43 = vector.load %arg1[%c0_48, %c0_49, %c1_50, %c0_51, %c0_52] : memref<1x4x9x9x64xbf16, #tpu.memory_space<vmem>>, vector<1x1x8x8x64xbf16>
    %44 = vector.shape_cast %43 : vector<1x1x8x8x64xbf16> to vector<8x8x64xbf16>
    %45 = vector.shape_cast %44 : vector<8x8x64xbf16> to vector<64x64xbf16>
    %c6 = arith.constant 6 : index
    %c0_53 = arith.constant 0 : index
    %c0_54 = arith.constant 0 : index
    %46 = vector.load %arg2[%c6, %c0_53, %c0_54] : memref<9x64x128xbf16, #tpu.memory_space<vmem>>, vector<1x64x128xbf16>
    %47 = vector.shape_cast %46 : vector<1x64x128xbf16> to vector<64x128xbf16>
    %cst_55 = arith.constant dense<0.000000e+00> : vector<64x128xf32>
    %48 = tpu.matmul %45, %47, %cst_55 {dimension_numbers = #tpu.dot_dimension_numbers<[1], [0], [0], [1], [0, 0, 1, 1], [], []>} : vector<64x64xbf16>, vector<64x128xbf16>, vector<64x128xf32> -> vector<64x128xf32>
    %49 = arith.addf %42, %48 : vector<64x128xf32>
    %c0_56 = arith.constant 0 : index
    %c1_57 = arith.constant 1 : index
    %c1_58 = arith.constant 1 : index
    %c0_59 = arith.constant 0 : index
    %c0_60 = arith.constant 0 : index
    %50 = vector.load %arg1[%c0_56, %c1_57, %c1_58, %c0_59, %c0_60] : memref<1x4x9x9x64xbf16, #tpu.memory_space<vmem>>, vector<1x1x8x8x64xbf16>
    %51 = vector.shape_cast %50 : vector<1x1x8x8x64xbf16> to vector<8x8x64xbf16>
    %52 = vector.shape_cast %51 : vector<8x8x64xbf16> to vector<64x64xbf16>
    %c7 = arith.constant 7 : index
    %c0_61 = arith.constant 0 : index
    %c0_62 = arith.constant 0 : index
    %53 = vector.load %arg2[%c7, %c0_61, %c0_62] : memref<9x64x128xbf16, #tpu.memory_space<vmem>>, vector<1x64x128xbf16>
    %54 = vector.shape_cast %53 : vector<1x64x128xbf16> to vector<64x128xbf16>
    %cst_63 = arith.constant dense<0.000000e+00> : vector<64x128xf32>
    %55 = tpu.matmul %52, %54, %cst_63 {dimension_numbers = #tpu.dot_dimension_numbers<[1], [0], [0], [1], [0, 0, 1, 1], [], []>} : vector<64x64xbf16>, vector<64x128xbf16>, vector<64x128xf32> -> vector<64x128xf32>
    %56 = arith.addf %49, %55 : vector<64x128xf32>
    %c0_64 = arith.constant 0 : index
    %c0_65 = arith.constant 0 : index
    %c1_66 = arith.constant 1 : index
    %c1_67 = arith.constant 1 : index
    %c0_68 = arith.constant 0 : index
    %57 = vector.load %arg1[%c0_64, %c0_65, %c1_66, %c1_67, %c0_68] : memref<1x4x9x9x64xbf16, #tpu.memory_space<vmem>>, vector<1x1x8x8x64xbf16>
    %58 = vector.shape_cast %57 : vector<1x1x8x8x64xbf16> to vector<8x8x64xbf16>
    %59 = vector.shape_cast %58 : vector<8x8x64xbf16> to vector<64x64xbf16>
    %c8 = arith.constant 8 : index
    %c0_69 = arith.constant 0 : index
    %c0_70 = arith.constant 0 : index
    %60 = vector.load %arg2[%c8, %c0_69, %c0_70] : memref<9x64x128xbf16, #tpu.memory_space<vmem>>, vector<1x64x128xbf16>
    %61 = vector.shape_cast %60 : vector<1x64x128xbf16> to vector<64x128xbf16>
    %cst_71 = arith.constant dense<0.000000e+00> : vector<64x128xf32>
    %62 = tpu.matmul %59, %61, %cst_71 {dimension_numbers = #tpu.dot_dimension_numbers<[1], [0], [0], [1], [0, 0, 1, 1], [], []>} : vector<64x64xbf16>, vector<64x128xbf16>, vector<64x128xf32> -> vector<64x128xf32>
    %63 = arith.addf %56, %62 : vector<64x128xf32>
    %64 = vector.shape_cast %63 : vector<64x128xf32> to vector<8x8x128xf32>
    %c0_72 = arith.constant 0 : index
    %c0_73 = arith.constant 0 : index
    %c0_74 = arith.constant 0 : index
    %c0_75 = arith.constant 0 : index
    %65 = vector.load %arg3[%c0_72, %c0_73, %c0_74, %c0_75] : memref<1x8x8x128xf32, #tpu.memory_space<vmem>>, vector<1x8x8x128xf32>
    %66 = vector.shape_cast %65 : vector<1x8x8x128xf32> to vector<8x8x128xf32>
    %67 = vector.shape_cast %64 : vector<8x8x128xf32> to vector<1x8x8x128xf32>
    tpu.vector_store %arg3[%c0_72, %c0_73, %c0_74, %c0_75], %67 {strides = array<i32>} : memref<1x8x8x128xf32, #tpu.memory_space<vmem>>, vector<1x8x8x128xf32>,
    %cst_76 = arith.constant dense<0.000000e+00> : vector<128xf32>
    %68 = vector.multi_reduction <add>, %63, %cst_76 [0] : vector<64x128xf32> to vector<128xf32>
    %69 = vector.shape_cast %68 : vector<128xf32> to vector<1x128xf32>
    %c0_77 = arith.constant 0 : index
    %c0_78 = arith.constant 0 : index
    %c0_79 = arith.constant 0 : index
    %70 = vector.load %arg4[%c0_77, %c0_78, %c0_79] : memref<1x2x128xf32, #tpu.memory_space<vmem>>, vector<1x1x128xf32>
    %71 = vector.shape_cast %70 : vector<1x1x128xf32> to vector<1x128xf32>
    %72 = vector.shape_cast %69 : vector<1x128xf32> to vector<1x1x128xf32>
    tpu.vector_store %arg4[%c0_77, %c0_78, %c0_79], %72 {strides = array<i32>} : memref<1x2x128xf32, #tpu.memory_space<vmem>>, vector<1x1x128xf32>,
    %73 = arith.mulf %63, %63 : vector<64x128xf32>
    %cst_80 = arith.constant dense<0.000000e+00> : vector<128xf32>
    %74 = vector.multi_reduction <add>, %73, %cst_80 [0] : vector<64x128xf32> to vector<128xf32>
    %75 = vector.shape_cast %74 : vector<128xf32> to vector<1x128xf32>
    %c0_81 = arith.constant 0 : index
    %c1_82 = arith.constant 1 : index
    %c0_83 = arith.constant 0 : index
    %76 = vector.load %arg4[%c0_81, %c1_82, %c0_83] : memref<1x2x128xf32, #tpu.memory_space<vmem>>, vector<1x1x128xf32>
    %77 = vector.shape_cast %76 : vector<1x1x128xf32> to vector<1x128xf32>
    %78 = vector.shape_cast %75 : vector<1x128xf32> to vector<1x1x128xf32>
    tpu.vector_store %arg4[%c0_81, %c1_82, %c0_83], %78 {strides = array<i32>} : memref<1x2x128xf32, #tpu.memory_space<vmem>>, vector<1x1x128xf32>,
    return
  }
  func.func @transform_0(%arg0: i32) -> (i32, i32, i32, i32, i32) {
    %c0_i32 = arith.constant 0 : i32
    %c0_i32_0 = arith.constant 0 : i32
    %c0_i32_1 = arith.constant 0 : i32
    %c0_i32_2 = arith.constant 0 : i32
    %c0_i32_3 = arith.constant 0 : i32
    return %arg0, %c0_i32, %c0_i32_0, %c0_i32_1, %c0_i32_2 : i32, i32, i32, i32, i32
  }
  func.func @transform_1(%arg0: i32) -> (i32, i32, i32) {
    %c0_i32 = arith.constant 0 : i32
    %c0_i32_0 = arith.constant 0 : i32
    %c0_i32_1 = arith.constant 0 : i32
    %c0_i32_2 = arith.constant 0 : i32
    return %c0_i32, %c0_i32_0, %c0_i32_1 : i32, i32, i32
  }
  func.func @transform_2(%arg0: i32) -> (i32, i32, i32, i32) {
    %c0_i32 = arith.constant 0 : i32
    %c0_i32_0 = arith.constant 0 : i32
    %c0_i32_1 = arith.constant 0 : i32
    %c0_i32_2 = arith.constant 0 : i32
    return %arg0, %c0_i32, %c0_i32_0, %c0_i32_1 : i32, i32, i32, i32
  }
  func.func @transform_3(%arg0: i32) -> (i32, i32, i32) {
    %c0_i32 = arith.constant 0 : i32
    %c0_i32_0 = arith.constant 0 : i32
    %c0_i32_1 = arith.constant 0 : i32
    return %arg0, %c0_i32, %c0_i32_0 : i32, i32, i32
  }
}

module attributes {stable_mosaic.version = 11 : i64} {
  func.func @_bn_relu_conv_stats_kernel(%arg0: i32, %arg1: memref<1x8x8x128xf32, #tpu.memory_space<vmem>>, %arg2: memref<1x128xf32, #tpu.memory_space<vmem>>, %arg3: memref<1x128xf32, #tpu.memory_space<vmem>>, %arg4: memref<9x128x128xbf16, #tpu.memory_space<vmem>>, %arg5: memref<1x8x8x128xf32, #tpu.memory_space<vmem>>, %arg6: memref<1x2x128xf32, #tpu.memory_space<vmem>>, %arg7: memref<10x10x128xf32, #tpu.memory_space<vmem>>) attributes {dimension_semantics = [#tpu.dimension_semantics<parallel>], iteration_bounds = array<i64: 2>, scalar_prefetch = 0 : i64, scratch_operands = 1 : i64, tpu.core_type = #tpu.core_type<tc>, window_params = [{transform_indices = @transform_0, window_bounds = array<i64: 1, 8, 8, 128>}, {pipeline_mode = #tpu.pipeline_mode<synchronous>, transform_indices = @transform_1, window_bounds = array<i64: 1, 128>}, {pipeline_mode = #tpu.pipeline_mode<synchronous>, transform_indices = @transform_2, window_bounds = array<i64: 1, 128>}, {pipeline_mode = #tpu.pipeline_mode<synchronous>, transform_indices = @transform_3, window_bounds = array<i64: 9, 128, 128>}, {transform_indices = @transform_4, window_bounds = array<i64: 1, 8, 8, 128>}, {transform_indices = @transform_5, window_bounds = array<i64: 1, 2, 128>}]} {
    %c0 = arith.constant 0 : index
    %c0_0 = arith.constant 0 : index
    %c0_1 = arith.constant 0 : index
    %c0_2 = arith.constant 0 : index
    %0 = vector.load %arg1[%c0, %c0_0, %c0_1, %c0_2] : memref<1x8x8x128xf32, #tpu.memory_space<vmem>>, vector<1x8x8x128xf32>
    %1 = vector.shape_cast %0 : vector<1x8x8x128xf32> to vector<8x8x128xf32>
    %c0_3 = arith.constant 0 : index
    %c0_4 = arith.constant 0 : index
    %2 = vector.load %arg2[%c0_3, %c0_4] : memref<1x128xf32, #tpu.memory_space<vmem>>, vector<1x128xf32>
    %3 = vector.shape_cast %2 : vector<1x128xf32> to vector<1x1x128xf32>
    %4 = vector.broadcast %3 : vector<1x1x128xf32> to vector<8x8x128xf32>
    %5 = arith.mulf %1, %4 : vector<8x8x128xf32>
    %c0_5 = arith.constant 0 : index
    %c0_6 = arith.constant 0 : index
    %6 = vector.load %arg3[%c0_5, %c0_6] : memref<1x128xf32, #tpu.memory_space<vmem>>, vector<1x128xf32>
    %7 = vector.shape_cast %6 : vector<1x128xf32> to vector<1x1x128xf32>
    %8 = vector.broadcast %7 : vector<1x1x128xf32> to vector<8x8x128xf32>
    %9 = arith.addf %5, %8 : vector<8x8x128xf32>
    %cst = arith.constant 0.000000e+00 : f32
    %10 = vector.broadcast %cst : f32 to vector<8x8x128xf32>
    %11 = arith.maximumf %9, %10 : vector<8x8x128xf32>
    %cst_7 = arith.constant 0.000000e+00 : f32
    %12 = vector.broadcast %cst_7 : f32 to vector<10x10x128xf32>
    %c0_8 = arith.constant 0 : index
    %c0_9 = arith.constant 0 : index
    %c0_10 = arith.constant 0 : index
    %13 = vector.load %arg7[%c0_8, %c0_9, %c0_10] : memref<10x10x128xf32, #tpu.memory_space<vmem>>, vector<10x10x128xf32>
    tpu.vector_store %arg7[%c0_8, %c0_9, %c0_10], %12 {strides = array<i32>} : memref<10x10x128xf32, #tpu.memory_space<vmem>>, vector<10x10x128xf32>,
    %c1 = arith.constant 1 : index
    %c1_11 = arith.constant 1 : index
    %c0_12 = arith.constant 0 : index
    %14 = vector.load %arg7[%c1, %c1_11, %c0_12] : memref<10x10x128xf32, #tpu.memory_space<vmem>>, vector<8x8x128xf32>
    tpu.vector_store %arg7[%c1, %c1_11, %c0_12], %11 {strides = array<i32>} : memref<10x10x128xf32, #tpu.memory_space<vmem>>, vector<8x8x128xf32>,
    %cst_13 = arith.constant 0.000000e+00 : f32
    %15 = vector.broadcast %cst_13 : f32 to vector<64x128xf32>
    %c0_14 = arith.constant 0 : index
    %c0_15 = arith.constant 0 : index
    %c0_16 = arith.constant 0 : index
    %16 = vector.load %arg7[%c0_14, %c0_15, %c0_16] : memref<10x10x128xf32, #tpu.memory_space<vmem>>, vector<8x8x128xf32>
    %17 = arith.truncf %16 : vector<8x8x128xf32> to vector<8x8x128xbf16>
    %18 = vector.shape_cast %17 : vector<8x8x128xbf16> to vector<64x128xbf16>
    %c0_17 = arith.constant 0 : index
    %c0_18 = arith.constant 0 : index
    %c0_19 = arith.constant 0 : index
    %19 = vector.load %arg4[%c0_17, %c0_18, %c0_19] : memref<9x128x128xbf16, #tpu.memory_space<vmem>>, vector<1x128x128xbf16>
    %20 = vector.shape_cast %19 : vector<1x128x128xbf16> to vector<128x128xbf16>
    %cst_20 = arith.constant dense<0.000000e+00> : vector<64x128xf32>
    %21 = tpu.matmul %18, %20, %cst_20 {dimension_numbers = #tpu.dot_dimension_numbers<[1], [0], [0], [1], [0, 0, 1, 1], [], []>} : vector<64x128xbf16>, vector<128x128xbf16>, vector<64x128xf32> -> vector<64x128xf32>
    %22 = arith.addf %15, %21 : vector<64x128xf32>
    %c0_21 = arith.constant 0 : index
    %c1_22 = arith.constant 1 : index
    %c0_23 = arith.constant 0 : index
    %23 = vector.load %arg7[%c0_21, %c1_22, %c0_23] : memref<10x10x128xf32, #tpu.memory_space<vmem>>, vector<8x8x128xf32>
    %24 = arith.truncf %23 : vector<8x8x128xf32> to vector<8x8x128xbf16>
    %25 = vector.shape_cast %24 : vector<8x8x128xbf16> to vector<64x128xbf16>
    %c1_24 = arith.constant 1 : index
    %c0_25 = arith.constant 0 : index
    %c0_26 = arith.constant 0 : index
    %26 = vector.load %arg4[%c1_24, %c0_25, %c0_26] : memref<9x128x128xbf16, #tpu.memory_space<vmem>>, vector<1x128x128xbf16>
    %27 = vector.shape_cast %26 : vector<1x128x128xbf16> to vector<128x128xbf16>
    %cst_27 = arith.constant dense<0.000000e+00> : vector<64x128xf32>
    %28 = tpu.matmul %25, %27, %cst_27 {dimension_numbers = #tpu.dot_dimension_numbers<[1], [0], [0], [1], [0, 0, 1, 1], [], []>} : vector<64x128xbf16>, vector<128x128xbf16>, vector<64x128xf32> -> vector<64x128xf32>
    %29 = arith.addf %22, %28 : vector<64x128xf32>
    %c0_28 = arith.constant 0 : index
    %c2 = arith.constant 2 : index
    %c0_29 = arith.constant 0 : index
    %30 = vector.load %arg7[%c0_28, %c2, %c0_29] : memref<10x10x128xf32, #tpu.memory_space<vmem>>, vector<8x8x128xf32>
    %31 = arith.truncf %30 : vector<8x8x128xf32> to vector<8x8x128xbf16>
    %32 = vector.shape_cast %31 : vector<8x8x128xbf16> to vector<64x128xbf16>
    %c2_30 = arith.constant 2 : index
    %c0_31 = arith.constant 0 : index
    %c0_32 = arith.constant 0 : index
    %33 = vector.load %arg4[%c2_30, %c0_31, %c0_32] : memref<9x128x128xbf16, #tpu.memory_space<vmem>>, vector<1x128x128xbf16>
    %34 = vector.shape_cast %33 : vector<1x128x128xbf16> to vector<128x128xbf16>
    %cst_33 = arith.constant dense<0.000000e+00> : vector<64x128xf32>
    %35 = tpu.matmul %32, %34, %cst_33 {dimension_numbers = #tpu.dot_dimension_numbers<[1], [0], [0], [1], [0, 0, 1, 1], [], []>} : vector<64x128xbf16>, vector<128x128xbf16>, vector<64x128xf32> -> vector<64x128xf32>
    %36 = arith.addf %29, %35 : vector<64x128xf32>
    %c1_34 = arith.constant 1 : index
    %c0_35 = arith.constant 0 : index
    %c0_36 = arith.constant 0 : index
    %37 = vector.load %arg7[%c1_34, %c0_35, %c0_36] : memref<10x10x128xf32, #tpu.memory_space<vmem>>, vector<8x8x128xf32>
    %38 = arith.truncf %37 : vector<8x8x128xf32> to vector<8x8x128xbf16>
    %39 = vector.shape_cast %38 : vector<8x8x128xbf16> to vector<64x128xbf16>
    %c3 = arith.constant 3 : index
    %c0_37 = arith.constant 0 : index
    %c0_38 = arith.constant 0 : index
    %40 = vector.load %arg4[%c3, %c0_37, %c0_38] : memref<9x128x128xbf16, #tpu.memory_space<vmem>>, vector<1x128x128xbf16>
    %41 = vector.shape_cast %40 : vector<1x128x128xbf16> to vector<128x128xbf16>
    %cst_39 = arith.constant dense<0.000000e+00> : vector<64x128xf32>
    %42 = tpu.matmul %39, %41, %cst_39 {dimension_numbers = #tpu.dot_dimension_numbers<[1], [0], [0], [1], [0, 0, 1, 1], [], []>} : vector<64x128xbf16>, vector<128x128xbf16>, vector<64x128xf32> -> vector<64x128xf32>
    %43 = arith.addf %36, %42 : vector<64x128xf32>
    %c1_40 = arith.constant 1 : index
    %c1_41 = arith.constant 1 : index
    %c0_42 = arith.constant 0 : index
    %44 = vector.load %arg7[%c1_40, %c1_41, %c0_42] : memref<10x10x128xf32, #tpu.memory_space<vmem>>, vector<8x8x128xf32>
    %45 = arith.truncf %44 : vector<8x8x128xf32> to vector<8x8x128xbf16>
    %46 = vector.shape_cast %45 : vector<8x8x128xbf16> to vector<64x128xbf16>
    %c4 = arith.constant 4 : index
    %c0_43 = arith.constant 0 : index
    %c0_44 = arith.constant 0 : index
    %47 = vector.load %arg4[%c4, %c0_43, %c0_44] : memref<9x128x128xbf16, #tpu.memory_space<vmem>>, vector<1x128x128xbf16>
    %48 = vector.shape_cast %47 : vector<1x128x128xbf16> to vector<128x128xbf16>
    %cst_45 = arith.constant dense<0.000000e+00> : vector<64x128xf32>
    %49 = tpu.matmul %46, %48, %cst_45 {dimension_numbers = #tpu.dot_dimension_numbers<[1], [0], [0], [1], [0, 0, 1, 1], [], []>} : vector<64x128xbf16>, vector<128x128xbf16>, vector<64x128xf32> -> vector<64x128xf32>
    %50 = arith.addf %43, %49 : vector<64x128xf32>
    %c1_46 = arith.constant 1 : index
    %c2_47 = arith.constant 2 : index
    %c0_48 = arith.constant 0 : index
    %51 = vector.load %arg7[%c1_46, %c2_47, %c0_48] : memref<10x10x128xf32, #tpu.memory_space<vmem>>, vector<8x8x128xf32>
    %52 = arith.truncf %51 : vector<8x8x128xf32> to vector<8x8x128xbf16>
    %53 = vector.shape_cast %52 : vector<8x8x128xbf16> to vector<64x128xbf16>
    %c5 = arith.constant 5 : index
    %c0_49 = arith.constant 0 : index
    %c0_50 = arith.constant 0 : index
    %54 = vector.load %arg4[%c5, %c0_49, %c0_50] : memref<9x128x128xbf16, #tpu.memory_space<vmem>>, vector<1x128x128xbf16>
    %55 = vector.shape_cast %54 : vector<1x128x128xbf16> to vector<128x128xbf16>
    %cst_51 = arith.constant dense<0.000000e+00> : vector<64x128xf32>
    %56 = tpu.matmul %53, %55, %cst_51 {dimension_numbers = #tpu.dot_dimension_numbers<[1], [0], [0], [1], [0, 0, 1, 1], [], []>} : vector<64x128xbf16>, vector<128x128xbf16>, vector<64x128xf32> -> vector<64x128xf32>
    %57 = arith.addf %50, %56 : vector<64x128xf32>
    %c2_52 = arith.constant 2 : index
    %c0_53 = arith.constant 0 : index
    %c0_54 = arith.constant 0 : index
    %58 = vector.load %arg7[%c2_52, %c0_53, %c0_54] : memref<10x10x128xf32, #tpu.memory_space<vmem>>, vector<8x8x128xf32>
    %59 = arith.truncf %58 : vector<8x8x128xf32> to vector<8x8x128xbf16>
    %60 = vector.shape_cast %59 : vector<8x8x128xbf16> to vector<64x128xbf16>
    %c6 = arith.constant 6 : index
    %c0_55 = arith.constant 0 : index
    %c0_56 = arith.constant 0 : index
    %61 = vector.load %arg4[%c6, %c0_55, %c0_56] : memref<9x128x128xbf16, #tpu.memory_space<vmem>>, vector<1x128x128xbf16>
    %62 = vector.shape_cast %61 : vector<1x128x128xbf16> to vector<128x128xbf16>
    %cst_57 = arith.constant dense<0.000000e+00> : vector<64x128xf32>
    %63 = tpu.matmul %60, %62, %cst_57 {dimension_numbers = #tpu.dot_dimension_numbers<[1], [0], [0], [1], [0, 0, 1, 1], [], []>} : vector<64x128xbf16>, vector<128x128xbf16>, vector<64x128xf32> -> vector<64x128xf32>
    %64 = arith.addf %57, %63 : vector<64x128xf32>
    %c2_58 = arith.constant 2 : index
    %c1_59 = arith.constant 1 : index
    %c0_60 = arith.constant 0 : index
    %65 = vector.load %arg7[%c2_58, %c1_59, %c0_60] : memref<10x10x128xf32, #tpu.memory_space<vmem>>, vector<8x8x128xf32>
    %66 = arith.truncf %65 : vector<8x8x128xf32> to vector<8x8x128xbf16>
    %67 = vector.shape_cast %66 : vector<8x8x128xbf16> to vector<64x128xbf16>
    %c7 = arith.constant 7 : index
    %c0_61 = arith.constant 0 : index
    %c0_62 = arith.constant 0 : index
    %68 = vector.load %arg4[%c7, %c0_61, %c0_62] : memref<9x128x128xbf16, #tpu.memory_space<vmem>>, vector<1x128x128xbf16>
    %69 = vector.shape_cast %68 : vector<1x128x128xbf16> to vector<128x128xbf16>
    %cst_63 = arith.constant dense<0.000000e+00> : vector<64x128xf32>
    %70 = tpu.matmul %67, %69, %cst_63 {dimension_numbers = #tpu.dot_dimension_numbers<[1], [0], [0], [1], [0, 0, 1, 1], [], []>} : vector<64x128xbf16>, vector<128x128xbf16>, vector<64x128xf32> -> vector<64x128xf32>
    %71 = arith.addf %64, %70 : vector<64x128xf32>
    %c2_64 = arith.constant 2 : index
    %c2_65 = arith.constant 2 : index
    %c0_66 = arith.constant 0 : index
    %72 = vector.load %arg7[%c2_64, %c2_65, %c0_66] : memref<10x10x128xf32, #tpu.memory_space<vmem>>, vector<8x8x128xf32>
    %73 = arith.truncf %72 : vector<8x8x128xf32> to vector<8x8x128xbf16>
    %74 = vector.shape_cast %73 : vector<8x8x128xbf16> to vector<64x128xbf16>
    %c8 = arith.constant 8 : index
    %c0_67 = arith.constant 0 : index
    %c0_68 = arith.constant 0 : index
    %75 = vector.load %arg4[%c8, %c0_67, %c0_68] : memref<9x128x128xbf16, #tpu.memory_space<vmem>>, vector<1x128x128xbf16>
    %76 = vector.shape_cast %75 : vector<1x128x128xbf16> to vector<128x128xbf16>
    %cst_69 = arith.constant dense<0.000000e+00> : vector<64x128xf32>
    %77 = tpu.matmul %74, %76, %cst_69 {dimension_numbers = #tpu.dot_dimension_numbers<[1], [0], [0], [1], [0, 0, 1, 1], [], []>} : vector<64x128xbf16>, vector<128x128xbf16>, vector<64x128xf32> -> vector<64x128xf32>
    %78 = arith.addf %71, %77 : vector<64x128xf32>
    %79 = vector.shape_cast %78 : vector<64x128xf32> to vector<8x8x128xf32>
    %c0_70 = arith.constant 0 : index
    %c0_71 = arith.constant 0 : index
    %c0_72 = arith.constant 0 : index
    %c0_73 = arith.constant 0 : index
    %80 = vector.load %arg5[%c0_70, %c0_71, %c0_72, %c0_73] : memref<1x8x8x128xf32, #tpu.memory_space<vmem>>, vector<1x8x8x128xf32>
    %81 = vector.shape_cast %80 : vector<1x8x8x128xf32> to vector<8x8x128xf32>
    %82 = vector.shape_cast %79 : vector<8x8x128xf32> to vector<1x8x8x128xf32>
    tpu.vector_store %arg5[%c0_70, %c0_71, %c0_72, %c0_73], %82 {strides = array<i32>} : memref<1x8x8x128xf32, #tpu.memory_space<vmem>>, vector<1x8x8x128xf32>,
    %cst_74 = arith.constant dense<0.000000e+00> : vector<128xf32>
    %83 = vector.multi_reduction <add>, %78, %cst_74 [0] : vector<64x128xf32> to vector<128xf32>
    %84 = vector.shape_cast %83 : vector<128xf32> to vector<1x128xf32>
    %c0_75 = arith.constant 0 : index
    %c0_76 = arith.constant 0 : index
    %c0_77 = arith.constant 0 : index
    %85 = vector.load %arg6[%c0_75, %c0_76, %c0_77] : memref<1x2x128xf32, #tpu.memory_space<vmem>>, vector<1x1x128xf32>
    %86 = vector.shape_cast %85 : vector<1x1x128xf32> to vector<1x128xf32>
    %87 = vector.shape_cast %84 : vector<1x128xf32> to vector<1x1x128xf32>
    tpu.vector_store %arg6[%c0_75, %c0_76, %c0_77], %87 {strides = array<i32>} : memref<1x2x128xf32, #tpu.memory_space<vmem>>, vector<1x1x128xf32>,
    %88 = arith.mulf %78, %78 : vector<64x128xf32>
    %cst_78 = arith.constant dense<0.000000e+00> : vector<128xf32>
    %89 = vector.multi_reduction <add>, %88, %cst_78 [0] : vector<64x128xf32> to vector<128xf32>
    %90 = vector.shape_cast %89 : vector<128xf32> to vector<1x128xf32>
    %c0_79 = arith.constant 0 : index
    %c1_80 = arith.constant 1 : index
    %c0_81 = arith.constant 0 : index
    %91 = vector.load %arg6[%c0_79, %c1_80, %c0_81] : memref<1x2x128xf32, #tpu.memory_space<vmem>>, vector<1x1x128xf32>
    %92 = vector.shape_cast %91 : vector<1x1x128xf32> to vector<1x128xf32>
    %93 = vector.shape_cast %90 : vector<1x128xf32> to vector<1x1x128xf32>
    tpu.vector_store %arg6[%c0_79, %c1_80, %c0_81], %93 {strides = array<i32>} : memref<1x2x128xf32, #tpu.memory_space<vmem>>, vector<1x1x128xf32>,
    return
  }
  func.func @transform_0(%arg0: i32) -> (i32, i32, i32, i32) {
    %c0_i32 = arith.constant 0 : i32
    %c0_i32_0 = arith.constant 0 : i32
    %c0_i32_1 = arith.constant 0 : i32
    %c0_i32_2 = arith.constant 0 : i32
    return %arg0, %c0_i32, %c0_i32_0, %c0_i32_1 : i32, i32, i32, i32
  }
  func.func @transform_1(%arg0: i32) -> (i32, i32) {
    %c0_i32 = arith.constant 0 : i32
    %c0_i32_0 = arith.constant 0 : i32
    %c0_i32_1 = arith.constant 0 : i32
    return %c0_i32, %c0_i32_0 : i32, i32
  }
  func.func @transform_2(%arg0: i32) -> (i32, i32) {
    %c0_i32 = arith.constant 0 : i32
    %c0_i32_0 = arith.constant 0 : i32
    %c0_i32_1 = arith.constant 0 : i32
    return %c0_i32, %c0_i32_0 : i32, i32
  }
  func.func @transform_3(%arg0: i32) -> (i32, i32, i32) {
    %c0_i32 = arith.constant 0 : i32
    %c0_i32_0 = arith.constant 0 : i32
    %c0_i32_1 = arith.constant 0 : i32
    %c0_i32_2 = arith.constant 0 : i32
    return %c0_i32, %c0_i32_0, %c0_i32_1 : i32, i32, i32
  }
  func.func @transform_4(%arg0: i32) -> (i32, i32, i32, i32) {
    %c0_i32 = arith.constant 0 : i32
    %c0_i32_0 = arith.constant 0 : i32
    %c0_i32_1 = arith.constant 0 : i32
    %c0_i32_2 = arith.constant 0 : i32
    return %arg0, %c0_i32, %c0_i32_0, %c0_i32_1 : i32, i32, i32, i32
  }
  func.func @transform_5(%arg0: i32) -> (i32, i32, i32) {
    %c0_i32 = arith.constant 0 : i32
    %c0_i32_0 = arith.constant 0 : i32
    %c0_i32_1 = arith.constant 0 : i32
    return %arg0, %c0_i32, %c0_i32_0 : i32, i32, i32
  }
}

module attributes {stable_mosaic.version = 11 : i64} {
  func.func @_bn_residual_kernel(%arg0: i32, %arg1: memref<1x8x8x128xf32, #tpu.memory_space<vmem>>, %arg2: memref<1x128xf32, #tpu.memory_space<vmem>>, %arg3: memref<1x128xf32, #tpu.memory_space<vmem>>, %arg4: memref<1x4x8x8x64xf32, #tpu.memory_space<vmem>>, %arg5: memref<1x8x8x128xf32, #tpu.memory_space<vmem>>) attributes {dimension_semantics = [#tpu.dimension_semantics<parallel>], iteration_bounds = array<i64: 2>, scalar_prefetch = 0 : i64, scratch_operands = 0 : i64, tpu.core_type = #tpu.core_type<tc>, window_params = [{transform_indices = @transform_0, window_bounds = array<i64: 1, 8, 8, 128>}, {pipeline_mode = #tpu.pipeline_mode<synchronous>, transform_indices = @transform_1, window_bounds = array<i64: 1, 128>}, {pipeline_mode = #tpu.pipeline_mode<synchronous>, transform_indices = @transform_2, window_bounds = array<i64: 1, 128>}, {transform_indices = @transform_3, window_bounds = array<i64: 1, 4, 8, 8, 64>}, {transform_indices = @transform_4, window_bounds = array<i64: 1, 8, 8, 128>}]} {
    %c0 = arith.constant 0 : index
    %c0_0 = arith.constant 0 : index
    %c0_1 = arith.constant 0 : index
    %c0_2 = arith.constant 0 : index
    %0 = vector.load %arg1[%c0, %c0_0, %c0_1, %c0_2] : memref<1x8x8x128xf32, #tpu.memory_space<vmem>>, vector<1x8x8x128xf32>
    %1 = vector.shape_cast %0 : vector<1x8x8x128xf32> to vector<8x8x128xf32>
    %c0_3 = arith.constant 0 : index
    %c0_4 = arith.constant 0 : index
    %2 = vector.load %arg2[%c0_3, %c0_4] : memref<1x128xf32, #tpu.memory_space<vmem>>, vector<1x128xf32>
    %3 = vector.shape_cast %2 : vector<1x128xf32> to vector<1x1x128xf32>
    %4 = vector.broadcast %3 : vector<1x1x128xf32> to vector<8x8x128xf32>
    %5 = arith.mulf %1, %4 : vector<8x8x128xf32>
    %c0_5 = arith.constant 0 : index
    %c0_6 = arith.constant 0 : index
    %6 = vector.load %arg3[%c0_5, %c0_6] : memref<1x128xf32, #tpu.memory_space<vmem>>, vector<1x128xf32>
    %7 = vector.shape_cast %6 : vector<1x128xf32> to vector<1x1x128xf32>
    %8 = vector.broadcast %7 : vector<1x1x128xf32> to vector<8x8x128xf32>
    %9 = arith.addf %5, %8 : vector<8x8x128xf32>
    %c0_7 = arith.constant 0 : index
    %c0_8 = arith.constant 0 : index
    %c0_9 = arith.constant 0 : index
    %c0_10 = arith.constant 0 : index
    %c0_11 = arith.constant 0 : index
    %10 = vector.load %arg4[%c0_7, %c0_8, %c0_9, %c0_10, %c0_11] : memref<1x4x8x8x64xf32, #tpu.memory_space<vmem>>, vector<1x1x8x8x64xf32>
    %11 = vector.shape_cast %10 : vector<1x1x8x8x64xf32> to vector<8x8x64xf32>
    %c0_12 = arith.constant 0 : index
    %c1 = arith.constant 1 : index
    %c0_13 = arith.constant 0 : index
    %c0_14 = arith.constant 0 : index
    %c0_15 = arith.constant 0 : index
    %12 = vector.load %arg4[%c0_12, %c1, %c0_13, %c0_14, %c0_15] : memref<1x4x8x8x64xf32, #tpu.memory_space<vmem>>, vector<1x1x8x8x64xf32>
    %13 = vector.shape_cast %12 : vector<1x1x8x8x64xf32> to vector<8x8x64xf32>
    %14 = arith.addf %11, %13 : vector<8x8x64xf32>
    %c0_16 = arith.constant 0 : index
    %c2 = arith.constant 2 : index
    %c0_17 = arith.constant 0 : index
    %c0_18 = arith.constant 0 : index
    %c0_19 = arith.constant 0 : index
    %15 = vector.load %arg4[%c0_16, %c2, %c0_17, %c0_18, %c0_19] : memref<1x4x8x8x64xf32, #tpu.memory_space<vmem>>, vector<1x1x8x8x64xf32>
    %16 = vector.shape_cast %15 : vector<1x1x8x8x64xf32> to vector<8x8x64xf32>
    %17 = arith.addf %14, %16 : vector<8x8x64xf32>
    %c0_20 = arith.constant 0 : index
    %c3 = arith.constant 3 : index
    %c0_21 = arith.constant 0 : index
    %c0_22 = arith.constant 0 : index
    %c0_23 = arith.constant 0 : index
    %18 = vector.load %arg4[%c0_20, %c3, %c0_21, %c0_22, %c0_23] : memref<1x4x8x8x64xf32, #tpu.memory_space<vmem>>, vector<1x1x8x8x64xf32>
    %19 = vector.shape_cast %18 : vector<1x1x8x8x64xf32> to vector<8x8x64xf32>
    %20 = arith.addf %17, %19 : vector<8x8x64xf32>
    %cst = arith.constant 2.500000e-01 : f32
    %21 = vector.broadcast %cst : f32 to vector<8x8x64xf32>
    %22 = arith.mulf %20, %21 : vector<8x8x64xf32>
    %cst_24 = arith.constant 0.000000e+00 : f32
    %23 = vector.broadcast %cst_24 : f32 to vector<8x8x64xf32>
    %24 = tpu.concatenate %22, %23 in 2 : vector<8x8x64xf32>, vector<8x8x64xf32> -> vector<8x8x128xf32>
    %25 = arith.addf %9, %24 : vector<8x8x128xf32>
    %cst_25 = arith.constant 0.000000e+00 : f32
    %26 = vector.broadcast %cst_25 : f32 to vector<8x8x128xf32>
    %27 = arith.maximumf %25, %26 : vector<8x8x128xf32>
    %c0_26 = arith.constant 0 : index
    %c0_27 = arith.constant 0 : index
    %c0_28 = arith.constant 0 : index
    %c0_29 = arith.constant 0 : index
    %28 = vector.load %arg5[%c0_26, %c0_27, %c0_28, %c0_29] : memref<1x8x8x128xf32, #tpu.memory_space<vmem>>, vector<1x8x8x128xf32>
    %29 = vector.shape_cast %28 : vector<1x8x8x128xf32> to vector<8x8x128xf32>
    %30 = vector.shape_cast %27 : vector<8x8x128xf32> to vector<1x8x8x128xf32>
    tpu.vector_store %arg5[%c0_26, %c0_27, %c0_28, %c0_29], %30 {strides = array<i32>} : memref<1x8x8x128xf32, #tpu.memory_space<vmem>>, vector<1x8x8x128xf32>,
    return
  }
  func.func @transform_0(%arg0: i32) -> (i32, i32, i32, i32) {
    %c0_i32 = arith.constant 0 : i32
    %c0_i32_0 = arith.constant 0 : i32
    %c0_i32_1 = arith.constant 0 : i32
    %c0_i32_2 = arith.constant 0 : i32
    return %arg0, %c0_i32, %c0_i32_0, %c0_i32_1 : i32, i32, i32, i32
  }
  func.func @transform_1(%arg0: i32) -> (i32, i32) {
    %c0_i32 = arith.constant 0 : i32
    %c0_i32_0 = arith.constant 0 : i32
    %c0_i32_1 = arith.constant 0 : i32
    return %c0_i32, %c0_i32_0 : i32, i32
  }
  func.func @transform_2(%arg0: i32) -> (i32, i32) {
    %c0_i32 = arith.constant 0 : i32
    %c0_i32_0 = arith.constant 0 : i32
    %c0_i32_1 = arith.constant 0 : i32
    return %c0_i32, %c0_i32_0 : i32, i32
  }
  func.func @transform_3(%arg0: i32) -> (i32, i32, i32, i32, i32) {
    %c0_i32 = arith.constant 0 : i32
    %c0_i32_0 = arith.constant 0 : i32
    %c0_i32_1 = arith.constant 0 : i32
    %c0_i32_2 = arith.constant 0 : i32
    %c0_i32_3 = arith.constant 0 : i32
    return %arg0, %c0_i32, %c0_i32_0, %c0_i32_1, %c0_i32_2 : i32, i32, i32, i32, i32
  }
  func.func @transform_4(%arg0: i32) -> (i32, i32, i32, i32) {
    %c0_i32 = arith.constant 0 : i32
    %c0_i32_0 = arith.constant 0 : i32
    %c0_i32_1 = arith.constant 0 : i32
    %c0_i32_2 = arith.constant 0 : i32
    return %arg0, %c0_i32, %c0_i32_0, %c0_i32_1 : i32, i32, i32, i32
  }
}

</mosaic_0001>

<llo_original>
// kernel: basic_block_forward.5
$region0: #{basic_block_forward.5}
  #allocation0 [shape = 'u32[]', space=smem, size = 0x4, offset = 0x4, fixed_abs, tag = 'smem constant byte address 0x4 - core index']
  #allocation1 [shape = 'u32[144,128]{1,0:T(1,128)}', space=vmem, size = 0x12000, scoped, tag = 'internal scratch']
  %s0 = inlined_call_operand.vmem [shape: f32[2,8,8,128], index: 0, kind: input, shape index: {}]
  %s1 = inlined_call_operand.vmem [shape: f32[1,128], index: 1, kind: input, shape index: {}]
  %s2 = inlined_call_operand.vmem [shape: f32[1,128], index: 2, kind: input, shape index: {}]
  %s3 = inlined_call_operand.vmem [shape: f32[2,4,8,8,64], index: 3, kind: input, shape index: {}]
  %s4 = inlined_call_operand.hbm [shape: f32[2,8,8,128], index: 4, kind: output, shape index: {}]
  %s5 = sld [smem:[#allocation0]]
  $region49: #{basic_block_forward.5} parent=0
    _
  %s7 = ssub.s32 1, %s5
  %s8 = scalar_select 0, %s7, %s5
  $region1: #{basic_block_forward.5} parent=0
    #allocation2 [shape = 'u8[65536]{0}', space=vmem, size = 0x10000, scoped, tag = 'output window, operand 0']
    #allocation3 [shape = 's32[2]{0}', space=sflag, size = 0x8, scoped, tag = 'scoped memory for basic_block_forward.5']
    %9 = vsyncpa [#allocation3], 0
    %s10 = scalar_lea.sflag [#allocation3], 1
    %11 = vsyncpa %s10, 0
    loop: start=0, step=1, limit=4
    $region2: #{basic_block_forward.5} parent=1 // loop_pre_header
      _
    $region3: #{basic_block_forward.5} parent=1 // loop_header
      %s13 = sphi 0, %s17
      %p14 = scmp.ge.s32.totalorder %s13, 4
      %s23 = sphi 0, %s25
      %s26 = sphi 0, %s23
      %s27 = sphi 0, %s26
      %s43 = sphi 0, %s27
      %s47 = sphi 0, %s47
      %s49 = sphi 0, %s47
      %s50 = sphi 0, %s49
      %s64 = sphi 0, %s50
      %s68 = sphi 0, %s68
      %s70 = sphi 0, %s68
      %s71 = sphi 0, %s70
      %s85 = sphi 0, %s71
      %s91 = sphi 0, %s93
      %s94 = sphi 0, %s91
      %s95 = sphi 0, %s94
      %s111 = sphi 0, %s95
      %s117 = sphi 0, %s119
      %s120 = sphi 0, %s117
      %s121 = sphi 0, %s120
      %s137 = sphi 0, %s121
    $region4: #{basic_block_forward.5} parent=1 // loop_header_branch
      %16 = sbr.rel (%p14) target = $region8
    $region5: #{basic_block_forward.5} parent=1 // loop_body
      %s18 = ssub.s32 %s13, 1
      %s19 = ssub.s32 %s13, 2
      %s20 = sadd.s32 %s13, 1
      %s21 = ssub.s32 %s13, %s20
      %p22 = scmp.eq.s32.totalorder %s21, 0
      %s24 = sadd.s32 %s23, 1
      %s25 = scalar_select %p22, %s23, %s24
      %p28 = pneg %p22
      %p29 = scmp.eq.s32.totalorder %s13, 1
      %p30 = por %p28, %p29
      %p31 = scmp.ne.s32.totalorder %s23, %s26
      %p32 = scmp.eq.s32.totalorder %s13, 0
      %p33 = por %p31, %p32
      %p34 = scmp.ne.s32.totalorder %s23, %s26
      %p35 = scmp.eq.s32.totalorder %s18, 1
      %p36 = por %p34, %p35
      %p37 = scmp.ne.s32.totalorder %s26, %s27
      %p38 = scmp.eq.s32.totalorder %s18, 0
      %p39 = por %p37, %p38
      %p40 = scmp.ne.s32.totalorder %s26, %s27
      %p41 = scmp.eq.s32.totalorder %s19, 1
      %p42 = por %p40, %p41
      %p44 = scmp.ne.s32.totalorder %s27, %s43
      %p45 = scmp.eq.s32.totalorder %s19, 0
      %p46 = por %p44, %p45
      %s48 = sadd.s32 %s47, 1
      %p51 = scmp.eq.s32.totalorder %s13, 1
      %p52 = scmp.ne.s32.totalorder %s47, %s49
      %p53 = scmp.eq.s32.totalorder %s13, 0
      %p54 = por %p52, %p53
      %p55 = scmp.ne.s32.totalorder %s47, %s49
      %p56 = scmp.eq.s32.totalorder %s18, 1
      %p57 = por %p55, %p56
      %p58 = scmp.ne.s32.totalorder %s49, %s50
      %p59 = scmp.eq.s32.totalorder %s18, 0
      %p60 = por %p58, %p59
      %p61 = scmp.ne.s32.totalorder %s49, %s50
      %p62 = scmp.eq.s32.totalorder %s19, 1
      %p63 = por %p61, %p62
      %p65 = scmp.ne.s32.totalorder %s50, %s64
      %p66 = scmp.eq.s32.totalorder %s19, 0
      %p67 = por %p65, %p66
      %s69 = sadd.s32 %s68, 1
      %p72 = scmp.eq.s32.totalorder %s13, 1
      %p73 = scmp.ne.s32.totalorder %s68, %s70
      %p74 = scmp.eq.s32.totalorder %s13, 0
      %p75 = por %p73, %p74
      %p76 = scmp.ne.s32.totalorder %s68, %s70
      %p77 = scmp.eq.s32.totalorder %s18, 1
      %p78 = por %p76, %p77
      %p79 = scmp.ne.s32.totalorder %s70, %s71
      %p80 = scmp.eq.s32.totalorder %s18, 0
      %p81 = por %p79, %p80
      %p82 = scmp.ne.s32.totalorder %s70, %s71
      %p83 = scmp.eq.s32.totalorder %s19, 1
      %p84 = por %p82, %p83
      %p86 = scmp.ne.s32.totalorder %s71, %s85
      %p87 = scmp.eq.s32.totalorder %s19, 0
      %p88 = por %p86, %p87
      %s89 = ssub.s32 %s13, %s20
      %p90 = scmp.eq.s32.totalorder %s89, 0
      %s92 = sadd.s32 %s91, 1
      %s93 = scalar_select %p90, %s91, %s92
      %p96 = pneg %p90
      %p97 = scmp.eq.s32.totalorder %s13, 1
      %p98 = por %p96, %p97
      %p99 = scmp.ne.s32.totalorder %s91, %s94
      %p100 = scmp.eq.s32.totalorder %s13, 0
      %p101 = por %p99, %p100
      %p102 = scmp.ne.s32.totalorder %s91, %s94
      %p103 = scmp.eq.s32.totalorder %s18, 1
      %p104 = por %p102, %p103
      %p105 = scmp.ne.s32.totalorder %s94, %s95
      %p106 = scmp.eq.s32.totalorder %s18, 0
      %p107 = por %p105, %p106
      %p108 = scmp.ne.s32.totalorder %s94, %s95
      %p109 = scmp.eq.s32.totalorder %s19, 1
      %p110 = por %p108, %p109
      %p112 = scmp.ne.s32.totalorder %s95, %s111
      %p113 = scmp.eq.s32.totalorder %s19, 0
      %p114 = por %p112, %p113
      %s115 = ssub.s32 %s13, %s20
      %p116 = scmp.eq.s32.totalorder %s115, 0
      %s118 = sadd.s32 %s117, 1
      %s119 = scalar_select %p116, %s117, %s118
      %p122 = pneg %p116
      %p123 = scmp.eq.s32.totalorder %s13, 1
      %p124 = por %p122, %p123
      %p125 = scmp.ne.s32.totalorder %s117, %s120
      %p126 = scmp.eq.s32.totalorder %s13, 0
      %p127 = por %p125, %p126
      %p128 = scmp.ne.s32.totalorder %s117, %s120
      %p129 = scmp.eq.s32.totalorder %s18, 1
      %p130 = por %p128, %p129
      %p131 = scmp.ne.s32.totalorder %s120, %s121
      %p132 = scmp.eq.s32.totalorder %s18, 0
      %p133 = por %p131, %p132
      %p134 = scmp.ne.s32.totalorder %s120, %s121
      %p135 = scmp.eq.s32.totalorder %s19, 1
      %p136 = por %p134, %p135
      %p138 = scmp.ne.s32.totalorder %s121, %s137
      %p139 = scmp.eq.s32.totalorder %s19, 0
      %p140 = por %p138, %p139
      %p141 = scmp.le.s32.totalorder 1, %s13
      %p142 = scmp.lt.s32.totalorder %s13, 3
      %p143 = pnand %p141, %p142
      %p144 = pneg %p143
      // Predicated region
      $region9: #{basic_block_forward.5} parent=5 // pred_check
        _
      $region10: #{basic_block_forward.5} parent=5 // pred_check_branch
        %146 = sbr.rel (%p143) target = $region12
      $region11: #{basic_block_forward.5} parent=5 // pred_region
        %s147 = ssub.s32 %s13, 1
        // Predicated region
        $region13: #{basic_block_forward.5} parent=11 // pred_check
          %p148 = pneg %p60
        $region14: #{basic_block_forward.5} parent=11 // pred_check_branch
          %150 = sbr.rel (%p148) target = $region16
        $region15: #{basic_block_forward.5} parent=11 // pred_region
          _
        $region16: #{basic_block_forward.5} parent=11 // pred_fallthru
          _
        // Predicated region
        $region17: #{basic_block_forward.5} parent=11 // pred_check
          %p151 = pneg %p81
        $region18: #{basic_block_forward.5} parent=11 // pred_check_branch
          %153 = sbr.rel (%p151) target = $region20
        $region19: #{basic_block_forward.5} parent=11 // pred_region
          _
        $region20: #{basic_block_forward.5} parent=11 // pred_fallthru
          _
      $region12: #{basic_block_forward.5} parent=5 // pred_fallthru
        _
      %p154 = scmp.lt.s32.totalorder %s13, 2
      // Predicated region
      $region21: #{basic_block_forward.5} parent=5 // pred_check
        %p155 = pneg %p154
      $region22: #{basic_block_forward.5} parent=5 // pred_check_branch
        %157 = sbr.rel (%p155) target = $region24
      $region23: #{basic_block_forward.5} parent=5 // pred_region
        // Predicated region
        $region25: #{basic_block_forward.5} parent=23 // pred_check
          %p158 = pneg %p33
        $region26: #{basic_block_forward.5} parent=23 // pred_check_branch
          %160 = sbr.rel (%p158) target = $region28
        $region27: #{basic_block_forward.5} parent=23 // pred_region
          %p161 = scmp.lt.s32.totalorder %s13, 1
          %s162 = scalar_select %p161, %s13, 1
          %s163 = smul.addr %s162, 8
          %s164 = smul.addr %s163, 8
          %s165 = scalar_lea.vmem %s0, %s164
        $region28: #{basic_block_forward.5} parent=23 // pred_fallthru
          _
        // Predicated region
        $region29: #{basic_block_forward.5} parent=23 // pred_check
          %p166 = pneg %p101
        $region30: #{basic_block_forward.5} parent=23 // pred_check_branch
          %168 = sbr.rel (%p166) target = $region32
        $region31: #{basic_block_forward.5} parent=23 // pred_region
          %p169 = scmp.lt.s32.totalorder %s13, 1
          %s170 = scalar_select %p169, %s13, 1
          %s171 = smul.addr %s170, 32
          %s172 = smul.addr %s171, 8
          %s173 = scalar_lea.vmem %s3, %s172
        $region32: #{basic_block_forward.5} parent=23 // pred_fallthru
          _
      $region24: #{basic_block_forward.5} parent=5 // pred_fallthru
        _
      %p174 = scmp.le.s32.totalorder 1, %s13
      %p175 = scmp.lt.s32.totalorder %s13, 3
      %p176 = pnand %p174, %p175
      %p177 = pneg %p176
      // Predicated region
      $region33: #{basic_block_forward.5} parent=5 // pred_check
        _
      $region34: #{basic_block_forward.5} parent=5 // pred_check_branch
        %179 = sbr.rel (%p176) target = $region36
      $region35: #{basic_block_forward.5} parent=5 // pred_region
        %s180 = ssub.s32 %s13, 1
        %p181 = scmp.lt.s32.totalorder %s18, 1
        %s182 = scalar_select %p181, %s18, 1
        %s183 = smul.addr %s182, 8
        %s184 = smul.addr %s183, 8
        %s185 = scalar_lea.vmem %s0, %s184
        %p186 = pneg %p39
        %p187 = pneg %p36
        %p188 = pneg %p60
        %p189 = pneg %p57
        %p190 = pneg %p81
        %p191 = pneg %p78
        %p192 = scmp.lt.s32.totalorder %s18, 1
        %s193 = scalar_select %p192, %s18, 1
        %s194 = smul.addr %s193, 32
        %s195 = smul.addr %s194, 8
        %s196 = scalar_lea.vmem %s3, %s195
        %p197 = pneg %p107
        %p198 = pneg %p104
        %p199 = pneg %p133
        %p200 = pneg %p130
        %s201 = sand.u32 %s120, 1
        %s202 = scalar_lea.sflag [#allocation3], %s201
        %s203 = sand.u32 %s120, 1
        %s204 = smul.addr %s203, 64
        %s205 = scalar_lea.vmem [#allocation2], %s204
        %p206 = scmp.lt.s32.totalorder %s18, 1
        %s207 = scalar_select %p206, %s18, 1
        %s208 = smul.addr %s207, 8
        %s209 = smul.addr %s208, 8
        %s210 = scalar_lea.vmem %s0, %s209
        %p211 = scmp.lt.s32.totalorder %s18, 1
        %s212 = scalar_select %p211, %s18, 1
        %s213 = smul.addr %s212, 32
        %s214 = smul.addr %s213, 8
        %s215 = scalar_lea.vmem %s3, %s214
        %v216 = vld [vmem:[%s210] sm:$0xff]
        %v217 = vld [vmem:[%s210 + $0x8] sm:$0xff]
        %v218 = vld [vmem:[%s210 + $0x10] sm:$0xff]
        %v219 = vld [vmem:[%s210 + $0x18] sm:$0xff]
        %v220 = vld [vmem:[%s210 + $0x20] sm:$0xff]
        %v221 = vld [vmem:[%s210 + $0x28] sm:$0xff]
        %v222 = vld [vmem:[%s210 + $0x30] sm:$0xff]
        %v223 = vld [vmem:[%s210 + $0x38] sm:$0xff]
        %v224 = vld [vmem:[%s1] sm:$0x1]
        %v226 = vlaneseq
        %v227 = vshrl.u32 %v226, 7
        %v228 = vsub.s32 0, %v227
        %v229 = vrot.slane %v224, %v228
        %v231 = vmul.f32 %v216, %v229
        %v232 = vmul.f32 %v217, %v229
        %v233 = vmul.f32 %v218, %v229
        %v234 = vmul.f32 %v219, %v229
        %v235 = vmul.f32 %v220, %v229
        %v236 = vmul.f32 %v221, %v229
        %v237 = vmul.f32 %v222, %v229
        %v238 = vmul.f32 %v223, %v229
        %v239 = vld [vmem:[%s2] sm:$0x1]
        %v241 = vlaneseq
        %v242 = vshrl.u32 %v241, 7
        %v243 = vsub.s32 0, %v242
        %v244 = vrot.slane %v239, %v243
        %v246 = vadd.f32 %v231, %v244
        %v247 = vadd.f32 %v232, %v244
        %v248 = vadd.f32 %v233, %v244
        %v249 = vadd.f32 %v234, %v244
        %v250 = vadd.f32 %v235, %v244
        %v251 = vadd.f32 %v236, %v244
        %v252 = vadd.f32 %v237, %v244
        %v253 = vadd.f32 %v238, %v244
        %v254 = vld [vmem:[%s215] sm:$0xff]
        %v255 = vld [vmem:[%s215 + $0x8] sm:$0xff]
        %v256 = vld [vmem:[%s215 + $0x10] sm:$0xff]
        %v257 = vld [vmem:[%s215 + $0x18] sm:$0xff]
        %v258 = vld [vmem:[%s215 + $0x20] sm:$0xff]
        %v259 = vld [vmem:[%s215 + $0x28] sm:$0xff]
        %v260 = vld [vmem:[%s215 + $0x30] sm:$0xff]
        %v261 = vld [vmem:[%s215 + $0x38] sm:$0xff]
        %s262 = scalar_lea.vmem %s215, 64
        %v263 = vld [vmem:[%s262] sm:$0xff]
        %v264 = vld [vmem:[%s262 + $0x8] sm:$0xff]
        %v265 = vld [vmem:[%s262 + $0x10] sm:$0xff]
        %v266 = vld [vmem:[%s262 + $0x18] sm:$0xff]
        %v267 = vld [vmem:[%s262 + $0x20] sm:$0xff]
        %v268 = vld [vmem:[%s262 + $0x28] sm:$0xff]
        %v269 = vld [vmem:[%s262 + $0x30] sm:$0xff]
        %v270 = vld [vmem:[%s262 + $0x38] sm:$0xff]
        %v271 = vadd.f32 %v254, %v263
        %v272 = vadd.f32 %v255, %v264
        %v273 = vadd.f32 %v256, %v265
        %v274 = vadd.f32 %v257, %v266
        %v275 = vadd.f32 %v258, %v267
        %v276 = vadd.f32 %v259, %v268
        %v277 = vadd.f32 %v260, %v269
        %v278 = vadd.f32 %v261, %v270
        %s279 = scalar_lea.vmem %s215, 128
        %v280 = vld [vmem:[%s279] sm:$0xff]
        %v281 = vld [vmem:[%s279 + $0x8] sm:$0xff]
        %v282 = vld [vmem:[%s279 + $0x10] sm:$0xff]
        %v283 = vld [vmem:[%s279 + $0x18] sm:$0xff]
        %v284 = vld [vmem:[%s279 + $0x20] sm:$0xff]
        %v285 = vld [vmem:[%s279 + $0x28] sm:$0xff]
        %v286 = vld [vmem:[%s279 + $0x30] sm:$0xff]
        %v287 = vld [vmem:[%s279 + $0x38] sm:$0xff]
        %v288 = vadd.f32 %v271, %v280
        %v289 = vadd.f32 %v272, %v281
        %v290 = vadd.f32 %v273, %v282
        %v291 = vadd.f32 %v274, %v283
        %v292 = vadd.f32 %v275, %v284
        %v293 = vadd.f32 %v276, %v285
        %v294 = vadd.f32 %v277, %v286
        %v295 = vadd.f32 %v278, %v287
        %s296 = scalar_lea.vmem %s215, 192
        %v297 = vld [vmem:[%s296] sm:$0xff]
        %v298 = vld [vmem:[%s296 + $0x8] sm:$0xff]
        %v299 = vld [vmem:[%s296 + $0x10] sm:$0xff]
        %v300 = vld [vmem:[%s296 + $0x18] sm:$0xff]
        %v301 = vld [vmem:[%s296 + $0x20] sm:$0xff]
        %v302 = vld [vmem:[%s296 + $0x28] sm:$0xff]
        %v303 = vld [vmem:[%s296 + $0x30] sm:$0xff]
        %v304 = vld [vmem:[%s296 + $0x38] sm:$0xff]
        %v305 = vadd.f32 %v288, %v297
        %v306 = vadd.f32 %v289, %v298
        %v307 = vadd.f32 %v290, %v299
        %v308 = vadd.f32 %v291, %v300
        %v309 = vadd.f32 %v292, %v301
        %v310 = vadd.f32 %v293, %v302
        %v311 = vadd.f32 %v294, %v303
        %v312 = vadd.f32 %v295, %v304
        %v313 = vmul.f32 %v305, 0.25
        %v314 = vmul.f32 %v306, 0.25
        %v315 = vmul.f32 %v307, 0.25
        %v316 = vmul.f32 %v308, 0.25
        %v317 = vmul.f32 %v309, 0.25
        %v318 = vmul.f32 %v310, 0.25
        %v319 = vmul.f32 %v311, 0.25
        %v320 = vmul.f32 %v312, 0.25
        %vm321 = vcmask 523264
        %v322 = vsel %vm321, %v313, 0.0
        %v323 = vsel %vm321, %v314, 0.0
        %v324 = vsel %vm321, %v315, 0.0
        %v325 = vsel %vm321, %v316, 0.0
        %v326 = vsel %vm321, %v317, 0.0
        %v327 = vsel %vm321, %v318, 0.0
        %v328 = vsel %vm321, %v319, 0.0
        %v329 = vsel %vm321, %v320, 0.0
        %v330 = vadd.f32 %v246, %v322
        %v331 = vadd.f32 %v247, %v323
        %v332 = vadd.f32 %v248, %v324
        %v333 = vadd.f32 %v249, %v325
        %v334 = vadd.f32 %v250, %v326
        %v335 = vadd.f32 %v251, %v327
        %v336 = vadd.f32 %v252, %v328
        %v337 = vadd.f32 %v253, %v329
        %v338 = vmax.f32 %v330, 0.0
        %v339 = vmax.f32 %v331, 0.0
        %v340 = vmax.f32 %v332, 0.0
        %v341 = vmax.f32 %v333, 0.0
        %v342 = vmax.f32 %v334, 0.0
        %v343 = vmax.f32 %v335, 0.0
        %v344 = vmax.f32 %v336, 0.0
        %v345 = vmax.f32 %v337, 0.0
        %346 = vst [vmem:[%s205] sm:$0xff] %v338
        %347 = vst [vmem:[%s205 + $0x8] sm:$0xff] %v339
        %348 = vst [vmem:[%s205 + $0x10] sm:$0xff] %v340
        %349 = vst [vmem:[%s205 + $0x18] sm:$0xff] %v341
        %350 = vst [vmem:[%s205 + $0x20] sm:$0xff] %v342
        %351 = vst [vmem:[%s205 + $0x28] sm:$0xff] %v343
        %352 = vst [vmem:[%s205 + $0x30] sm:$0xff] %v344
        %353 = vst [vmem:[%s205 + $0x38] sm:$0xff] %v345
        %s354 = sand.u32 %s120, 1
        %s355 = scalar_lea.sflag [#allocation3], %s354
        %s356 = sand.u32 %s120, 1
        %s357 = smul.addr %s356, 64
        %s358 = scalar_lea.vmem [#allocation2], %s357
        // Predicated region
        $region37: #{basic_block_forward.5} parent=35 // pred_check
          %p359 = pneg %p130
        $region38: #{basic_block_forward.5} parent=35 // pred_check_branch
          %361 = sbr.rel (%p359) target = $region40
        $region39: #{basic_block_forward.5} parent=35 // pred_region
          %s363 = ssub.s32 1024, 1024
          %364 = vsyncadd %s355, %s363
          %s365 = smul.addr %s18, 8
          %s366 = smul.addr %s365, 128
          %s367 = scalar_lea.hbm %s4, %s366
          %s368 = sshll.u32 %s358, 4
          %s369 = int_to_ptr.vmem [resolvable:$true] %s368
          %374 = dma.vmem_to_hbm [thread:$0]  %s369, 1024, %s367, %s355, 128, 128, 8
        $region40: #{basic_block_forward.5} parent=35 // pred_fallthru
          _
      $region36: #{basic_block_forward.5} parent=5 // pred_fallthru
        _
      %p375 = scmp.le.s32.totalorder 2, %s13
      // Predicated region
      $region41: #{basic_block_forward.5} parent=5 // pred_check
        %p376 = pneg %p375
      $region42: #{basic_block_forward.5} parent=5 // pred_check_branch
        %378 = sbr.rel (%p376) target = $region44
      $region43: #{basic_block_forward.5} parent=5 // pred_region
        %s379 = ssub.s32 %s13, 2
        // Predicated region
        $region45: #{basic_block_forward.5} parent=43 // pred_check
          %p380 = pneg %p136
        $region46: #{basic_block_forward.5} parent=43 // pred_check_branch
          %382 = sbr.rel (%p380) target = $region48
        $region47: #{basic_block_forward.5} parent=43 // pred_region
          %s383 = sand.u32 %s121, 1
          %s384 = scalar_lea.sflag [#allocation3], %s383
          %s385 = sand.u32 %s121, 1
          %s386 = smul.addr %s385, 64
          %s387 = scalar_lea.vmem [#allocation2], %s386
          %388 = dma.done %s384, 1024
        $region48: #{basic_block_forward.5} parent=43 // pred_fallthru
          _
      $region44: #{basic_block_forward.5} parent=5 // pred_fallthru
        _
    $region6: #{basic_block_forward.5} parent=1 // loop_footer
      %s17 = sadd.s32 1, %s13
    $region7: #{basic_block_forward.5} parent=1 // loop_footer_branch
      %12 = sbr.rel target = $region3
    $region8: #{basic_block_forward.5} parent=1 // loop_exit
      _
    %389 = vsyncpa [#allocation3], 1
    %s390 = scalar_lea.sflag [#allocation3], 1
    %391 = vsyncpa %s390, 1

// kernel: basic_block_forward.4
$region0: #{basic_block_forward.4}
  #allocation0 [shape = 'u32[]', space=smem, size = 0x4, offset = 0x4, fixed_abs, tag = 'smem constant byte address 0x4 - core index']
  #allocation1 [shape = 'u32[144,128]{1,0:T(1,128)}', space=vmem, size = 0x12000, scoped, tag = 'internal scratch']
  #allocation2 [shape = 'f32[10,10,128]{2,1,0:T(8,128)}', space=vmem, size = 0x14000, scoped, tag = 'scratch operand']
  %s0 = inlined_call_operand.vmem [shape: f32[2,8,8,128], index: 0, kind: input, shape index: {}]
  %s1 = inlined_call_operand.vmem [shape: f32[1,128], index: 1, kind: input, shape index: {}]
  %s2 = inlined_call_operand.vmem [shape: f32[1,128], index: 2, kind: input, shape index: {}]
  %s3 = inlined_call_operand.vmem [shape: bf16[9,128,128], index: 3, kind: input, shape index: {}]
  %s4 = inlined_call_operand.vmem [shape: f32[2,8,8,128], index: 4, kind: output, shape index: {0}]
  %s5 = inlined_call_operand.vmem [shape: f32[2,2,128], index: 5, kind: output, shape index: {1}]
  %6 = xla_tuple %s4, %s5
  %s7 = sld [smem:[#allocation0]]
  $region57: #{basic_block_forward.4} parent=0
    _
  %s9 = ssub.s32 1, %s7
  %s10 = scalar_select 0, %s9, %s7
  loop: start=0, step=1, limit=4
  $region2: #{basic_block_forward.4} parent=0 // loop_pre_header
    _
  $region3: #{basic_block_forward.4} parent=0 // loop_header
    %s12 = sphi 0, %s16
    %p13 = scmp.ge.s32.totalorder %s12, 4
    %s22 = sphi 0, %s24
    %s25 = sphi 0, %s22
    %s26 = sphi 0, %s25
    %s42 = sphi 0, %s26
    %s46 = sphi 0, %s46
    %s48 = sphi 0, %s46
    %s49 = sphi 0, %s48
    %s63 = sphi 0, %s49
    %s67 = sphi 0, %s67
    %s69 = sphi 0, %s67
    %s70 = sphi 0, %s69
    %s84 = sphi 0, %s70
    %s88 = sphi 0, %s88
    %s90 = sphi 0, %s88
    %s91 = sphi 0, %s90
    %s105 = sphi 0, %s91
    %s111 = sphi 0, %s113
    %s114 = sphi 0, %s111
    %s115 = sphi 0, %s114
    %s131 = sphi 0, %s115
    %s137 = sphi 0, %s139
    %s140 = sphi 0, %s137
    %s141 = sphi 0, %s140
    %s157 = sphi 0, %s141
  $region4: #{basic_block_forward.4} parent=0 // loop_header_branch
    %15 = sbr.rel (%p13) target = $region8
  $region5: #{basic_block_forward.4} parent=0 // loop_body
    %s17 = ssub.s32 %s12, 1
    %s18 = ssub.s32 %s12, 2
    %s19 = sadd.s32 %s12, 1
    %s20 = ssub.s32 %s12, %s19
    %p21 = scmp.eq.s32.totalorder %s20, 0
    %s23 = sadd.s32 %s22, 1
    %s24 = scalar_select %p21, %s22, %s23
    %p27 = pneg %p21
    %p28 = scmp.eq.s32.totalorder %s12, 1
    %p29 = por %p27, %p28
    %p30 = scmp.ne.s32.totalorder %s22, %s25
    %p31 = scmp.eq.s32.totalorder %s12, 0
    %p32 = por %p30, %p31
    %p33 = scmp.ne.s32.totalorder %s22, %s25
    %p34 = scmp.eq.s32.totalorder %s17, 1
    %p35 = por %p33, %p34
    %p36 = scmp.ne.s32.totalorder %s25, %s26
    %p37 = scmp.eq.s32.totalorder %s17, 0
    %p38 = por %p36, %p37
    %p39 = scmp.ne.s32.totalorder %s25, %s26
    %p40 = scmp.eq.s32.totalorder %s18, 1
    %p41 = por %p39, %p40
    %p43 = scmp.ne.s32.totalorder %s26, %s42
    %p44 = scmp.eq.s32.totalorder %s18, 0
    %p45 = por %p43, %p44
    %s47 = sadd.s32 %s46, 1
    %p50 = scmp.eq.s32.totalorder %s12, 1
    %p51 = scmp.ne.s32.totalorder %s46, %s48
    %p52 = scmp.eq.s32.totalorder %s12, 0
    %p53 = por %p51, %p52
    %p54 = scmp.ne.s32.totalorder %s46, %s48
    %p55 = scmp.eq.s32.totalorder %s17, 1
    %p56 = por %p54, %p55
    %p57 = scmp.ne.s32.totalorder %s48, %s49
    %p58 = scmp.eq.s32.totalorder %s17, 0
    %p59 = por %p57, %p58
    %p60 = scmp.ne.s32.totalorder %s48, %s49
    %p61 = scmp.eq.s32.totalorder %s18, 1
    %p62 = por %p60, %p61
    %p64 = scmp.ne.s32.totalorder %s49, %s63
    %p65 = scmp.eq.s32.totalorder %s18, 0
    %p66 = por %p64, %p65
    %s68 = sadd.s32 %s67, 1
    %p71 = scmp.eq.s32.totalorder %s12, 1
    %p72 = scmp.ne.s32.totalorder %s67, %s69
    %p73 = scmp.eq.s32.totalorder %s12, 0
    %p74 = por %p72, %p73
    %p75 = scmp.ne.s32.totalorder %s67, %s69
    %p76 = scmp.eq.s32.totalorder %s17, 1
    %p77 = por %p75, %p76
    %p78 = scmp.ne.s32.totalorder %s69, %s70
    %p79 = scmp.eq.s32.totalorder %s17, 0
    %p80 = por %p78, %p79
    %p81 = scmp.ne.s32.totalorder %s69, %s70
    %p82 = scmp.eq.s32.totalorder %s18, 1
    %p83 = por %p81, %p82
    %p85 = scmp.ne.s32.totalorder %s70, %s84
    %p86 = scmp.eq.s32.totalorder %s18, 0
    %p87 = por %p85, %p86
    %s89 = sadd.s32 %s88, 1
    %p92 = scmp.eq.s32.totalorder %s12, 1
    %p93 = scmp.ne.s32.totalorder %s88, %s90
    %p94 = scmp.eq.s32.totalorder %s12, 0
    %p95 = por %p93, %p94
    %p96 = scmp.ne.s32.totalorder %s88, %s90
    %p97 = scmp.eq.s32.totalorder %s17, 1
    %p98 = por %p96, %p97
    %p99 = scmp.ne.s32.totalorder %s90, %s91
    %p100 = scmp.eq.s32.totalorder %s17, 0
    %p101 = por %p99, %p100
    %p102 = scmp.ne.s32.totalorder %s90, %s91
    %p103 = scmp.eq.s32.totalorder %s18, 1
    %p104 = por %p102, %p103
    %p106 = scmp.ne.s32.totalorder %s91, %s105
    %p107 = scmp.eq.s32.totalorder %s18, 0
    %p108 = por %p106, %p107
    %s109 = ssub.s32 %s12, %s19
    %p110 = scmp.eq.s32.totalorder %s109, 0
    %s112 = sadd.s32 %s111, 1
    %s113 = scalar_select %p110, %s111, %s112
    %p116 = pneg %p110
    %p117 = scmp.eq.s32.totalorder %s12, 1
    %p118 = por %p116, %p117
    %p119 = scmp.ne.s32.totalorder %s111, %s114
    %p120 = scmp.eq.s32.totalorder %s12, 0
    %p121 = por %p119, %p120
    %p122 = scmp.ne.s32.totalorder %s111, %s114
    %p123 = scmp.eq.s32.totalorder %s17, 1
    %p124 = por %p122, %p123
    %p125 = scmp.ne.s32.totalorder %s114, %s115
    %p126 = scmp.eq.s32.totalorder %s17, 0
    %p127 = por %p125, %p126
    %p128 = scmp.ne.s32.totalorder %s114, %s115
    %p129 = scmp.eq.s32.totalorder %s18, 1
    %p130 = por %p128, %p129
    %p132 = scmp.ne.s32.totalorder %s115, %s131
    %p133 = scmp.eq.s32.totalorder %s18, 0
    %p134 = por %p132, %p133
    %s135 = ssub.s32 %s12, %s19
    %p136 = scmp.eq.s32.totalorder %s135, 0
    %s138 = sadd.s32 %s137, 1
    %s139 = scalar_select %p136, %s137, %s138
    %p142 = pneg %p136
    %p143 = scmp.eq.s32.totalorder %s12, 1
    %p144 = por %p142, %p143
    %p145 = scmp.ne.s32.totalorder %s137, %s140
    %p146 = scmp.eq.s32.totalorder %s12, 0
    %p147 = por %p145, %p146
    %p148 = scmp.ne.s32.totalorder %s137, %s140
    %p149 = scmp.eq.s32.totalorder %s17, 1
    %p150 = por %p148, %p149
    %p151 = scmp.ne.s32.totalorder %s140, %s141
    %p152 = scmp.eq.s32.totalorder %s17, 0
    %p153 = por %p151, %p152
    %p154 = scmp.ne.s32.totalorder %s140, %s141
    %p155 = scmp.eq.s32.totalorder %s18, 1
    %p156 = por %p154, %p155
    %p158 = scmp.ne.s32.totalorder %s141, %s157
    %p159 = scmp.eq.s32.totalorder %s18, 0
    %p160 = por %p158, %p159
    %p161 = scmp.le.s32.totalorder 1, %s12
    %p162 = scmp.lt.s32.totalorder %s12, 3
    %p163 = pnand %p161, %p162
    %p164 = pneg %p163
    // Predicated region
    $region9: #{basic_block_forward.4} parent=5 // pred_check
      _
    $region10: #{basic_block_forward.4} parent=5 // pred_check_branch
      %166 = sbr.rel (%p163) target = $region12
    $region11: #{basic_block_forward.4} parent=5 // pred_region
      %s167 = ssub.s32 %s12, 1
      // Predicated region
      $region13: #{basic_block_forward.4} parent=11 // pred_check
        %p168 = pneg %p59
      $region14: #{basic_block_forward.4} parent=11 // pred_check_branch
        %170 = sbr.rel (%p168) target = $region16
      $region15: #{basic_block_forward.4} parent=11 // pred_region
        _
      $region16: #{basic_block_forward.4} parent=11 // pred_fallthru
        _
      // Predicated region
      $region17: #{basic_block_forward.4} parent=11 // pred_check
        %p171 = pneg %p80
      $region18: #{basic_block_forward.4} parent=11 // pred_check_branch
        %173 = sbr.rel (%p171) target = $region20
      $region19: #{basic_block_forward.4} parent=11 // pred_region
        _
      $region20: #{basic_block_forward.4} parent=11 // pred_fallthru
        _
      // Predicated region
      $region21: #{basic_block_forward.4} parent=11 // pred_check
        %p174 = pneg %p101
      $region22: #{basic_block_forward.4} parent=11 // pred_check_branch
        %176 = sbr.rel (%p174) target = $region24
      $region23: #{basic_block_forward.4} parent=11 // pred_region
        _
      $region24: #{basic_block_forward.4} parent=11 // pred_fallthru
        _
    $region12: #{basic_block_forward.4} parent=5 // pred_fallthru
      _
    %p177 = scmp.lt.s32.totalorder %s12, 2
    // Predicated region
    $region25: #{basic_block_forward.4} parent=5 // pred_check
      %p178 = pneg %p177
    $region26: #{basic_block_forward.4} parent=5 // pred_check_branch
      %180 = sbr.rel (%p178) target = $region28
    $region27: #{basic_block_forward.4} parent=5 // pred_region
      // Predicated region
      $region29: #{basic_block_forward.4} parent=27 // pred_check
        %p181 = pneg %p32
      $region30: #{basic_block_forward.4} parent=27 // pred_check_branch
        %183 = sbr.rel (%p181) target = $region32
      $region31: #{basic_block_forward.4} parent=27 // pred_region
        %p184 = scmp.lt.s32.totalorder %s12, 1
        %s185 = scalar_select %p184, %s12, 1
        %s186 = smul.addr %s185, 8
        %s187 = smul.addr %s186, 8
        %s188 = scalar_lea.vmem %s0, %s187
      $region32: #{basic_block_forward.4} parent=27 // pred_fallthru
        _
    $region28: #{basic_block_forward.4} parent=5 // pred_fallthru
      _
    %p189 = scmp.le.s32.totalorder 1, %s12
    %p190 = scmp.lt.s32.totalorder %s12, 3
    %p191 = pnand %p189, %p190
    %p192 = pneg %p191
    // Predicated region
    $region33: #{basic_block_forward.4} parent=5 // pred_check
      _
    $region34: #{basic_block_forward.4} parent=5 // pred_check_branch
      %194 = sbr.rel (%p191) target = $region36
    $region35: #{basic_block_forward.4} parent=5 // pred_region
      %s195 = ssub.s32 %s12, 1
      %p196 = scmp.lt.s32.totalorder %s17, 1
      %s197 = scalar_select %p196, %s17, 1
      %s198 = smul.addr %s197, 8
      %s199 = smul.addr %s198, 8
      %s200 = scalar_lea.vmem %s0, %s199
      %p201 = pneg %p38
      %p202 = pneg %p35
      %p203 = pneg %p59
      %p204 = pneg %p56
      %p205 = pneg %p80
      %p206 = pneg %p77
      %p207 = pneg %p101
      %p208 = pneg %p98
      %p209 = pneg %p127
      %p210 = pneg %p124
      %p211 = scmp.lt.s32.totalorder %s17, 1
      %s212 = scalar_select %p211, %s17, 1
      %s213 = smul.addr %s212, 8
      %s214 = smul.addr %s213, 8
      %s215 = scalar_lea.vmem %s4, %s214
      %p216 = pneg %p153
      %p217 = pneg %p150
      %p218 = scmp.lt.s32.totalorder %s17, 1
      %s219 = scalar_select %p218, %s17, 1
      %s220 = smul.addr %s219, 2
      %s221 = scalar_lea.vmem %s5, %s220
      %p222 = scmp.lt.s32.totalorder %s17, 1
      %s223 = scalar_select %p222, %s17, 1
      %s224 = smul.addr %s223, 8
      %s225 = smul.addr %s224, 8
      %s226 = scalar_lea.vmem %s0, %s225
      %p227 = scmp.lt.s32.totalorder %s17, 1
      %s228 = scalar_select %p227, %s17, 1
      %s229 = smul.addr %s228, 8
      %s230 = smul.addr %s229, 8
      %s231 = scalar_lea.vmem %s4, %s230
      %p232 = scmp.lt.s32.totalorder %s17, 1
      %s233 = scalar_select %p232, %s17, 1
      %s234 = smul.addr %s233, 2
      %s235 = scalar_lea.vmem %s5, %s234
      %v237 = vld [vmem:[%s226] sm:$0xff]
      %v238 = vld [vmem:[%s226 + $0x8] sm:$0xff]
      %v239 = vld [vmem:[%s226 + $0x10] sm:$0xff]
      %v240 = vld [vmem:[%s226 + $0x18] sm:$0xff]
      %v241 = vld [vmem:[%s226 + $0x20] sm:$0xff]
      %v242 = vld [vmem:[%s226 + $0x28] sm:$0xff]
      %v243 = vld [vmem:[%s226 + $0x30] sm:$0xff]
      %v244 = vld [vmem:[%s226 + $0x38] sm:$0xff]
      %v245 = vld [vmem:[%s1] sm:$0x1]
      %v247 = vlaneseq
      %v248 = vshrl.u32 %v247, 7
      %v249 = vsub.s32 0, %v248
      %v250 = vrot.slane %v245, %v249
      %v252 = vmul.f32 %v237, %v250
      %v253 = vmul.f32 %v238, %v250
      %v254 = vmul.f32 %v239, %v250
      %v255 = vmul.f32 %v240, %v250
      %v256 = vmul.f32 %v241, %v250
      %v257 = vmul.f32 %v242, %v250
      %v258 = vmul.f32 %v243, %v250
      %v259 = vmul.f32 %v244, %v250
      %v260 = vld [vmem:[%s2] sm:$0x1]
      %v262 = vlaneseq
      %v263 = vshrl.u32 %v262, 7
      %v264 = vsub.s32 0, %v263
      %v265 = vrot.slane %v260, %v264
      %v267 = vadd.f32 %v252, %v265
      %v268 = vadd.f32 %v253, %v265
      %v269 = vadd.f32 %v254, %v265
      %v270 = vadd.f32 %v255, %v265
      %v271 = vadd.f32 %v256, %v265
      %v272 = vadd.f32 %v257, %v265
      %v273 = vadd.f32 %v258, %v265
      %v274 = vadd.f32 %v259, %v265
      %v275 = vmax.f32 %v267, 0.0
      %v276 = vmax.f32 %v268, 0.0
      %v277 = vmax.f32 %v269, 0.0
      %v278 = vmax.f32 %v270, 0.0
      %v279 = vmax.f32 %v271, 0.0
      %v280 = vmax.f32 %v272, 0.0
      %v281 = vmax.f32 %v273, 0.0
      %v282 = vmax.f32 %v274, 0.0
      %283 = vst [vmem:[#allocation2] sm:$0xff] 0.0
      %284 = vst [vmem:[#allocation2 + $0x8] sm:$0x3] 0.0
      %285 = vst [vmem:[#allocation2 + $0x10] sm:$0xff] 0.0
      %286 = vst [vmem:[#allocation2 + $0x18] sm:$0x3] 0.0
      %287 = vst [vmem:[#allocation2 + $0x20] sm:$0xff] 0.0
      %288 = vst [vmem:[#allocation2 + $0x28] sm:$0x3] 0.0
      %289 = vst [vmem:[#allocation2 + $0x30] sm:$0xff] 0.0
      %290 = vst [vmem:[#allocation2 + $0x38] sm:$0x3] 0.0
      %291 = vst [vmem:[#allocation2 + $0x40] sm:$0xff] 0.0
      %292 = vst [vmem:[#allocation2 + $0x48] sm:$0x3] 0.0
      %293 = vst [vmem:[#allocation2 + $0x50] sm:$0xff] 0.0
      %294 = vst [vmem:[#allocation2 + $0x58] sm:$0x3] 0.0
      %295 = vst [vmem:[#allocation2 + $0x60] sm:$0xff] 0.0
      %296 = vst [vmem:[#allocation2 + $0x68] sm:$0x3] 0.0
      %297 = vst [vmem:[#allocation2 + $0x70] sm:$0xff] 0.0
      %298 = vst [vmem:[#allocation2 + $0x78] sm:$0x3] 0.0
      %299 = vst [vmem:[#allocation2 + $0x80] sm:$0xff] 0.0
      %300 = vst [vmem:[#allocation2 + $0x88] sm:$0x3] 0.0
      %301 = vst [vmem:[#allocation2 + $0x90] sm:$0xff] 0.0
      %302 = vst [vmem:[#allocation2 + $0x98] sm:$0x3] 0.0
      %s303 = scalar_lea.vmem [#allocation2], 16
      %304 = vst [vmem:[%s303 + $0x1] sm:$0xff] %v275
      %305 = vst [vmem:[%s303 + $0x11] sm:$0xff] %v276
      %306 = vst [vmem:[%s303 + $0x21] sm:$0xff] %v277
      %307 = vst [vmem:[%s303 + $0x31] sm:$0xff] %v278
      %308 = vst [vmem:[%s303 + $0x41] sm:$0xff] %v279
      %309 = vst [vmem:[%s303 + $0x51] sm:$0xff] %v280
      %310 = vst [vmem:[%s303 + $0x61] sm:$0xff] %v281
      %311 = vst [vmem:[%s303 + $0x71] sm:$0xff] %v282
      %v312 = vld [vmem:[#allocation2] sm:$0xff]
      %v313 = vld [vmem:[#allocation2 + $0x10] sm:$0xff]
      %v314 = vld [vmem:[#allocation2 + $0x20] sm:$0xff]
      %v315 = vld [vmem:[#allocation2 + $0x30] sm:$0xff]
      %v316 = vld [vmem:[#allocation2 + $0x40] sm:$0xff]
      %v317 = vld [vmem:[#allocation2 + $0x50] sm:$0xff]
      %v318 = vld [vmem:[#allocation2 + $0x60] sm:$0xff]
      %v319 = vld [vmem:[#allocation2 + $0x70] sm:$0xff]
      %v320 = vpack.c.bf16 %v312, %v312
      %v321 = vpack.c.bf16 %v313, %v313
      %v322 = vpack.c.bf16 %v314, %v314
      %v323 = vpack.c.bf16 %v315, %v315
      %v324 = vpack.c.bf16 %v316, %v316
      %v325 = vpack.c.bf16 %v317, %v317
      %v326 = vpack.c.bf16 %v318, %v318
      %v327 = vpack.c.bf16 %v319, %v319
      %v328 = vld [vmem:[%s3] sm:$0xf]
      %v329 = vld [vmem:[%s3 + $0x4] sm:$0xf]
      %v330 = vld [vmem:[%s3 + $0x8] sm:$0xf]
      %v331 = vld [vmem:[%s3 + $0xc] sm:$0xf]
      %v332 = vld [vmem:[%s3 + $0x10] sm:$0xf]
      %v333 = vld [vmem:[%s3 + $0x14] sm:$0xf]
      %v334 = vld [vmem:[%s3 + $0x18] sm:$0xf]
      %v335 = vld [vmem:[%s3 + $0x1c] sm:$0xf]
      %v336 = vld [vmem:[%s3 + $0x20] sm:$0xf]
      %v337 = vld [vmem:[%s3 + $0x24] sm:$0xf]
      %v338 = vld [vmem:[%s3 + $0x28] sm:$0xf]
      %v339 = vld [vmem:[%s3 + $0x2c] sm:$0xf]
      %v340 = vld [vmem:[%s3 + $0x30] sm:$0xf]
      %v341 = vld [vmem:[%s3 + $0x34] sm:$0xf]
      %v342 = vld [vmem:[%s3 + $0x38] sm:$0xf]
      %v343 = vld [vmem:[%s3 + $0x3c] sm:$0xf]
      %v344 = vld [vmem:[#allocation2 + $0x1] sm:$0xff]
      %v345 = vld [vmem:[#allocation2 + $0x11] sm:$0xff]
      %v346 = vld [vmem:[#allocation2 + $0x21] sm:$0xff]
      %v347 = vld [vmem:[#allocation2 + $0x31] sm:$0xff]
      %v348 = vld [vmem:[#allocation2 + $0x41] sm:$0xff]
      %v349 = vld [vmem:[#allocation2 + $0x51] sm:$0xff]
      %v350 = vld [vmem:[#allocation2 + $0x61] sm:$0xff]
      %v351 = vld [vmem:[#allocation2 + $0x71] sm:$0xff]
      %v352 = vpack.c.bf16 %v344, %v344
      %v353 = vpack.c.bf16 %v345, %v345
      %v354 = vpack.c.bf16 %v346, %v346
      %v355 = vpack.c.bf16 %v347, %v347
      %v356 = vpack.c.bf16 %v348, %v348
      %v357 = vpack.c.bf16 %v349, %v349
      %v358 = vpack.c.bf16 %v350, %v350
      %v359 = vpack.c.bf16 %v351, %v351
      %s360 = scalar_lea.vmem %s3, 64
      %v361 = vld [vmem:[%s360] sm:$0xf]
      %v362 = vld [vmem:[%s360 + $0x4] sm:$0xf]
      %v363 = vld [vmem:[%s360 + $0x8] sm:$0xf]
      %v364 = vld [vmem:[%s360 + $0xc] sm:$0xf]
      %v365 = vld [vmem:[%s360 + $0x10] sm:$0xf]
      %v366 = vld [vmem:[%s360 + $0x14] sm:$0xf]
      %v367 = vld [vmem:[%s360 + $0x18] sm:$0xf]
      %v368 = vld [vmem:[%s360 + $0x1c] sm:$0xf]
      %v369 = vld [vmem:[%s360 + $0x20] sm:$0xf]
      %v370 = vld [vmem:[%s360 + $0x24] sm:$0xf]
      %v371 = vld [vmem:[%s360 + $0x28] sm:$0xf]
      %v372 = vld [vmem:[%s360 + $0x2c] sm:$0xf]
      %v373 = vld [vmem:[%s360 + $0x30] sm:$0xf]
      %v374 = vld [vmem:[%s360 + $0x34] sm:$0xf]
      %v375 = vld [vmem:[%s360 + $0x38] sm:$0xf]
      %v376 = vld [vmem:[%s360 + $0x3c] sm:$0xf]
      %v385 = vunpack.c.l.b16 %v352
      %v386 = vunpack.c.l.b16 %v353
      %v387 = vunpack.c.l.b16 %v354
      %v388 = vunpack.c.l.b16 %v355
      %v389 = vunpack.c.l.b16 %v356
      %v390 = vunpack.c.l.b16 %v357
      %v391 = vunpack.c.l.b16 %v358
      %v392 = vunpack.c.l.b16 %v359
      %v393 = vpack.c.b16 %v386, %v385
      %v394 = vpack.c.b16 %v388, %v387
      %v395 = vpack.c.b16 %v390, %v389
      %v396 = vpack.c.b16 %v392, %v391
      %v417 = vunpack.c.l.b16 %v361
      %v418 = vunpack.c.l.b16 %v362
      %v419 = vunpack.c.l.b16 %v363
      %v420 = vunpack.c.l.b16 %v364
      %v421 = vunpack.c.l.b16 %v365
      %v422 = vunpack.c.l.b16 %v366
      %v423 = vunpack.c.l.b16 %v367
      %v424 = vunpack.c.l.b16 %v368
      %v425 = vunpack.c.l.b16 %v369
      %v426 = vunpack.c.l.b16 %v370
      %v427 = vunpack.c.l.b16 %v371
      %v428 = vunpack.c.l.b16 %v372
      %v429 = vunpack.c.l.b16 %v373
      %v430 = vunpack.c.l.b16 %v374
      %v431 = vunpack.c.l.b16 %v375
      %v432 = vunpack.c.l.b16 %v376
      %v433 = vpack.c.b16 %v418, %v417
      %v434 = vpack.c.b16 %v420, %v419
      %v435 = vpack.c.b16 %v422, %v421
      %v436 = vpack.c.b16 %v424, %v423
      %v437 = vpack.c.b16 %v426, %v425
      %v438 = vpack.c.b16 %v428, %v427
      %v439 = vpack.c.b16 %v430, %v429
      %v440 = vpack.c.b16 %v432, %v431
      %449 = vmatprep.subr.bf16.mxu0 0
      %450 = vmatpush1.bf16.msra.mxu0 %v433
      %451 = vmatprep.subr.bf16.mxu0 0
      %452 = vmatpush1.bf16.msra.mxu0 %v434
      %453 = vmatprep.subr.bf16.mxu0 0
      %454 = vmatpush1.bf16.msra.mxu0 %v435
      %455 = vmatprep.subr.bf16.mxu0 0
      %456 = vmatpush1.bf16.msra.mxu0 %v436
      %457 = vmatprep.subr.bf16.mxu0 0
      %458 = vmatpush1.bf16.msra.mxu0 %v437
      %459 = vmatprep.subr.bf16.mxu0 0
      %460 = vmatpush1.bf16.msra.mxu0 %v438
      %461 = vmatprep.subr.bf16.mxu0 0
      %462 = vmatpush1.bf16.msra.mxu0 %v439
      %463 = vmatprep.subr.bf16.mxu0 0
      %464 = vmatpush1.bf16.msra.mxu0 %v440
      %465 = vmatprep.subr.bf16.mxu0 0
      %466 = vmatpush1.bf16.msra.mxu0 0
      %467 = vmatprep.subr.bf16.mxu0 0
      %468 = vmatpush1.bf16.msra.mxu0 0
      %469 = vmatprep.subr.bf16.mxu0 0
      %470 = vmatpush1.bf16.msra.mxu0 0
      %471 = vmatprep.subr.bf16.mxu0 0
      %472 = vmatpush1.bf16.msra.mxu0 0
      %473 = vmatprep.subr.bf16.mxu0 0
      %474 = vmatpush1.bf16.msra.mxu0 0
      %475 = vmatprep.subr.bf16.mxu0 0
      %476 = vmatpush1.bf16.msra.mxu0 0
      %477 = vmatprep.subr.bf16.mxu0 0
      %478 = vmatpush1.bf16.msra.mxu0 0
      %479 = vmatprep.subr.bf16.mxu0 0
      %480 = vmatpush1.bf16.msra.mxu0 0
      %481 = vmatprep.mubr.bf16.mxu0 0
      %482 = vmatmul.mubr.bf16.gmra.mrb[0].mxu0 %v393
      %v483 = vpop.f32.mrb[0].mxu0
      %v484 = vadd.f32 0.0, %v483
      %v485 = vpop.f32.mrb[0].mxu0
      %v486 = vpop.f32.mrb[0].mxu0
      %v487 = vadd.f32 0.0, %v486
      %v488 = vpop.f32.mrb[0].mxu0
      %489 = vmatprep.mubr.bf16.mxu0 0
      %490 = vmatmul.mubr.bf16.gmra.mrb[0].mxu0 %v394
      %v491 = vpop.f32.mrb[0].mxu0
      %v492 = vadd.f32 0.0, %v491
      %v493 = vpop.f32.mrb[0].mxu0
      %v494 = vpop.f32.mrb[0].mxu0
      %v495 = vadd.f32 0.0, %v494
      %v496 = vpop.f32.mrb[0].mxu0
      %497 = vmatprep.mubr.bf16.mxu0 0
      %498 = vmatmul.mubr.bf16.gmra.mrb[0].mxu0 %v395
      %v499 = vpop.f32.mrb[0].mxu0
      %v500 = vadd.f32 0.0, %v499
      %v501 = vpop.f32.mrb[0].mxu0
      %v502 = vpop.f32.mrb[0].mxu0
      %v503 = vadd.f32 0.0, %v502
      %v504 = vpop.f32.mrb[0].mxu0
      %505 = vmatprep.mubr.bf16.mxu0 0
      %506 = vmatmul.mubr.bf16.gmra.mrb[0].mxu0 %v396
      %v507 = vpop.f32.mrb[0].mxu0
      %v508 = vadd.f32 0.0, %v507
      %v509 = vpop.f32.mrb[0].mxu0
      %v510 = vpop.f32.mrb[0].mxu0
      %v511 = vadd.f32 0.0, %v510
      %v512 = vpop.f32.mrb[0].mxu0
      %513 = vdwg.mxu0
      %v522 = vunpack.c.l.b16 %v320
      %v523 = vunpack.c.l.b16 %v321
      %v524 = vunpack.c.l.b16 %v322
      %v525 = vunpack.c.l.b16 %v323
      %v526 = vunpack.c.l.b16 %v324
      %v527 = vunpack.c.l.b16 %v325
      %v528 = vunpack.c.l.b16 %v326
      %v529 = vunpack.c.l.b16 %v327
      %v530 = vpack.c.b16 %v523, %v522
      %v531 = vpack.c.b16 %v525, %v524
      %v532 = vpack.c.b16 %v527, %v526
      %v533 = vpack.c.b16 %v529, %v528
      %v554 = vunpack.c.l.b16 %v328
      %v555 = vunpack.c.l.b16 %v329
      %v556 = vunpack.c.l.b16 %v330
      %v557 = vunpack.c.l.b16 %v331
      %v558 = vunpack.c.l.b16 %v332
      %v559 = vunpack.c.l.b16 %v333
      %v560 = vunpack.c.l.b16 %v334
      %v561 = vunpack.c.l.b16 %v335
      %v562 = vunpack.c.l.b16 %v336
      %v563 = vunpack.c.l.b16 %v337
      %v564 = vunpack.c.l.b16 %v338
      %v565 = vunpack.c.l.b16 %v339
      %v566 = vunpack.c.l.b16 %v340
      %v567 = vunpack.c.l.b16 %v341
      %v568 = vunpack.c.l.b16 %v342
      %v569 = vunpack.c.l.b16 %v343
      %v570 = vpack.c.b16 %v555, %v554
      %v571 = vpack.c.b16 %v557, %v556
      %v572 = vpack.c.b16 %v559, %v558
      %v573 = vpack.c.b16 %v561, %v560
      %v574 = vpack.c.b16 %v563, %v562
      %v575 = vpack.c.b16 %v565, %v564
      %v576 = vpack.c.b16 %v567, %v566
      %v577 = vpack.c.b16 %v569, %v568
      %586 = vmatprep.subr.bf16.mxu0 0
      %587 = vmatpush1.bf16.msra.mxu0 %v570
      %588 = vmatprep.subr.bf16.mxu0 0
      %589 = vmatpush1.bf16.msra.mxu0 %v571
      %590 = vmatprep.subr.bf16.mxu0 0
      %591 = vmatpush1.bf16.msra.mxu0 %v572
      %592 = vmatprep.subr.bf16.mxu0 0
      %593 = vmatpush1.bf16.msra.mxu0 %v573
      %594 = vmatprep.subr.bf16.mxu0 0
      %595 = vmatpush1.bf16.msra.mxu0 %v574
      %596 = vmatprep.subr.bf16.mxu0 0
      %597 = vmatpush1.bf16.msra.mxu0 %v575
      %598 = vmatprep.subr.bf16.mxu0 0
      %599 = vmatpush1.bf16.msra.mxu0 %v576
      %600 = vmatprep.subr.bf16.mxu0 0
      %601 = vmatpush1.bf16.msra.mxu0 %v577
      %602 = vmatprep.subr.bf16.mxu0 0
      %603 = vmatpush1.bf16.msra.mxu0 0
      %604 = vmatprep.subr.bf16.mxu0 0
      %605 = vmatpush1.bf16.msra.mxu0 0
      %606 = vmatprep.subr.bf16.mxu0 0
      %607 = vmatpush1.bf16.msra.mxu0 0
      %608 = vmatprep.subr.bf16.mxu0 0
      %609 = vmatpush1.bf16.msra.mxu0 0
      %610 = vmatprep.subr.bf16.mxu0 0
      %611 = vmatpush1.bf16.msra.mxu0 0
      %612 = vmatprep.subr.bf16.mxu0 0
      %613 = vmatpush1.bf16.msra.mxu0 0
      %614 = vmatprep.subr.bf16.mxu0 0
      %615 = vmatpush1.bf16.msra.mxu0 0
      %616 = vmatprep.subr.bf16.mxu0 0
      %617 = vmatpush1.bf16.msra.mxu0 0
      %618 = vmatprep.mubr.bf16.mxu0 0
      %619 = vmatmul.mubr.bf16.gmra.mrb[0].mxu0 %v530
      %v620 = vpop.f32.mrb[0].mxu0
      %v621 = vadd.f32 %v484, %v620
      %v622 = vpop.f32.mrb[0].mxu0
      %v623 = vpop.f32.mrb[0].mxu0
      %v624 = vadd.f32 %v487, %v623
      %v625 = vpop.f32.mrb[0].mxu0
      %626 = vmatprep.mubr.bf16.mxu0 0
      %627 = vmatmul.mubr.bf16.gmra.mrb[0].mxu0 %v531
      %v628 = vpop.f32.mrb[0].mxu0
      %v629 = vadd.f32 %v492, %v628
      %v630 = vpop.f32.mrb[0].mxu0
      %v631 = vpop.f32.mrb[0].mxu0
      %v632 = vadd.f32 %v495, %v631
      %v633 = vpop.f32.mrb[0].mxu0
      %634 = vmatprep.mubr.bf16.mxu0 0
      %635 = vmatmul.mubr.bf16.gmra.mrb[0].mxu0 %v532
      %v636 = vpop.f32.mrb[0].mxu0
      %v637 = vadd.f32 %v500, %v636
      %v638 = vpop.f32.mrb[0].mxu0
      %v639 = vpop.f32.mrb[0].mxu0
      %v640 = vadd.f32 %v503, %v639
      %v641 = vpop.f32.mrb[0].mxu0
      %642 = vmatprep.mubr.bf16.mxu0 0
      %643 = vmatmul.mubr.bf16.gmra.mrb[0].mxu0 %v533
      %v644 = vpop.f32.mrb[0].mxu0
      %v645 = vadd.f32 %v508, %v644
      %v646 = vpop.f32.mrb[0].mxu0
      %v647 = vpop.f32.mrb[0].mxu0
      %v648 = vadd.f32 %v511, %v647
      %v649 = vpop.f32.mrb[0].mxu0
      %650 = vdwg.mxu0
      %v651 = vld [vmem:[#allocation2 + $0x2] sm:$0xff]
      %v652 = vld [vmem:[#allocation2 + $0x12] sm:$0xff]
      %v653 = vld [vmem:[#allocation2 + $0x22] sm:$0xff]
      %v654 = vld [vmem:[#allocation2 + $0x32] sm:$0xff]
      %v655 = vld [vmem:[#allocation2 + $0x42] sm:$0xff]
      %v656 = vld [vmem:[#allocation2 + $0x52] sm:$0xff]
      %v657 = vld [vmem:[#allocation2 + $0x62] sm:$0xff]
      %v658 = vld [vmem:[#allocation2 + $0x72] sm:$0xff]
      %v659 = vpack.c.bf16 %v651, %v651
      %v660 = vpack.c.bf16 %v652, %v652
      %v661 = vpack.c.bf16 %v653, %v653
      %v662 = vpack.c.bf16 %v654, %v654
      %v663 = vpack.c.bf16 %v655, %v655
      %v664 = vpack.c.bf16 %v656, %v656
      %v665 = vpack.c.bf16 %v657, %v657
      %v666 = vpack.c.bf16 %v658, %v658
      %s667 = scalar_lea.vmem %s3, 128
      %v668 = vld [vmem:[%s667] sm:$0xf]
      %v669 = vld [vmem:[%s667 + $0x4] sm:$0xf]
      %v670 = vld [vmem:[%s667 + $0x8] sm:$0xf]
      %v671 = vld [vmem:[%s667 + $0xc] sm:$0xf]
      %v672 = vld [vmem:[%s667 + $0x10] sm:$0xf]
      %v673 = vld [vmem:[%s667 + $0x14] sm:$0xf]
      %v674 = vld [vmem:[%s667 + $0x18] sm:$0xf]
      %v675 = vld [vmem:[%s667 + $0x1c] sm:$0xf]
      %v676 = vld [vmem:[%s667 + $0x20] sm:$0xf]
      %v677 = vld [vmem:[%s667 + $0x24] sm:$0xf]
      %v678 = vld [vmem:[%s667 + $0x28] sm:$0xf]
      %v679 = vld [vmem:[%s667 + $0x2c] sm:$0xf]
      %v680 = vld [vmem:[%s667 + $0x30] sm:$0xf]
      %v681 = vld [vmem:[%s667 + $0x34] sm:$0xf]
      %v682 = vld [vmem:[%s667 + $0x38] sm:$0xf]
      %v683 = vld [vmem:[%s667 + $0x3c] sm:$0xf]
      %v692 = vunpack.c.l.b16 %v659
      %v693 = vunpack.c.l.b16 %v660
      %v694 = vunpack.c.l.b16 %v661
      %v695 = vunpack.c.l.b16 %v662
      %v696 = vunpack.c.l.b16 %v663
      %v697 = vunpack.c.l.b16 %v664
      %v698 = vunpack.c.l.b16 %v665
      %v699 = vunpack.c.l.b16 %v666
      %v700 = vpack.c.b16 %v693, %v692
      %v701 = vpack.c.b16 %v695, %v694
      %v702 = vpack.c.b16 %v697, %v696
      %v703 = vpack.c.b16 %v699, %v698
      %v724 = vunpack.c.l.b16 %v668
      %v725 = vunpack.c.l.b16 %v669
      %v726 = vunpack.c.l.b16 %v670
      %v727 = vunpack.c.l.b16 %v671
      %v728 = vunpack.c.l.b16 %v672
      %v729 = vunpack.c.l.b16 %v673
      %v730 = vunpack.c.l.b16 %v674
      %v731 = vunpack.c.l.b16 %v675
      %v732 = vunpack.c.l.b16 %v676
      %v733 = vunpack.c.l.b16 %v677
      %v734 = vunpack.c.l.b16 %v678
      %v735 = vunpack.c.l.b16 %v679
      %v736 = vunpack.c.l.b16 %v680
      %v737 = vunpack.c.l.b16 %v681
      %v738 = vunpack.c.l.b16 %v682
      %v739 = vunpack.c.l.b16 %v683
      %v740 = vpack.c.b16 %v725, %v724
      %v741 = vpack.c.b16 %v727, %v726
      %v742 = vpack.c.b16 %v729, %v728
      %v743 = vpack.c.b16 %v731, %v730
      %v744 = vpack.c.b16 %v733, %v732
      %v745 = vpack.c.b16 %v735, %v734
      %v746 = vpack.c.b16 %v737, %v736
      %v747 = vpack.c.b16 %v739, %v738
      %756 = vmatprep.subr.bf16.mxu0 0
      %757 = vmatpush1.bf16.msra.mxu0 %v740
      %758 = vmatprep.subr.bf16.mxu0 0
      %759 = vmatpush1.bf16.msra.mxu0 %v741
      %760 = vmatprep.subr.bf16.mxu0 0
      %761 = vmatpush1.bf16.msra.mxu0 %v742
      %762 = vmatprep.subr.bf16.mxu0 0
      %763 = vmatpush1.bf16.msra.mxu0 %v743
      %764 = vmatprep.subr.bf16.mxu0 0
      %765 = vmatpush1.bf16.msra.mxu0 %v744
      %766 = vmatprep.subr.bf16.mxu0 0
      %767 = vmatpush1.bf16.msra.mxu0 %v745
      %768 = vmatprep.subr.bf16.mxu0 0
      %769 = vmatpush1.bf16.msra.mxu0 %v746
      %770 = vmatprep.subr.bf16.mxu0 0
      %771 = vmatpush1.bf16.msra.mxu0 %v747
      %772 = vmatprep.subr.bf16.mxu0 0
      %773 = vmatpush1.bf16.msra.mxu0 0
      %774 = vmatprep.subr.bf16.mxu0 0
      %775 = vmatpush1.bf16.msra.mxu0 0
      %776 = vmatprep.subr.bf16.mxu0 0
      %777 = vmatpush1.bf16.msra.mxu0 0
      %778 = vmatprep.subr.bf16.mxu0 0
      %779 = vmatpush1.bf16.msra.mxu0 0
      %780 = vmatprep.subr.bf16.mxu0 0
      %781 = vmatpush1.bf16.msra.mxu0 0
      %782 = vmatprep.subr.bf16.mxu0 0
      %783 = vmatpush1.bf16.msra.mxu0 0
      %784 = vmatprep.subr.bf16.mxu0 0
      %785 = vmatpush1.bf16.msra.mxu0 0
      %786 = vmatprep.subr.bf16.mxu0 0
      %787 = vmatpush1.bf16.msra.mxu0 0
      %788 = vmatprep.mubr.bf16.mxu0 0
      %789 = vmatmul.mubr.bf16.gmra.mrb[0].mxu0 %v700
      %v790 = vpop.f32.mrb[0].mxu0
      %v791 = vadd.f32 0.0, %v790
      %v792 = vpop.f32.mrb[0].mxu0
      %v793 = vpop.f32.mrb[0].mxu0
      %v794 = vadd.f32 0.0, %v793
      %v795 = vpop.f32.mrb[0].mxu0
      %796 = vmatprep.mubr.bf16.mxu0 0
      %797 = vmatmul.mubr.bf16.gmra.mrb[0].mxu0 %v701
      %v798 = vpop.f32.mrb[0].mxu0
      %v799 = vadd.f32 0.0, %v798
      %v800 = vpop.f32.mrb[0].mxu0
      %v801 = vpop.f32.mrb[0].mxu0
      %v802 = vadd.f32 0.0, %v801
      %v803 = vpop.f32.mrb[0].mxu0
      %804 = vmatprep.mubr.bf16.mxu0 0
      %805 = vmatmul.mubr.bf16.gmra.mrb[0].mxu0 %v702
      %v806 = vpop.f32.mrb[0].mxu0
      %v807 = vadd.f32 0.0, %v806
      %v808 = vpop.f32.mrb[0].mxu0
      %v809 = vpop.f32.mrb[0].mxu0
      %v810 = vadd.f32 0.0, %v809
      %v811 = vpop.f32.mrb[0].mxu0
      %812 = vmatprep.mubr.bf16.mxu0 0
      %813 = vmatmul.mubr.bf16.gmra.mrb[0].mxu0 %v703
      %v814 = vpop.f32.mrb[0].mxu0
      %v815 = vadd.f32 0.0, %v814
      %v816 = vpop.f32.mrb[0].mxu0
      %v817 = vpop.f32.mrb[0].mxu0
      %v818 = vadd.f32 0.0, %v817
      %v819 = vpop.f32.mrb[0].mxu0
      %820 = vdwg.mxu0
      %v821 = vadd.f32 %v621, %v791
      %v822 = vadd.f32 %v624, %v794
      %v823 = vadd.f32 %v629, %v799
      %v824 = vadd.f32 %v632, %v802
      %v825 = vadd.f32 %v637, %v807
      %v826 = vadd.f32 %v640, %v810
      %v827 = vadd.f32 %v645, %v815
      %v828 = vadd.f32 %v648, %v818
      %v829 = vld [vmem:[%s303] sm:$0xff]
      %v830 = vld [vmem:[%s303 + $0x10] sm:$0xff]
      %v831 = vld [vmem:[%s303 + $0x20] sm:$0xff]
      %v832 = vld [vmem:[%s303 + $0x30] sm:$0xff]
      %v833 = vld [vmem:[%s303 + $0x40] sm:$0xff]
      %v834 = vld [vmem:[%s303 + $0x50] sm:$0xff]
      %v835 = vld [vmem:[%s303 + $0x60] sm:$0xff]
      %v836 = vld [vmem:[%s303 + $0x70] sm:$0xff]
      %v837 = vpack.c.bf16 %v829, %v829
      %v838 = vpack.c.bf16 %v830, %v830
      %v839 = vpack.c.bf16 %v831, %v831
      %v840 = vpack.c.bf16 %v832, %v832
      %v841 = vpack.c.bf16 %v833, %v833
      %v842 = vpack.c.bf16 %v834, %v834
      %v843 = vpack.c.bf16 %v835, %v835
      %v844 = vpack.c.bf16 %v836, %v836
      %s845 = scalar_lea.vmem %s3, 192
      %v846 = vld [vmem:[%s845] sm:$0xf]
      %v847 = vld [vmem:[%s845 + $0x4] sm:$0xf]
      %v848 = vld [vmem:[%s845 + $0x8] sm:$0xf]
      %v849 = vld [vmem:[%s845 + $0xc] sm:$0xf]
      %v850 = vld [vmem:[%s845 + $0x10] sm:$0xf]
      %v851 = vld [vmem:[%s845 + $0x14] sm:$0xf]
      %v852 = vld [vmem:[%s845 + $0x18] sm:$0xf]
      %v853 = vld [vmem:[%s845 + $0x1c] sm:$0xf]
      %v854 = vld [vmem:[%s845 + $0x20] sm:$0xf]
      %v855 = vld [vmem:[%s845 + $0x24] sm:$0xf]
      %v856 = vld [vmem:[%s845 + $0x28] sm:$0xf]
      %v857 = vld [vmem:[%s845 + $0x2c] sm:$0xf]
      %v858 = vld [vmem:[%s845 + $0x30] sm:$0xf]
      %v859 = vld [vmem:[%s845 + $0x34] sm:$0xf]
      %v860 = vld [vmem:[%s845 + $0x38] sm:$0xf]
      %v861 = vld [vmem:[%s845 + $0x3c] sm:$0xf]
      %v870 = vunpack.c.l.b16 %v837
      %v871 = vunpack.c.l.b16 %v838
      %v872 = vunpack.c.l.b16 %v839
      %v873 = vunpack.c.l.b16 %v840
      %v874 = vunpack.c.l.b16 %v841
      %v875 = vunpack.c.l.b16 %v842
      %v876 = vunpack.c.l.b16 %v843
      %v877 = vunpack.c.l.b16 %v844
      %v878 = vpack.c.b16 %v871, %v870
      %v879 = vpack.c.b16 %v873, %v872
      %v880 = vpack.c.b16 %v875, %v874
      %v881 = vpack.c.b16 %v877, %v876
      %v902 = vunpack.c.l.b16 %v846
      %v903 = vunpack.c.l.b16 %v847
      %v904 = vunpack.c.l.b16 %v848
      %v905 = vunpack.c.l.b16 %v849
      %v906 = vunpack.c.l.b16 %v850
      %v907 = vunpack.c.l.b16 %v851
      %v908 = vunpack.c.l.b16 %v852
      %v909 = vunpack.c.l.b16 %v853
      %v910 = vunpack.c.l.b16 %v854
      %v911 = vunpack.c.l.b16 %v855
      %v912 = vunpack.c.l.b16 %v856
      %v913 = vunpack.c.l.b16 %v857
      %v914 = vunpack.c.l.b16 %v858
      %v915 = vunpack.c.l.b16 %v859
      %v916 = vunpack.c.l.b16 %v860
      %v917 = vunpack.c.l.b16 %v861
      %v918 = vpack.c.b16 %v903, %v902
      %v919 = vpack.c.b16 %v905, %v904
      %v920 = vpack.c.b16 %v907, %v906
      %v921 = vpack.c.b16 %v909, %v908
      %v922 = vpack.c.b16 %v911, %v910
      %v923 = vpack.c.b16 %v913, %v912
      %v924 = vpack.c.b16 %v915, %v914
      %v925 = vpack.c.b16 %v917, %v916
      %934 = vmatprep.subr.bf16.mxu0 0
      %935 = vmatpush1.bf16.msra.mxu0 %v918
      %936 = vmatprep.subr.bf16.mxu0 0
      %937 = vmatpush1.bf16.msra.mxu0 %v919
      %938 = vmatprep.subr.bf16.mxu0 0
      %939 = vmatpush1.bf16.msra.mxu0 %v920
      %940 = vmatprep.subr.bf16.mxu0 0
      %941 = vmatpush1.bf16.msra.mxu0 %v921
      %942 = vmatprep.subr.bf16.mxu0 0
      %943 = vmatpush1.bf16.msra.mxu0 %v922
      %944 = vmatprep.subr.bf16.mxu0 0
      %945 = vmatpush1.bf16.msra.mxu0 %v923
      %946 = vmatprep.subr.bf16.mxu0 0
      %947 = vmatpush1.bf16.msra.mxu0 %v924
      %948 = vmatprep.subr.bf16.mxu0 0
      %949 = vmatpush1.bf16.msra.mxu0 %v925
      %950 = vmatprep.subr.bf16.mxu0 0
      %951 = vmatpush1.bf16.msra.mxu0 0
      %952 = vmatprep.subr.bf16.mxu0 0
      %953 = vmatpush1.bf16.msra.mxu0 0
      %954 = vmatprep.subr.bf16.mxu0 0
      %955 = vmatpush1.bf16.msra.mxu0 0
      %956 = vmatprep.subr.bf16.mxu0 0
      %957 = vmatpush1.bf16.msra.mxu0 0
      %958 = vmatprep.subr.bf16.mxu0 0
      %959 = vmatpush1.bf16.msra.mxu0 0
      %960 = vmatprep.subr.bf16.mxu0 0
      %961 = vmatpush1.bf16.msra.mxu0 0
      %962 = vmatprep.subr.bf16.mxu0 0
      %963 = vmatpush1.bf16.msra.mxu0 0
      %964 = vmatprep.subr.bf16.mxu0 0
      %965 = vmatpush1.bf16.msra.mxu0 0
      %966 = vmatprep.mubr.bf16.mxu0 0
      %967 = vmatmul.mubr.bf16.gmra.mrb[0].mxu0 %v878
      %v968 = vpop.f32.mrb[0].mxu0
      %v969 = vadd.f32 0.0, %v968
      %v970 = vpop.f32.mrb[0].mxu0
      %v971 = vpop.f32.mrb[0].mxu0
      %v972 = vadd.f32 0.0, %v971
      %v973 = vpop.f32.mrb[0].mxu0
      %974 = vmatprep.mubr.bf16.mxu0 0
      %975 = vmatmul.mubr.bf16.gmra.mrb[0].mxu0 %v879
      %v976 = vpop.f32.mrb[0].mxu0
      %v977 = vadd.f32 0.0, %v976
      %v978 = vpop.f32.mrb[0].mxu0
      %v979 = vpop.f32.mrb[0].mxu0
      %v980 = vadd.f32 0.0, %v979
      %v981 = vpop.f32.mrb[0].mxu0
      %982 = vmatprep.mubr.bf16.mxu0 0
      %983 = vmatmul.mubr.bf16.gmra.mrb[0].mxu0 %v880
      %v984 = vpop.f32.mrb[0].mxu0
      %v985 = vadd.f32 0.0, %v984
      %v986 = vpop.f32.mrb[0].mxu0
      %v987 = vpop.f32.mrb[0].mxu0
      %v988 = vadd.f32 0.0, %v987
      %v989 = vpop.f32.mrb[0].mxu0
      %990 = vmatprep.mubr.bf16.mxu0 0
      %991 = vmatmul.mubr.bf16.gmra.mrb[0].mxu0 %v881
      %v992 = vpop.f32.mrb[0].mxu0
      %v993 = vadd.f32 0.0, %v992
      %v994 = vpop.f32.mrb[0].mxu0
      %v995 = vpop.f32.mrb[0].mxu0
      %v996 = vadd.f32 0.0, %v995
      %v997 = vpop.f32.mrb[0].mxu0
      %998 = vdwg.mxu0
      %v999 = vadd.f32 %v821, %v969
      %v1000 = vadd.f32 %v822, %v972
      %v1001 = vadd.f32 %v823, %v977
      %v1002 = vadd.f32 %v824, %v980
      %v1003 = vadd.f32 %v825, %v985
      %v1004 = vadd.f32 %v826, %v988
      %v1005 = vadd.f32 %v827, %v993
      %v1006 = vadd.f32 %v828, %v996
      %v1007 = vld [vmem:[%s303 + $0x1] sm:$0xff]
      %v1008 = vld [vmem:[%s303 + $0x11] sm:$0xff]
      %v1009 = vld [vmem:[%s303 + $0x21] sm:$0xff]
      %v1010 = vld [vmem:[%s303 + $0x31] sm:$0xff]
      %v1011 = vld [vmem:[%s303 + $0x41] sm:$0xff]
      %v1012 = vld [vmem:[%s303 + $0x51] sm:$0xff]
      %v1013 = vld [vmem:[%s303 + $0x61] sm:$0xff]
      %v1014 = vld [vmem:[%s303 + $0x71] sm:$0xff]
      %v1015 = vpack.c.bf16 %v1007, %v1007
      %v1016 = vpack.c.bf16 %v1008, %v1008
      %v1017 = vpack.c.bf16 %v1009, %v1009
      %v1018 = vpack.c.bf16 %v1010, %v1010
      %v1019 = vpack.c.bf16 %v1011, %v1011
      %v1020 = vpack.c.bf16 %v1012, %v1012
      %v1021 = vpack.c.bf16 %v1013, %v1013
      %v1022 = vpack.c.bf16 %v1014, %v1014
      %s1023 = scalar_lea.vmem %s3, 256
      %v1024 = vld [vmem:[%s1023] sm:$0xf]
      %v1025 = vld [vmem:[%s1023 + $0x4] sm:$0xf]
      %v1026 = vld [vmem:[%s1023 + $0x8] sm:$0xf]
      %v1027 = vld [vmem:[%s1023 + $0xc] sm:$0xf]
      %v1028 = vld [vmem:[%s1023 + $0x10] sm:$0xf]
      %v1029 = vld [vmem:[%s1023 + $0x14] sm:$0xf]
      %v1030 = vld [vmem:[%s1023 + $0x18] sm:$0xf]
      %v1031 = vld [vmem:[%s1023 + $0x1c] sm:$0xf]
      %v1032 = vld [vmem:[%s1023 + $0x20] sm:$0xf]
      %v1033 = vld [vmem:[%s1023 + $0x24] sm:$0xf]
      %v1034 = vld [vmem:[%s1023 + $0x28] sm:$0xf]
      %v1035 = vld [vmem:[%s1023 + $0x2c] sm:$0xf]
      %v1036 = vld [vmem:[%s1023 + $0x30] sm:$0xf]
      %v1037 = vld [vmem:[%s1023 + $0x34] sm:$0xf]
      %v1038 = vld [vmem:[%s1023 + $0x38] sm:$0xf]
      %v1039 = vld [vmem:[%s1023 + $0x3c] sm:$0xf]
      %v1048 = vunpack.c.l.b16 %v1015
      %v1049 = vunpack.c.l.b16 %v1016
      %v1050 = vunpack.c.l.b16 %v1017
      %v1051 = vunpack.c.l.b16 %v1018
      %v1052 = vunpack.c.l.b16 %v1019
      %v1053 = vunpack.c.l.b16 %v1020
      %v1054 = vunpack.c.l.b16 %v1021
      %v1055 = vunpack.c.l.b16 %v1022
      %v1056 = vpack.c.b16 %v1049, %v1048
      %v1057 = vpack.c.b16 %v1051, %v1050
      %v1058 = vpack.c.b16 %v1053, %v1052
      %v1059 = vpack.c.b16 %v1055, %v1054
      %v1080 = vunpack.c.l.b16 %v1024
      %v1081 = vunpack.c.l.b16 %v1025
      %v1082 = vunpack.c.l.b16 %v1026
      %v1083 = vunpack.c.l.b16 %v1027
      %v1084 = vunpack.c.l.b16 %v1028
      %v1085 = vunpack.c.l.b16 %v1029
      %v1086 = vunpack.c.l.b16 %v1030
      %v1087 = vunpack.c.l.b16 %v1031
      %v1088 = vunpack.c.l.b16 %v1032
      %v1089 = vunpack.c.l.b16 %v1033
      %v1090 = vunpack.c.l.b16 %v1034
      %v1091 = vunpack.c.l.b16 %v1035
      %v1092 = vunpack.c.l.b16 %v1036
      %v1093 = vunpack.c.l.b16 %v1037
      %v1094 = vunpack.c.l.b16 %v1038
      %v1095 = vunpack.c.l.b16 %v1039
      %v1096 = vpack.c.b16 %v1081, %v1080
      %v1097 = vpack.c.b16 %v1083, %v1082
      %v1098 = vpack.c.b16 %v1085, %v1084
      %v1099 = vpack.c.b16 %v1087, %v1086
      %v1100 = vpack.c.b16 %v1089, %v1088
      %v1101 = vpack.c.b16 %v1091, %v1090
      %v1102 = vpack.c.b16 %v1093, %v1092
      %v1103 = vpack.c.b16 %v1095, %v1094
      %1112 = vmatprep.subr.bf16.mxu0 0
      %1113 = vmatpush1.bf16.msra.mxu0 %v1096
      %1114 = vmatprep.subr.bf16.mxu0 0
      %1115 = vmatpush1.bf16.msra.mxu0 %v1097
      %1116 = vmatprep.subr.bf16.mxu0 0
      %1117 = vmatpush1.bf16.msra.mxu0 %v1098
      %1118 = vmatprep.subr.bf16.mxu0 0
      %1119 = vmatpush1.bf16.msra.mxu0 %v1099
      %1120 = vmatprep.subr.bf16.mxu0 0
      %1121 = vmatpush1.bf16.msra.mxu0 %v1100
      %1122 = vmatprep.subr.bf16.mxu0 0
      %1123 = vmatpush1.bf16.msra.mxu0 %v1101
      %1124 = vmatprep.subr.bf16.mxu0 0
      %1125 = vmatpush1.bf16.msra.mxu0 %v1102
      %1126 = vmatprep.subr.bf16.mxu0 0
      %1127 = vmatpush1.bf16.msra.mxu0 %v1103
      %1128 = vmatprep.subr.bf16.mxu0 0
      %1129 = vmatpush1.bf16.msra.mxu0 0
      %1130 = vmatprep.subr.bf16.mxu0 0
      %1131 = vmatpush1.bf16.msra.mxu0 0
      %1132 = vmatprep.subr.bf16.mxu0 0
      %1133 = vmatpush1.bf16.msra.mxu0 0
      %1134 = vmatprep.subr.bf16.mxu0 0
      %1135 = vmatpush1.bf16.msra.mxu0 0
      %1136 = vmatprep.subr.bf16.mxu0 0
      %1137 = vmatpush1.bf16.msra.mxu0 0
      %1138 = vmatprep.subr.bf16.mxu0 0
      %1139 = vmatpush1.bf16.msra.mxu0 0
      %1140 = vmatprep.subr.bf16.mxu0 0
      %1141 = vmatpush1.bf16.msra.mxu0 0
      %1142 = vmatprep.subr.bf16.mxu0 0
      %1143 = vmatpush1.bf16.msra.mxu0 0
      %1144 = vmatprep.mubr.bf16.mxu0 0
      %1145 = vmatmul.mubr.bf16.gmra.mrb[0].mxu0 %v1056
      %v1146 = vpop.f32.mrb[0].mxu0
      %v1147 = vadd.f32 0.0, %v1146
      %v1148 = vpop.f32.mrb[0].mxu0
      %v1149 = vpop.f32.mrb[0].mxu0
      %v1150 = vadd.f32 0.0, %v1149
      %v1151 = vpop.f32.mrb[0].mxu0
      %1152 = vmatprep.mubr.bf16.mxu0 0
      %1153 = vmatmul.mubr.bf16.gmra.mrb[0].mxu0 %v1057
      %v1154 = vpop.f32.mrb[0].mxu0
      %v1155 = vadd.f32 0.0, %v1154
      %v1156 = vpop.f32.mrb[0].mxu0
      %v1157 = vpop.f32.mrb[0].mxu0
      %v1158 = vadd.f32 0.0, %v1157
      %v1159 = vpop.f32.mrb[0].mxu0
      %1160 = vmatprep.mubr.bf16.mxu0 0
      %1161 = vmatmul.mubr.bf16.gmra.mrb[0].mxu0 %v1058
      %v1162 = vpop.f32.mrb[0].mxu0
      %v1163 = vadd.f32 0.0, %v1162
      %v1164 = vpop.f32.mrb[0].mxu0
      %v1165 = vpop.f32.mrb[0].mxu0
      %v1166 = vadd.f32 0.0, %v1165
      %v1167 = vpop.f32.mrb[0].mxu0
      %1168 = vmatprep.mubr.bf16.mxu0 0
      %1169 = vmatmul.mubr.bf16.gmra.mrb[0].mxu0 %v1059
      %v1170 = vpop.f32.mrb[0].mxu0
      %v1171 = vadd.f32 0.0, %v1170
      %v1172 = vpop.f32.mrb[0].mxu0
      %v1173 = vpop.f32.mrb[0].mxu0
      %v1174 = vadd.f32 0.0, %v1173
      %v1175 = vpop.f32.mrb[0].mxu0
      %1176 = vdwg.mxu0
      %v1177 = vadd.f32 %v999, %v1147
      %v1178 = vadd.f32 %v1000, %v1150
      %v1179 = vadd.f32 %v1001, %v1155
      %v1180 = vadd.f32 %v1002, %v1158
      %v1181 = vadd.f32 %v1003, %v1163
      %v1182 = vadd.f32 %v1004, %v1166
      %v1183 = vadd.f32 %v1005, %v1171
      %v1184 = vadd.f32 %v1006, %v1174
      %v1185 = vld [vmem:[%s303 + $0x2] sm:$0xff]
      %v1186 = vld [vmem:[%s303 + $0x12] sm:$0xff]
      %v1187 = vld [vmem:[%s303 + $0x22] sm:$0xff]
      %v1188 = vld [vmem:[%s303 + $0x32] sm:$0xff]
      %v1189 = vld [vmem:[%s303 + $0x42] sm:$0xff]
      %v1190 = vld [vmem:[%s303 + $0x52] sm:$0xff]
      %v1191 = vld [vmem:[%s303 + $0x62] sm:$0xff]
      %v1192 = vld [vmem:[%s303 + $0x72] sm:$0xff]
      %v1193 = vpack.c.bf16 %v1185, %v1185
      %v1194 = vpack.c.bf16 %v1186, %v1186
      %v1195 = vpack.c.bf16 %v1187, %v1187
      %v1196 = vpack.c.bf16 %v1188, %v1188
      %v1197 = vpack.c.bf16 %v1189, %v1189
      %v1198 = vpack.c.bf16 %v1190, %v1190
      %v1199 = vpack.c.bf16 %v1191, %v1191
      %v1200 = vpack.c.bf16 %v1192, %v1192
      %s1201 = scalar_lea.vmem %s3, 320
      %v1202 = vld [vmem:[%s1201] sm:$0xf]
      %v1203 = vld [vmem:[%s1201 + $0x4] sm:$0xf]
      %v1204 = vld [vmem:[%s1201 + $0x8] sm:$0xf]
      %v1205 = vld [vmem:[%s1201 + $0xc] sm:$0xf]
      %v1206 = vld [vmem:[%s1201 + $0x10] sm:$0xf]
      %v1207 = vld [vmem:[%s1201 + $0x14] sm:$0xf]
      %v1208 = vld [vmem:[%s1201 + $0x18] sm:$0xf]
      %v1209 = vld [vmem:[%s1201 + $0x1c] sm:$0xf]
      %v1210 = vld [vmem:[%s1201 + $0x20] sm:$0xf]
      %v1211 = vld [vmem:[%s1201 + $0x24] sm:$0xf]
      %v1212 = vld [vmem:[%s1201 + $0x28] sm:$0xf]
      %v1213 = vld [vmem:[%s1201 + $0x2c] sm:$0xf]
      %v1214 = vld [vmem:[%s1201 + $0x30] sm:$0xf]
      %v1215 = vld [vmem:[%s1201 + $0x34] sm:$0xf]
      %v1216 = vld [vmem:[%s1201 + $0x38] sm:$0xf]
      %v1217 = vld [vmem:[%s1201 + $0x3c] sm:$0xf]
      %v1226 = vunpack.c.l.b16 %v1193
      %v1227 = vunpack.c.l.b16 %v1194
      %v1228 = vunpack.c.l.b16 %v1195
      %v1229 = vunpack.c.l.b16 %v1196
      %v1230 = vunpack.c.l.b16 %v1197
      %v1231 = vunpack.c.l.b16 %v1198
      %v1232 = vunpack.c.l.b16 %v1199
      %v1233 = vunpack.c.l.b16 %v1200
      %v1234 = vpack.c.b16 %v1227, %v1226
      %v1235 = vpack.c.b16 %v1229, %v1228
      %v1236 = vpack.c.b16 %v1231, %v1230
      %v1237 = vpack.c.b16 %v1233, %v1232
      %v1258 = vunpack.c.l.b16 %v1202
      %v1259 = vunpack.c.l.b16 %v1203
      %v1260 = vunpack.c.l.b16 %v1204
      %v1261 = vunpack.c.l.b16 %v1205
      %v1262 = vunpack.c.l.b16 %v1206
      %v1263 = vunpack.c.l.b16 %v1207
      %v1264 = vunpack.c.l.b16 %v1208
      %v1265 = vunpack.c.l.b16 %v1209
      %v1266 = vunpack.c.l.b16 %v1210
      %v1267 = vunpack.c.l.b16 %v1211
      %v1268 = vunpack.c.l.b16 %v1212
      %v1269 = vunpack.c.l.b16 %v1213
      %v1270 = vunpack.c.l.b16 %v1214
      %v1271 = vunpack.c.l.b16 %v1215
      %v1272 = vunpack.c.l.b16 %v1216
      %v1273 = vunpack.c.l.b16 %v1217
      %v1274 = vpack.c.b16 %v1259, %v1258
      %v1275 = vpack.c.b16 %v1261, %v1260
      %v1276 = vpack.c.b16 %v1263, %v1262
      %v1277 = vpack.c.b16 %v1265, %v1264
      %v1278 = vpack.c.b16 %v1267, %v1266
      %v1279 = vpack.c.b16 %v1269, %v1268
      %v1280 = vpack.c.b16 %v1271, %v1270
      %v1281 = vpack.c.b16 %v1273, %v1272
      %1290 = vmatprep.subr.bf16.mxu0 0
      %1291 = vmatpush1.bf16.msra.mxu0 %v1274
      %1292 = vmatprep.subr.bf16.mxu0 0
      %1293 = vmatpush1.bf16.msra.mxu0 %v1275
      %1294 = vmatprep.subr.bf16.mxu0 0
      %1295 = vmatpush1.bf16.msra.mxu0 %v1276
      %1296 = vmatprep.subr.bf16.mxu0 0
      %1297 = vmatpush1.bf16.msra.mxu0 %v1277
      %1298 = vmatprep.subr.bf16.mxu0 0
      %1299 = vmatpush1.bf16.msra.mxu0 %v1278
      %1300 = vmatprep.subr.bf16.mxu0 0
      %1301 = vmatpush1.bf16.msra.mxu0 %v1279
      %1302 = vmatprep.subr.bf16.mxu0 0
      %1303 = vmatpush1.bf16.msra.mxu0 %v1280
      %1304 = vmatprep.subr.bf16.mxu0 0
      %1305 = vmatpush1.bf16.msra.mxu0 %v1281
      %1306 = vmatprep.subr.bf16.mxu0 0
      %1307 = vmatpush1.bf16.msra.mxu0 0
      %1308 = vmatprep.subr.bf16.mxu0 0
      %1309 = vmatpush1.bf16.msra.mxu0 0
      %1310 = vmatprep.subr.bf16.mxu0 0
      %1311 = vmatpush1.bf16.msra.mxu0 0
      %1312 = vmatprep.subr.bf16.mxu0 0
      %1313 = vmatpush1.bf16.msra.mxu0 0
      %1314 = vmatprep.subr.bf16.mxu0 0
      %1315 = vmatpush1.bf16.msra.mxu0 0
      %1316 = vmatprep.subr.bf16.mxu0 0
      %1317 = vmatpush1.bf16.msra.mxu0 0
      %1318 = vmatprep.subr.bf16.mxu0 0
      %1319 = vmatpush1.bf16.msra.mxu0 0
      %1320 = vmatprep.subr.bf16.mxu0 0
      %1321 = vmatpush1.bf16.msra.mxu0 0
      %1322 = vmatprep.mubr.bf16.mxu0 0
      %1323 = vmatmul.mubr.bf16.gmra.mrb[0].mxu0 %v1234
      %v1324 = vpop.f32.mrb[0].mxu0
      %v1325 = vadd.f32 0.0, %v1324
      %v1326 = vpop.f32.mrb[0].mxu0
      %v1327 = vpop.f32.mrb[0].mxu0
      %v1328 = vadd.f32 0.0, %v1327
      %v1329 = vpop.f32.mrb[0].mxu0
      %1330 = vmatprep.mubr.bf16.mxu0 0
      %1331 = vmatmul.mubr.bf16.gmra.mrb[0].mxu0 %v1235
      %v1332 = vpop.f32.mrb[0].mxu0
      %v1333 = vadd.f32 0.0, %v1332
      %v1334 = vpop.f32.mrb[0].mxu0
      %v1335 = vpop.f32.mrb[0].mxu0
      %v1336 = vadd.f32 0.0, %v1335
      %v1337 = vpop.f32.mrb[0].mxu0
      %1338 = vmatprep.mubr.bf16.mxu0 0
      %1339 = vmatmul.mubr.bf16.gmra.mrb[0].mxu0 %v1236
      %v1340 = vpop.f32.mrb[0].mxu0
      %v1341 = vadd.f32 0.0, %v1340
      %v1342 = vpop.f32.mrb[0].mxu0
      %v1343 = vpop.f32.mrb[0].mxu0
      %v1344 = vadd.f32 0.0, %v1343
      %v1345 = vpop.f32.mrb[0].mxu0
      %1346 = vmatprep.mubr.bf16.mxu0 0
      %1347 = vmatmul.mubr.bf16.gmra.mrb[0].mxu0 %v1237
      %v1348 = vpop.f32.mrb[0].mxu0
      %v1349 = vadd.f32 0.0, %v1348
      %v1350 = vpop.f32.mrb[0].mxu0
      %v1351 = vpop.f32.mrb[0].mxu0
      %v1352 = vadd.f32 0.0, %v1351
      %v1353 = vpop.f32.mrb[0].mxu0
      %1354 = vdwg.mxu0
      %v1355 = vadd.f32 %v1177, %v1325
      %v1356 = vadd.f32 %v1178, %v1328
      %v1357 = vadd.f32 %v1179, %v1333
      %v1358 = vadd.f32 %v1180, %v1336
      %v1359 = vadd.f32 %v1181, %v1341
      %v1360 = vadd.f32 %v1182, %v1344
      %v1361 = vadd.f32 %v1183, %v1349
      %v1362 = vadd.f32 %v1184, %v1352
      %s1363 = scalar_lea.vmem [#allocation2], 32
      %v1364 = vld [vmem:[%s1363] sm:$0xff]
      %v1365 = vld [vmem:[%s1363 + $0x10] sm:$0xff]
      %v1366 = vld [vmem:[%s1363 + $0x20] sm:$0xff]
      %v1367 = vld [vmem:[%s1363 + $0x30] sm:$0xff]
      %v1368 = vld [vmem:[%s1363 + $0x40] sm:$0xff]
      %v1369 = vld [vmem:[%s1363 + $0x50] sm:$0xff]
      %v1370 = vld [vmem:[%s1363 + $0x60] sm:$0xff]
      %v1371 = vld [vmem:[%s1363 + $0x70] sm:$0xff]
      %v1372 = vpack.c.bf16 %v1364, %v1364
      %v1373 = vpack.c.bf16 %v1365, %v1365
      %v1374 = vpack.c.bf16 %v1366, %v1366
      %v1375 = vpack.c.bf16 %v1367, %v1367
      %v1376 = vpack.c.bf16 %v1368, %v1368
      %v1377 = vpack.c.bf16 %v1369, %v1369
      %v1378 = vpack.c.bf16 %v1370, %v1370
      %v1379 = vpack.c.bf16 %v1371, %v1371
      %s1380 = scalar_lea.vmem %s3, 384
      %v1381 = vld [vmem:[%s1380] sm:$0xf]
      %v1382 = vld [vmem:[%s1380 + $0x4] sm:$0xf]
      %v1383 = vld [vmem:[%s1380 + $0x8] sm:$0xf]
      %v1384 = vld [vmem:[%s1380 + $0xc] sm:$0xf]
      %v1385 = vld [vmem:[%s1380 + $0x10] sm:$0xf]
      %v1386 = vld [vmem:[%s1380 + $0x14] sm:$0xf]
      %v1387 = vld [vmem:[%s1380 + $0x18] sm:$0xf]
      %v1388 = vld [vmem:[%s1380 + $0x1c] sm:$0xf]
      %v1389 = vld [vmem:[%s1380 + $0x20] sm:$0xf]
      %v1390 = vld [vmem:[%s1380 + $0x24] sm:$0xf]
      %v1391 = vld [vmem:[%s1380 + $0x28] sm:$0xf]
      %v1392 = vld [vmem:[%s1380 + $0x2c] sm:$0xf]
      %v1393 = vld [vmem:[%s1380 + $0x30] sm:$0xf]
      %v1394 = vld [vmem:[%s1380 + $0x34] sm:$0xf]
      %v1395 = vld [vmem:[%s1380 + $0x38] sm:$0xf]
      %v1396 = vld [vmem:[%s1380 + $0x3c] sm:$0xf]
      %v1405 = vunpack.c.l.b16 %v1372
      %v1406 = vunpack.c.l.b16 %v1373
      %v1407 = vunpack.c.l.b16 %v1374
      %v1408 = vunpack.c.l.b16 %v1375
      %v1409 = vunpack.c.l.b16 %v1376
      %v1410 = vunpack.c.l.b16 %v1377
      %v1411 = vunpack.c.l.b16 %v1378
      %v1412 = vunpack.c.l.b16 %v1379
      %v1413 = vpack.c.b16 %v1406, %v1405
      %v1414 = vpack.c.b16 %v1408, %v1407
      %v1415 = vpack.c.b16 %v1410, %v1409
      %v1416 = vpack.c.b16 %v1412, %v1411
      %v1437 = vunpack.c.l.b16 %v1381
      %v1438 = vunpack.c.l.b16 %v1382
      %v1439 = vunpack.c.l.b16 %v1383
      %v1440 = vunpack.c.l.b16 %v1384
      %v1441 = vunpack.c.l.b16 %v1385
      %v1442 = vunpack.c.l.b16 %v1386
      %v1443 = vunpack.c.l.b16 %v1387
      %v1444 = vunpack.c.l.b16 %v1388
      %v1445 = vunpack.c.l.b16 %v1389
      %v1446 = vunpack.c.l.b16 %v1390
      %v1447 = vunpack.c.l.b16 %v1391
      %v1448 = vunpack.c.l.b16 %v1392
      %v1449 = vunpack.c.l.b16 %v1393
      %v1450 = vunpack.c.l.b16 %v1394
      %v1451 = vunpack.c.l.b16 %v1395
      %v1452 = vunpack.c.l.b16 %v1396
      %v1453 = vpack.c.b16 %v1438, %v1437
      %v1454 = vpack.c.b16 %v1440, %v1439
      %v1455 = vpack.c.b16 %v1442, %v1441
      %v1456 = vpack.c.b16 %v1444, %v1443
      %v1457 = vpack.c.b16 %v1446, %v1445
      %v1458 = vpack.c.b16 %v1448, %v1447
      %v1459 = vpack.c.b16 %v1450, %v1449
      %v1460 = vpack.c.b16 %v1452, %v1451
      %1469 = vmatprep.subr.bf16.mxu0 0
      %1470 = vmatpush1.bf16.msra.mxu0 %v1453
      %1471 = vmatprep.subr.bf16.mxu0 0
      %1472 = vmatpush1.bf16.msra.mxu0 %v1454
      %1473 = vmatprep.subr.bf16.mxu0 0
      %1474 = vmatpush1.bf16.msra.mxu0 %v1455
      %1475 = vmatprep.subr.bf16.mxu0 0
      %1476 = vmatpush1.bf16.msra.mxu0 %v1456
      %1477 = vmatprep.subr.bf16.mxu0 0
      %1478 = vmatpush1.bf16.msra.mxu0 %v1457
      %1479 = vmatprep.subr.bf16.mxu0 0
      %1480 = vmatpush1.bf16.msra.mxu0 %v1458
      %1481 = vmatprep.subr.bf16.mxu0 0
      %1482 = vmatpush1.bf16.msra.mxu0 %v1459
      %1483 = vmatprep.subr.bf16.mxu0 0
      %1484 = vmatpush1.bf16.msra.mxu0 %v1460
      %1485 = vmatprep.subr.bf16.mxu0 0
      %1486 = vmatpush1.bf16.msra.mxu0 0
      %1487 = vmatprep.subr.bf16.mxu0 0
      %1488 = vmatpush1.bf16.msra.mxu0 0
      %1489 = vmatprep.subr.bf16.mxu0 0
      %1490 = vmatpush1.bf16.msra.mxu0 0
      %1491 = vmatprep.subr.bf16.mxu0 0
      %1492 = vmatpush1.bf16.msra.mxu0 0
      %1493 = vmatprep.subr.bf16.mxu0 0
      %1494 = vmatpush1.bf16.msra.mxu0 0
      %1495 = vmatprep.subr.bf16.mxu0 0
      %1496 = vmatpush1.bf16.msra.mxu0 0
      %1497 = vmatprep.subr.bf16.mxu0 0
      %1498 = vmatpush1.bf16.msra.mxu0 0
      %1499 = vmatprep.subr.bf16.mxu0 0
      %1500 = vmatpush1.bf16.msra.mxu0 0
      %1501 = vmatprep.mubr.bf16.mxu0 0
      %1502 = vmatmul.mubr.bf16.gmra.mrb[0].mxu0 %v1413
      %v1503 = vpop.f32.mrb[0].mxu0
      %v1504 = vadd.f32 0.0, %v1503
      %v1505 = vpop.f32.mrb[0].mxu0
      %v1506 = vpop.f32.mrb[0].mxu0
      %v1507 = vadd.f32 0.0, %v1506
      %v1508 = vpop.f32.mrb[0].mxu0
      %1509 = vmatprep.mubr.bf16.mxu0 0
      %1510 = vmatmul.mubr.bf16.gmra.mrb[0].mxu0 %v1414
      %v1511 = vpop.f32.mrb[0].mxu0
      %v1512 = vadd.f32 0.0, %v1511
      %v1513 = vpop.f32.mrb[0].mxu0
      %v1514 = vpop.f32.mrb[0].mxu0
      %v1515 = vadd.f32 0.0, %v1514
      %v1516 = vpop.f32.mrb[0].mxu0
      %1517 = vmatprep.mubr.bf16.mxu0 0
      %1518 = vmatmul.mubr.bf16.gmra.mrb[0].mxu0 %v1415
      %v1519 = vpop.f32.mrb[0].mxu0
      %v1520 = vadd.f32 0.0, %v1519
      %v1521 = vpop.f32.mrb[0].mxu0
      %v1522 = vpop.f32.mrb[0].mxu0
      %v1523 = vadd.f32 0.0, %v1522
      %v1524 = vpop.f32.mrb[0].mxu0
      %1525 = vmatprep.mubr.bf16.mxu0 0
      %1526 = vmatmul.mubr.bf16.gmra.mrb[0].mxu0 %v1416
      %v1527 = vpop.f32.mrb[0].mxu0
      %v1528 = vadd.f32 0.0, %v1527
      %v1529 = vpop.f32.mrb[0].mxu0
      %v1530 = vpop.f32.mrb[0].mxu0
      %v1531 = vadd.f32 0.0, %v1530
      %v1532 = vpop.f32.mrb[0].mxu0
      %1533 = vdwg.mxu0
      %v1534 = vadd.f32 %v1355, %v1504
      %v1535 = vadd.f32 %v1356, %v1507
      %v1536 = vadd.f32 %v1357, %v1512
      %v1537 = vadd.f32 %v1358, %v1515
      %v1538 = vadd.f32 %v1359, %v1520
      %v1539 = vadd.f32 %v1360, %v1523
      %v1540 = vadd.f32 %v1361, %v1528
      %v1541 = vadd.f32 %v1362, %v1531
      %v1542 = vld [vmem:[%s1363 + $0x1] sm:$0xff]
      %v1543 = vld [vmem:[%s1363 + $0x11] sm:$0xff]
      %v1544 = vld [vmem:[%s1363 + $0x21] sm:$0xff]
      %v1545 = vld [vmem:[%s1363 + $0x31] sm:$0xff]
      %v1546 = vld [vmem:[%s1363 + $0x41] sm:$0xff]
      %v1547 = vld [vmem:[%s1363 + $0x51] sm:$0xff]
      %v1548 = vld [vmem:[%s1363 + $0x61] sm:$0xff]
      %v1549 = vld [vmem:[%s1363 + $0x71] sm:$0xff]
      %v1550 = vpack.c.bf16 %v1542, %v1542
      %v1551 = vpack.c.bf16 %v1543, %v1543
      %v1552 = vpack.c.bf16 %v1544, %v1544
      %v1553 = vpack.c.bf16 %v1545, %v1545
      %v1554 = vpack.c.bf16 %v1546, %v1546
      %v1555 = vpack.c.bf16 %v1547, %v1547
      %v1556 = vpack.c.bf16 %v1548, %v1548
      %v1557 = vpack.c.bf16 %v1549, %v1549
      %s1558 = scalar_lea.vmem %s3, 448
      %v1559 = vld [vmem:[%s1558] sm:$0xf]
      %v1560 = vld [vmem:[%s1558 + $0x4] sm:$0xf]
      %v1561 = vld [vmem:[%s1558 + $0x8] sm:$0xf]
      %v1562 = vld [vmem:[%s1558 + $0xc] sm:$0xf]
      %v1563 = vld [vmem:[%s1558 + $0x10] sm:$0xf]
      %v1564 = vld [vmem:[%s1558 + $0x14] sm:$0xf]
      %v1565 = vld [vmem:[%s1558 + $0x18] sm:$0xf]
      %v1566 = vld [vmem:[%s1558 + $0x1c] sm:$0xf]
      %v1567 = vld [vmem:[%s1558 + $0x20] sm:$0xf]
      %v1568 = vld [vmem:[%s1558 + $0x24] sm:$0xf]
      %v1569 = vld [vmem:[%s1558 + $0x28] sm:$0xf]
      %v1570 = vld [vmem:[%s1558 + $0x2c] sm:$0xf]
      %v1571 = vld [vmem:[%s1558 + $0x30] sm:$0xf]
      %v1572 = vld [vmem:[%s1558 + $0x34] sm:$0xf]
      %v1573 = vld [vmem:[%s1558 + $0x38] sm:$0xf]
      %v1574 = vld [vmem:[%s1558 + $0x3c] sm:$0xf]
      %v1583 = vunpack.c.l.b16 %v1550
      %v1584 = vunpack.c.l.b16 %v1551
      %v1585 = vunpack.c.l.b16 %v1552
      %v1586 = vunpack.c.l.b16 %v1553
      %v1587 = vunpack.c.l.b16 %v1554
      %v1588 = vunpack.c.l.b16 %v1555
      %v1589 = vunpack.c.l.b16 %v1556
      %v1590 = vunpack.c.l.b16 %v1557
      %v1591 = vpack.c.b16 %v1584, %v1583
      %v1592 = vpack.c.b16 %v1586, %v1585
      %v1593 = vpack.c.b16 %v1588, %v1587
      %v1594 = vpack.c.b16 %v1590, %v1589
      %v1615 = vunpack.c.l.b16 %v1559
      %v1616 = vunpack.c.l.b16 %v1560
      %v1617 = vunpack.c.l.b16 %v1561
      %v1618 = vunpack.c.l.b16 %v1562
      %v1619 = vunpack.c.l.b16 %v1563
      %v1620 = vunpack.c.l.b16 %v1564
      %v1621 = vunpack.c.l.b16 %v1565
      %v1622 = vunpack.c.l.b16 %v1566
      %v1623 = vunpack.c.l.b16 %v1567
      %v1624 = vunpack.c.l.b16 %v1568
      %v1625 = vunpack.c.l.b16 %v1569
      %v1626 = vunpack.c.l.b16 %v1570
      %v1627 = vunpack.c.l.b16 %v1571
      %v1628 = vunpack.c.l.b16 %v1572
      %v1629 = vunpack.c.l.b16 %v1573
      %v1630 = vunpack.c.l.b16 %v1574
      %v1631 = vpack.c.b16 %v1616, %v1615
      %v1632 = vpack.c.b16 %v1618, %v1617
      %v1633 = vpack.c.b16 %v1620, %v1619
      %v1634 = vpack.c.b16 %v1622, %v1621
      %v1635 = vpack.c.b16 %v1624, %v1623
      %v1636 = vpack.c.b16 %v1626, %v1625
      %v1637 = vpack.c.b16 %v1628, %v1627
      %v1638 = vpack.c.b16 %v1630, %v1629
      %1647 = vmatprep.subr.bf16.mxu0 0
      %1648 = vmatpush1.bf16.msra.mxu0 %v1631
      %1649 = vmatprep.subr.bf16.mxu0 0
      %1650 = vmatpush1.bf16.msra.mxu0 %v1632
      %1651 = vmatprep.subr.bf16.mxu0 0
      %1652 = vmatpush1.bf16.msra.mxu0 %v1633
      %1653 = vmatprep.subr.bf16.mxu0 0
      %1654 = vmatpush1.bf16.msra.mxu0 %v1634
      %1655 = vmatprep.subr.bf16.mxu0 0
      %1656 = vmatpush1.bf16.msra.mxu0 %v1635
      %1657 = vmatprep.subr.bf16.mxu0 0
      %1658 = vmatpush1.bf16.msra.mxu0 %v1636
      %1659 = vmatprep.subr.bf16.mxu0 0
      %1660 = vmatpush1.bf16.msra.mxu0 %v1637
      %1661 = vmatprep.subr.bf16.mxu0 0
      %1662 = vmatpush1.bf16.msra.mxu0 %v1638
      %1663 = vmatprep.subr.bf16.mxu0 0
      %1664 = vmatpush1.bf16.msra.mxu0 0
      %1665 = vmatprep.subr.bf16.mxu0 0
      %1666 = vmatpush1.bf16.msra.mxu0 0
      %1667 = vmatprep.subr.bf16.mxu0 0
      %1668 = vmatpush1.bf16.msra.mxu0 0
      %1669 = vmatprep.subr.bf16.mxu0 0
      %1670 = vmatpush1.bf16.msra.mxu0 0
      %1671 = vmatprep.subr.bf16.mxu0 0
      %1672 = vmatpush1.bf16.msra.mxu0 0
      %1673 = vmatprep.subr.bf16.mxu0 0
      %1674 = vmatpush1.bf16.msra.mxu0 0
      %1675 = vmatprep.subr.bf16.mxu0 0
      %1676 = vmatpush1.bf16.msra.mxu0 0
      %1677 = vmatprep.subr.bf16.mxu0 0
      %1678 = vmatpush1.bf16.msra.mxu0 0
      %1679 = vmatprep.mubr.bf16.mxu0 0
      %1680 = vmatmul.mubr.bf16.gmra.mrb[0].mxu0 %v1591
      %v1681 = vpop.f32.mrb[0].mxu0
      %v1682 = vadd.f32 0.0, %v1681
      %v1683 = vpop.f32.mrb[0].mxu0
      %v1684 = vpop.f32.mrb[0].mxu0
      %v1685 = vadd.f32 0.0, %v1684
      %v1686 = vpop.f32.mrb[0].mxu0
      %1687 = vmatprep.mubr.bf16.mxu0 0
      %1688 = vmatmul.mubr.bf16.gmra.mrb[0].mxu0 %v1592
      %v1689 = vpop.f32.mrb[0].mxu0
      %v1690 = vadd.f32 0.0, %v1689
      %v1691 = vpop.f32.mrb[0].mxu0
      %v1692 = vpop.f32.mrb[0].mxu0
      %v1693 = vadd.f32 0.0, %v1692
      %v1694 = vpop.f32.mrb[0].mxu0
      %1695 = vmatprep.mubr.bf16.mxu0 0
      %1696 = vmatmul.mubr.bf16.gmra.mrb[0].mxu0 %v1593
      %v1697 = vpop.f32.mrb[0].mxu0
      %v1698 = vadd.f32 0.0, %v1697
      %v1699 = vpop.f32.mrb[0].mxu0
      %v1700 = vpop.f32.mrb[0].mxu0
      %v1701 = vadd.f32 0.0, %v1700
      %v1702 = vpop.f32.mrb[0].mxu0
      %1703 = vmatprep.mubr.bf16.mxu0 0
      %1704 = vmatmul.mubr.bf16.gmra.mrb[0].mxu0 %v1594
      %v1705 = vpop.f32.mrb[0].mxu0
      %v1706 = vadd.f32 0.0, %v1705
      %v1707 = vpop.f32.mrb[0].mxu0
      %v1708 = vpop.f32.mrb[0].mxu0
      %v1709 = vadd.f32 0.0, %v1708
      %v1710 = vpop.f32.mrb[0].mxu0
      %1711 = vdwg.mxu0
      %v1712 = vadd.f32 %v1534, %v1682
      %v1713 = vadd.f32 %v1535, %v1685
      %v1714 = vadd.f32 %v1536, %v1690
      %v1715 = vadd.f32 %v1537, %v1693
      %v1716 = vadd.f32 %v1538, %v1698
      %v1717 = vadd.f32 %v1539, %v1701
      %v1718 = vadd.f32 %v1540, %v1706
      %v1719 = vadd.f32 %v1541, %v1709
      %v1720 = vld [vmem:[%s1363 + $0x2] sm:$0xff]
      %v1721 = vld [vmem:[%s1363 + $0x12] sm:$0xff]
      %v1722 = vld [vmem:[%s1363 + $0x22] sm:$0xff]
      %v1723 = vld [vmem:[%s1363 + $0x32] sm:$0xff]
      %v1724 = vld [vmem:[%s1363 + $0x42] sm:$0xff]
      %v1725 = vld [vmem:[%s1363 + $0x52] sm:$0xff]
      %v1726 = vld [vmem:[%s1363 + $0x62] sm:$0xff]
      %v1727 = vld [vmem:[%s1363 + $0x72] sm:$0xff]
      %v1728 = vpack.c.bf16 %v1720, %v1720
      %v1729 = vpack.c.bf16 %v1721, %v1721
      %v1730 = vpack.c.bf16 %v1722, %v1722
      %v1731 = vpack.c.bf16 %v1723, %v1723
      %v1732 = vpack.c.bf16 %v1724, %v1724
      %v1733 = vpack.c.bf16 %v1725, %v1725
      %v1734 = vpack.c.bf16 %v1726, %v1726
      %v1735 = vpack.c.bf16 %v1727, %v1727
      %s1736 = scalar_lea.vmem %s3, 512
      %v1737 = vld [vmem:[%s1736] sm:$0xf]
      %v1738 = vld [vmem:[%s1736 + $0x4] sm:$0xf]
      %v1739 = vld [vmem:[%s1736 + $0x8] sm:$0xf]
      %v1740 = vld [vmem:[%s1736 + $0xc] sm:$0xf]
      %v1741 = vld [vmem:[%s1736 + $0x10] sm:$0xf]
      %v1742 = vld [vmem:[%s1736 + $0x14] sm:$0xf]
      %v1743 = vld [vmem:[%s1736 + $0x18] sm:$0xf]
      %v1744 = vld [vmem:[%s1736 + $0x1c] sm:$0xf]
      %v1745 = vld [vmem:[%s1736 + $0x20] sm:$0xf]
      %v1746 = vld [vmem:[%s1736 + $0x24] sm:$0xf]
      %v1747 = vld [vmem:[%s1736 + $0x28] sm:$0xf]
      %v1748 = vld [vmem:[%s1736 + $0x2c] sm:$0xf]
      %v1749 = vld [vmem:[%s1736 + $0x30] sm:$0xf]
      %v1750 = vld [vmem:[%s1736 + $0x34] sm:$0xf]
      %v1751 = vld [vmem:[%s1736 + $0x38] sm:$0xf]
      %v1752 = vld [vmem:[%s1736 + $0x3c] sm:$0xf]
      %v1761 = vunpack.c.l.b16 %v1728
      %v1762 = vunpack.c.l.b16 %v1729
      %v1763 = vunpack.c.l.b16 %v1730
      %v1764 = vunpack.c.l.b16 %v1731
      %v1765 = vunpack.c.l.b16 %v1732
      %v1766 = vunpack.c.l.b16 %v1733
      %v1767 = vunpack.c.l.b16 %v1734
      %v1768 = vunpack.c.l.b16 %v1735
      %v1769 = vpack.c.b16 %v1762, %v1761
      %v1770 = vpack.c.b16 %v1764, %v1763
      %v1771 = vpack.c.b16 %v1766, %v1765
      %v1772 = vpack.c.b16 %v1768, %v1767
      %v1793 = vunpack.c.l.b16 %v1737
      %v1794 = vunpack.c.l.b16 %v1738
      %v1795 = vunpack.c.l.b16 %v1739
      %v1796 = vunpack.c.l.b16 %v1740
      %v1797 = vunpack.c.l.b16 %v1741
      %v1798 = vunpack.c.l.b16 %v1742
      %v1799 = vunpack.c.l.b16 %v1743
      %v1800 = vunpack.c.l.b16 %v1744
      %v1801 = vunpack.c.l.b16 %v1745
      %v1802 = vunpack.c.l.b16 %v1746
      %v1803 = vunpack.c.l.b16 %v1747
      %v1804 = vunpack.c.l.b16 %v1748
      %v1805 = vunpack.c.l.b16 %v1749
      %v1806 = vunpack.c.l.b16 %v1750
      %v1807 = vunpack.c.l.b16 %v1751
      %v1808 = vunpack.c.l.b16 %v1752
      %v1809 = vpack.c.b16 %v1794, %v1793
      %v1810 = vpack.c.b16 %v1796, %v1795
      %v1811 = vpack.c.b16 %v1798, %v1797
      %v1812 = vpack.c.b16 %v1800, %v1799
      %v1813 = vpack.c.b16 %v1802, %v1801
      %v1814 = vpack.c.b16 %v1804, %v1803
      %v1815 = vpack.c.b16 %v1806, %v1805
      %v1816 = vpack.c.b16 %v1808, %v1807
      %1825 = vmatprep.subr.bf16.mxu0 0
      %1826 = vmatpush1.bf16.msra.mxu0 %v1809
      %1827 = vmatprep.subr.bf16.mxu0 0
      %1828 = vmatpush1.bf16.msra.mxu0 %v1810
      %1829 = vmatprep.subr.bf16.mxu0 0
      %1830 = vmatpush1.bf16.msra.mxu0 %v1811
      %1831 = vmatprep.subr.bf16.mxu0 0
      %1832 = vmatpush1.bf16.msra.mxu0 %v1812
      %1833 = vmatprep.subr.bf16.mxu0 0
      %1834 = vmatpush1.bf16.msra.mxu0 %v1813
      %1835 = vmatprep.subr.bf16.mxu0 0
      %1836 = vmatpush1.bf16.msra.mxu0 %v1814
      %1837 = vmatprep.subr.bf16.mxu0 0
      %1838 = vmatpush1.bf16.msra.mxu0 %v1815
      %1839 = vmatprep.subr.bf16.mxu0 0
      %1840 = vmatpush1.bf16.msra.mxu0 %v1816
      %1841 = vmatprep.subr.bf16.mxu0 0
      %1842 = vmatpush1.bf16.msra.mxu0 0
      %1843 = vmatprep.subr.bf16.mxu0 0
      %1844 = vmatpush1.bf16.msra.mxu0 0
      %1845 = vmatprep.subr.bf16.mxu0 0
      %1846 = vmatpush1.bf16.msra.mxu0 0
      %1847 = vmatprep.subr.bf16.mxu0 0
      %1848 = vmatpush1.bf16.msra.mxu0 0
      %1849 = vmatprep.subr.bf16.mxu0 0
      %1850 = vmatpush1.bf16.msra.mxu0 0
      %1851 = vmatprep.subr.bf16.mxu0 0
      %1852 = vmatpush1.bf16.msra.mxu0 0
      %1853 = vmatprep.subr.bf16.mxu0 0
      %1854 = vmatpush1.bf16.msra.mxu0 0
      %1855 = vmatprep.subr.bf16.mxu0 0
      %1856 = vmatpush1.bf16.msra.mxu0 0
      %1857 = vmatprep.mubr.bf16.mxu0 0
      %1858 = vmatmul.mubr.bf16.gmra.mrb[0].mxu0 %v1769
      %v1859 = vpop.f32.mrb[0].mxu0
      %v1860 = vadd.f32 0.0, %v1859
      %v1861 = vpop.f32.mrb[0].mxu0
      %v1862 = vpop.f32.mrb[0].mxu0
      %v1863 = vadd.f32 0.0, %v1862
      %v1864 = vpop.f32.mrb[0].mxu0
      %1865 = vmatprep.mubr.bf16.mxu0 0
      %1866 = vmatmul.mubr.bf16.gmra.mrb[0].mxu0 %v1770
      %v1867 = vpop.f32.mrb[0].mxu0
      %v1868 = vadd.f32 0.0, %v1867
      %v1869 = vpop.f32.mrb[0].mxu0
      %v1870 = vpop.f32.mrb[0].mxu0
      %v1871 = vadd.f32 0.0, %v1870
      %v1872 = vpop.f32.mrb[0].mxu0
      %1873 = vmatprep.mubr.bf16.mxu0 0
      %1874 = vmatmul.mubr.bf16.gmra.mrb[0].mxu0 %v1771
      %v1875 = vpop.f32.mrb[0].mxu0
      %v1876 = vadd.f32 0.0, %v1875
      %v1877 = vpop.f32.mrb[0].mxu0
      %v1878 = vpop.f32.mrb[0].mxu0
      %v1879 = vadd.f32 0.0, %v1878
      %v1880 = vpop.f32.mrb[0].mxu0
      %1881 = vmatprep.mubr.bf16.mxu0 0
      %1882 = vmatmul.mubr.bf16.gmra.mrb[0].mxu0 %v1772
      %v1883 = vpop.f32.mrb[0].mxu0
      %v1884 = vadd.f32 0.0, %v1883
      %v1885 = vpop.f32.mrb[0].mxu0
      %v1886 = vpop.f32.mrb[0].mxu0
      %v1887 = vadd.f32 0.0, %v1886
      %v1888 = vpop.f32.mrb[0].mxu0
      %1889 = vdwg.mxu0
      %v1890 = vadd.f32 %v1712, %v1860
      %v1891 = vadd.f32 %v1713, %v1863
      %v1892 = vadd.f32 %v1714, %v1868
      %v1893 = vadd.f32 %v1715, %v1871
      %v1894 = vadd.f32 %v1716, %v1876
      %v1895 = vadd.f32 %v1717, %v1879
      %v1896 = vadd.f32 %v1718, %v1884
      %v1897 = vadd.f32 %v1719, %v1887
      %1898 = vst [vmem:[%s231] sm:$0xff] %v1890
      %1899 = vst [vmem:[%s231 + $0x8] sm:$0xff] %v1891
      %1900 = vst [vmem:[%s231 + $0x10] sm:$0xff] %v1892
      %1901 = vst [vmem:[%s231 + $0x18] sm:$0xff] %v1893
      %1902 = vst [vmem:[%s231 + $0x20] sm:$0xff] %v1894
      %1903 = vst [vmem:[%s231 + $0x28] sm:$0xff] %v1895
      %1904 = vst [vmem:[%s231 + $0x30] sm:$0xff] %v1896
      %1905 = vst [vmem:[%s231 + $0x38] sm:$0xff] %v1897
      %v1906 = vadd.f32 %v1890, %v1891
      %v1907 = vadd.f32 %v1906, %v1892
      %v1908 = vadd.f32 %v1907, %v1893
      %v1909 = vadd.f32 %v1908, %v1894
      %v1910 = vadd.f32 %v1909, %v1895
      %v1911 = vadd.f32 %v1910, %v1896
      %v1912 = vadd.f32 %v1911, %v1897
      %v1913 = vrot.slane %v1912, 4
      %v1914 = vadd.f32 %v1912, %v1913
      %v1915 = vrot.slane %v1914, 2
      %v1916 = vadd.f32 %v1914, %v1915
      %v1917 = vrot.slane %v1916, 1
      %v1918 = vadd.f32 %v1916, %v1917
      %1919 = vst [vmem:[%s235] sm:$0x1] %v1918
      %v1920 = vmul.f32 %v1890, %v1890
      %v1921 = vmul.f32 %v1891, %v1891
      %v1922 = vmul.f32 %v1892, %v1892
      %v1923 = vmul.f32 %v1893, %v1893
      %v1924 = vmul.f32 %v1894, %v1894
      %v1925 = vmul.f32 %v1895, %v1895
      %v1926 = vmul.f32 %v1896, %v1896
      %v1927 = vmul.f32 %v1897, %v1897
      %v1928 = vadd.f32 %v1920, %v1921
      %v1929 = vadd.f32 %v1928, %v1922
      %v1930 = vadd.f32 %v1929, %v1923
      %v1931 = vadd.f32 %v1930, %v1924
      %v1932 = vadd.f32 %v1931, %v1925
      %v1933 = vadd.f32 %v1932, %v1926
      %v1934 = vadd.f32 %v1933, %v1927
      %v1935 = vrot.slane %v1934, 4
      %v1936 = vadd.f32 %v1934, %v1935
      %v1937 = vrot.slane %v1936, 2
      %v1938 = vadd.f32 %v1936, %v1937
      %v1939 = vrot.slane %v1938, 1
      %v1940 = vadd.f32 %v1938, %v1939
      %1941 = vst [vmem:[%s235 + $0x1] sm:$0x1] %v1940
      %p1942 = scmp.lt.s32.totalorder %s17, 1
      %s1943 = scalar_select %p1942, %s17, 1
      %s1944 = smul.addr %s1943, 8
      %s1945 = smul.addr %s1944, 8
      %s1946 = scalar_lea.vmem %s4, %s1945
      %p1947 = scmp.lt.s32.totalorder %s17, 1
      %s1948 = scalar_select %p1947, %s17, 1
      %s1949 = smul.addr %s1948, 2
      %s1950 = scalar_lea.vmem %s5, %s1949
      // Predicated region
      $region37: #{basic_block_forward.4} parent=35 // pred_check
        %p1951 = pneg %p124
      $region38: #{basic_block_forward.4} parent=35 // pred_check_branch
        %1953 = sbr.rel (%p1951) target = $region40
      $region39: #{basic_block_forward.4} parent=35 // pred_region
        _
      $region40: #{basic_block_forward.4} parent=35 // pred_fallthru
        _
      // Predicated region
      $region41: #{basic_block_forward.4} parent=35 // pred_check
        %p1954 = pneg %p150
      $region42: #{basic_block_forward.4} parent=35 // pred_check_branch
        %1956 = sbr.rel (%p1954) target = $region44
      $region43: #{basic_block_forward.4} parent=35 // pred_region
        _
      $region44: #{basic_block_forward.4} parent=35 // pred_fallthru
        _
    $region36: #{basic_block_forward.4} parent=5 // pred_fallthru
      _
    %p1957 = scmp.le.s32.totalorder 2, %s12
    // Predicated region
    $region45: #{basic_block_forward.4} parent=5 // pred_check
      %p1958 = pneg %p1957
    $region46: #{basic_block_forward.4} parent=5 // pred_check_branch
      %1960 = sbr.rel (%p1958) target = $region48
    $region47: #{basic_block_forward.4} parent=5 // pred_region
      %s1961 = ssub.s32 %s12, 2
      // Predicated region
      $region49: #{basic_block_forward.4} parent=47 // pred_check
        %p1962 = pneg %p130
      $region50: #{basic_block_forward.4} parent=47 // pred_check_branch
        %1964 = sbr.rel (%p1962) target = $region52
      $region51: #{basic_block_forward.4} parent=47 // pred_region
        %p1965 = scmp.lt.s32.totalorder %s18, 1
        %s1966 = scalar_select %p1965, %s18, 1
        %s1967 = smul.addr %s1966, 8
        %s1968 = smul.addr %s1967, 8
        %s1969 = scalar_lea.vmem %s4, %s1968
      $region52: #{basic_block_forward.4} parent=47 // pred_fallthru
        _
      // Predicated region
      $region53: #{basic_block_forward.4} parent=47 // pred_check
        %p1970 = pneg %p156
      $region54: #{basic_block_forward.4} parent=47 // pred_check_branch
        %1972 = sbr.rel (%p1970) target = $region56
      $region55: #{basic_block_forward.4} parent=47 // pred_region
        %p1973 = scmp.lt.s32.totalorder %s18, 1
        %s1974 = scalar_select %p1973, %s18, 1
        %s1975 = smul.addr %s1974, 2
        %s1976 = scalar_lea.vmem %s5, %s1975
      $region56: #{basic_block_forward.4} parent=47 // pred_fallthru
        _
    $region48: #{basic_block_forward.4} parent=5 // pred_fallthru
      _
  $region6: #{basic_block_forward.4} parent=0 // loop_footer
    %s16 = sadd.s32 1, %s12
  $region7: #{basic_block_forward.4} parent=0 // loop_footer_branch
    %11 = sbr.rel target = $region3
  $region8: #{basic_block_forward.4} parent=0 // loop_exit
    _

// kernel: basic_block_forward.3
$region0: #{basic_block_forward.3}
  #allocation0 [shape = 'u32[]', space=smem, size = 0x4, offset = 0x4, fixed_abs, tag = 'smem constant byte address 0x4 - core index']
  #allocation1 [shape = 'u32[144,128]{1,0:T(1,128)}', space=vmem, size = 0x12000, scoped, tag = 'internal scratch']
  %s0 = inlined_call_operand.vmem [shape: bf16[2,4,9,9,64], index: 0, kind: input, shape index: {}]
  %s1 = inlined_call_operand.vmem [shape: bf16[9,64,128], index: 1, kind: input, shape index: {}]
  %s2 = inlined_call_operand.vmem [shape: f32[2,8,8,128], index: 2, kind: output, shape index: {0}]
  %s3 = inlined_call_operand.vmem [shape: f32[2,2,128], index: 3, kind: output, shape index: {1}]
  %4 = xla_tuple %s2, %s3
  %s5 = sld [smem:[#allocation0]]
  $region49: #{basic_block_forward.3} parent=0
    _
  %s7 = ssub.s32 1, %s5
  %s8 = scalar_select 0, %s7, %s5
  loop: start=0, step=1, limit=4
  $region2: #{basic_block_forward.3} parent=0 // loop_pre_header
    _
  $region3: #{basic_block_forward.3} parent=0 // loop_header
    %s10 = sphi 0, %s14
    %p11 = scmp.ge.s32.totalorder %s10, 4
    %s20 = sphi 0, %s22
    %s23 = sphi 0, %s20
    %s24 = sphi 0, %s23
    %s40 = sphi 0, %s24
    %s44 = sphi 0, %s44
    %s46 = sphi 0, %s44
    %s47 = sphi 0, %s46
    %s61 = sphi 0, %s47
    %s67 = sphi 0, %s69
    %s70 = sphi 0, %s67
    %s71 = sphi 0, %s70
    %s87 = sphi 0, %s71
    %s93 = sphi 0, %s95
    %s96 = sphi 0, %s93
    %s97 = sphi 0, %s96
    %s113 = sphi 0, %s97
  $region4: #{basic_block_forward.3} parent=0 // loop_header_branch
    %13 = sbr.rel (%p11) target = $region8
  $region5: #{basic_block_forward.3} parent=0 // loop_body
    %s15 = ssub.s32 %s10, 1
    %s16 = ssub.s32 %s10, 2
    %s17 = sadd.s32 %s10, 1
    %s18 = ssub.s32 %s10, %s17
    %p19 = scmp.eq.s32.totalorder %s18, 0
    %s21 = sadd.s32 %s20, 1
    %s22 = scalar_select %p19, %s20, %s21
    %p25 = pneg %p19
    %p26 = scmp.eq.s32.totalorder %s10, 1
    %p27 = por %p25, %p26
    %p28 = scmp.ne.s32.totalorder %s20, %s23
    %p29 = scmp.eq.s32.totalorder %s10, 0
    %p30 = por %p28, %p29
    %p31 = scmp.ne.s32.totalorder %s20, %s23
    %p32 = scmp.eq.s32.totalorder %s15, 1
    %p33 = por %p31, %p32
    %p34 = scmp.ne.s32.totalorder %s23, %s24
    %p35 = scmp.eq.s32.totalorder %s15, 0
    %p36 = por %p34, %p35
    %p37 = scmp.ne.s32.totalorder %s23, %s24
    %p38 = scmp.eq.s32.totalorder %s16, 1
    %p39 = por %p37, %p38
    %p41 = scmp.ne.s32.totalorder %s24, %s40
    %p42 = scmp.eq.s32.totalorder %s16, 0
    %p43 = por %p41, %p42
    %s45 = sadd.s32 %s44, 1
    %p48 = scmp.eq.s32.totalorder %s10, 1
    %p49 = scmp.ne.s32.totalorder %s44, %s46
    %p50 = scmp.eq.s32.totalorder %s10, 0
    %p51 = por %p49, %p50
    %p52 = scmp.ne.s32.totalorder %s44, %s46
    %p53 = scmp.eq.s32.totalorder %s15, 1
    %p54 = por %p52, %p53
    %p55 = scmp.ne.s32.totalorder %s46, %s47
    %p56 = scmp.eq.s32.totalorder %s15, 0
    %p57 = por %p55, %p56
    %p58 = scmp.ne.s32.totalorder %s46, %s47
    %p59 = scmp.eq.s32.totalorder %s16, 1
    %p60 = por %p58, %p59
    %p62 = scmp.ne.s32.totalorder %s47, %s61
    %p63 = scmp.eq.s32.totalorder %s16, 0
    %p64 = por %p62, %p63
    %s65 = ssub.s32 %s10, %s17
    %p66 = scmp.eq.s32.totalorder %s65, 0
    %s68 = sadd.s32 %s67, 1
    %s69 = scalar_select %p66, %s67, %s68
    %p72 = pneg %p66
    %p73 = scmp.eq.s32.totalorder %s10, 1
    %p74 = por %p72, %p73
    %p75 = scmp.ne.s32.totalorder %s67, %s70
    %p76 = scmp.eq.s32.totalorder %s10, 0
    %p77 = por %p75, %p76
    %p78 = scmp.ne.s32.totalorder %s67, %s70
    %p79 = scmp.eq.s32.totalorder %s15, 1
    %p80 = por %p78, %p79
    %p81 = scmp.ne.s32.totalorder %s70, %s71
    %p82 = scmp.eq.s32.totalorder %s15, 0
    %p83 = por %p81, %p82
    %p84 = scmp.ne.s32.totalorder %s70, %s71
    %p85 = scmp.eq.s32.totalorder %s16, 1
    %p86 = por %p84, %p85
    %p88 = scmp.ne.s32.totalorder %s71, %s87
    %p89 = scmp.eq.s32.totalorder %s16, 0
    %p90 = por %p88, %p89
    %s91 = ssub.s32 %s10, %s17
    %p92 = scmp.eq.s32.totalorder %s91, 0
    %s94 = sadd.s32 %s93, 1
    %s95 = scalar_select %p92, %s93, %s94
    %p98 = pneg %p92
    %p99 = scmp.eq.s32.totalorder %s10, 1
    %p100 = por %p98, %p99
    %p101 = scmp.ne.s32.totalorder %s93, %s96
    %p102 = scmp.eq.s32.totalorder %s10, 0
    %p103 = por %p101, %p102
    %p104 = scmp.ne.s32.totalorder %s93, %s96
    %p105 = scmp.eq.s32.totalorder %s15, 1
    %p106 = por %p104, %p105
    %p107 = scmp.ne.s32.totalorder %s96, %s97
    %p108 = scmp.eq.s32.totalorder %s15, 0
    %p109 = por %p107, %p108
    %p110 = scmp.ne.s32.totalorder %s96, %s97
    %p111 = scmp.eq.s32.totalorder %s16, 1
    %p112 = por %p110, %p111
    %p114 = scmp.ne.s32.totalorder %s97, %s113
    %p115 = scmp.eq.s32.totalorder %s16, 0
    %p116 = por %p114, %p115
    %p117 = scmp.le.s32.totalorder 1, %s10
    %p118 = scmp.lt.s32.totalorder %s10, 3
    %p119 = pnand %p117, %p118
    %p120 = pneg %p119
    // Predicated region
    $region9: #{basic_block_forward.3} parent=5 // pred_check
      _
    $region10: #{basic_block_forward.3} parent=5 // pred_check_branch
      %122 = sbr.rel (%p119) target = $region12
    $region11: #{basic_block_forward.3} parent=5 // pred_region
      %s123 = ssub.s32 %s10, 1
      // Predicated region
      $region13: #{basic_block_forward.3} parent=11 // pred_check
        %p124 = pneg %p57
      $region14: #{basic_block_forward.3} parent=11 // pred_check_branch
        %126 = sbr.rel (%p124) target = $region16
      $region15: #{basic_block_forward.3} parent=11 // pred_region
        _
      $region16: #{basic_block_forward.3} parent=11 // pred_fallthru
        _
    $region12: #{basic_block_forward.3} parent=5 // pred_fallthru
      _
    %p127 = scmp.lt.s32.totalorder %s10, 2
    // Predicated region
    $region17: #{basic_block_forward.3} parent=5 // pred_check
      %p128 = pneg %p127
    $region18: #{basic_block_forward.3} parent=5 // pred_check_branch
      %130 = sbr.rel (%p128) target = $region20
    $region19: #{basic_block_forward.3} parent=5 // pred_region
      // Predicated region
      $region21: #{basic_block_forward.3} parent=19 // pred_check
        %p131 = pneg %p30
      $region22: #{basic_block_forward.3} parent=19 // pred_check_branch
        %133 = sbr.rel (%p131) target = $region24
      $region23: #{basic_block_forward.3} parent=19 // pred_region
        %p134 = scmp.lt.s32.totalorder %s10, 1
        %s135 = scalar_select %p134, %s10, 1
        %s136 = smul.addr %s135, 72
        %s137 = smul.addr %s136, 4
        %s138 = scalar_lea.vmem %s0, %s137
      $region24: #{basic_block_forward.3} parent=19 // pred_fallthru
        _
    $region20: #{basic_block_forward.3} parent=5 // pred_fallthru
      _
    %p139 = scmp.le.s32.totalorder 1, %s10
    %p140 = scmp.lt.s32.totalorder %s10, 3
    %p141 = pnand %p139, %p140
    %p142 = pneg %p141
    // Predicated region
    $region25: #{basic_block_forward.3} parent=5 // pred_check
      _
    $region26: #{basic_block_forward.3} parent=5 // pred_check_branch
      %144 = sbr.rel (%p141) target = $region28
    $region27: #{basic_block_forward.3} parent=5 // pred_region
      %s145 = ssub.s32 %s10, 1
      %p146 = scmp.lt.s32.totalorder %s15, 1
      %s147 = scalar_select %p146, %s15, 1
      %s148 = smul.addr %s147, 72
      %s149 = smul.addr %s148, 4
      %s150 = scalar_lea.vmem %s0, %s149
      %p151 = pneg %p36
      %p152 = pneg %p33
      %p153 = pneg %p57
      %p154 = pneg %p54
      %p155 = pneg %p83
      %p156 = pneg %p80
      %p157 = scmp.lt.s32.totalorder %s15, 1
      %s158 = scalar_select %p157, %s15, 1
      %s159 = smul.addr %s158, 8
      %s160 = smul.addr %s159, 8
      %s161 = scalar_lea.vmem %s2, %s160
      %p162 = pneg %p109
      %p163 = pneg %p106
      %p164 = scmp.lt.s32.totalorder %s15, 1
      %s165 = scalar_select %p164, %s15, 1
      %s166 = smul.addr %s165, 2
      %s167 = scalar_lea.vmem %s3, %s166
      %p168 = scmp.lt.s32.totalorder %s15, 1
      %s169 = scalar_select %p168, %s15, 1
      %s170 = smul.addr %s169, 72
      %s171 = smul.addr %s170, 4
      %s172 = scalar_lea.vmem %s0, %s171
      %p173 = scmp.lt.s32.totalorder %s15, 1
      %s174 = scalar_select %p173, %s15, 1
      %s175 = smul.addr %s174, 8
      %s176 = smul.addr %s175, 8
      %s177 = scalar_lea.vmem %s2, %s176
      %p178 = scmp.lt.s32.totalorder %s15, 1
      %s179 = scalar_select %p178, %s15, 1
      %s180 = smul.addr %s179, 2
      %s181 = scalar_lea.vmem %s3, %s180
      %v183 = vld [vmem:[%s172] sm:$0xf]
      %v184 = vld [vmem:[%s172 + $0x8] sm:$0xf]
      %v185 = vld [vmem:[%s172 + $0x10] sm:$0xf]
      %v186 = vld [vmem:[%s172 + $0x18] sm:$0xf]
      %v187 = vld [vmem:[%s172 + $0x20] sm:$0xf]
      %v188 = vld [vmem:[%s172 + $0x28] sm:$0xf]
      %v189 = vld [vmem:[%s172 + $0x30] sm:$0xf]
      %v190 = vld [vmem:[%s172 + $0x38] sm:$0xf]
      %v191 = vld [vmem:[%s1] sm:$0xf]
      %v192 = vld [vmem:[%s1 + $0x4] sm:$0xf]
      %v193 = vld [vmem:[%s1 + $0x8] sm:$0xf]
      %v194 = vld [vmem:[%s1 + $0xc] sm:$0xf]
      %v195 = vld [vmem:[%s1 + $0x10] sm:$0xf]
      %v196 = vld [vmem:[%s1 + $0x14] sm:$0xf]
      %v197 = vld [vmem:[%s1 + $0x18] sm:$0xf]
      %v198 = vld [vmem:[%s1 + $0x1c] sm:$0xf]
      %s199 = scalar_lea.vmem %s172, 72
      %v200 = vld [vmem:[%s199] sm:$0xf]
      %v201 = vld [vmem:[%s199 + $0x8] sm:$0xf]
      %v202 = vld [vmem:[%s199 + $0x10] sm:$0xf]
      %v203 = vld [vmem:[%s199 + $0x18] sm:$0xf]
      %v204 = vld [vmem:[%s199 + $0x20] sm:$0xf]
      %v205 = vld [vmem:[%s199 + $0x28] sm:$0xf]
      %v206 = vld [vmem:[%s199 + $0x30] sm:$0xf]
      %v207 = vld [vmem:[%s199 + $0x38] sm:$0xf]
      %s208 = scalar_lea.vmem %s1, 32
      %v209 = vld [vmem:[%s208] sm:$0xf]
      %v210 = vld [vmem:[%s208 + $0x4] sm:$0xf]
      %v211 = vld [vmem:[%s208 + $0x8] sm:$0xf]
      %v212 = vld [vmem:[%s208 + $0xc] sm:$0xf]
      %v213 = vld [vmem:[%s208 + $0x10] sm:$0xf]
      %v214 = vld [vmem:[%s208 + $0x14] sm:$0xf]
      %v215 = vld [vmem:[%s208 + $0x18] sm:$0xf]
      %v216 = vld [vmem:[%s208 + $0x1c] sm:$0xf]
      %v225 = vunpack.c.l.b16 %v200
      %v226 = vunpack.c.l.b16 %v201
      %v227 = vunpack.c.l.b16 %v202
      %v228 = vunpack.c.l.b16 %v203
      %v229 = vunpack.c.l.b16 %v204
      %v230 = vunpack.c.l.b16 %v205
      %v231 = vunpack.c.l.b16 %v206
      %v232 = vunpack.c.l.b16 %v207
      %v233 = vpack.c.b16 %v226, %v225
      %v234 = vpack.c.b16 %v228, %v227
      %v235 = vpack.c.b16 %v230, %v229
      %v236 = vpack.c.b16 %v232, %v231
      %v245 = vunpack.c.l.b16 %v209
      %v246 = vunpack.c.l.b16 %v210
      %v247 = vunpack.c.l.b16 %v211
      %v248 = vunpack.c.l.b16 %v212
      %v249 = vunpack.c.l.b16 %v213
      %v250 = vunpack.c.l.b16 %v214
      %v251 = vunpack.c.l.b16 %v215
      %v252 = vunpack.c.l.b16 %v216
      %v253 = vpack.c.b16 %v246, %v245
      %v254 = vpack.c.b16 %v248, %v247
      %v255 = vpack.c.b16 %v250, %v249
      %v256 = vpack.c.b16 %v252, %v251
      %vm261 = vcmask 523264
      %v263 = vsel %vm261, %v233, 0
      %v266 = vsel %vm261, %v234, 0
      %v269 = vsel %vm261, %v235, 0
      %v272 = vsel %vm261, %v236, 0
      %274 = vmatprep.subr.bf16.mxu0 0
      %275 = vmatpush1.bf16.msra.mxu0 %v253
      %276 = vmatprep.subr.bf16.mxu0 0
      %277 = vmatpush1.bf16.msra.mxu0 %v254
      %278 = vmatprep.subr.bf16.mxu0 0
      %279 = vmatpush1.bf16.msra.mxu0 %v255
      %280 = vmatprep.subr.bf16.mxu0 0
      %281 = vmatpush1.bf16.msra.mxu0 %v256
      %282 = vmatprep.subr.bf16.mxu0 0
      %283 = vmatpush1.bf16.msra.mxu0 0
      %284 = vmatprep.subr.bf16.mxu0 0
      %285 = vmatpush1.bf16.msra.mxu0 0
      %286 = vmatprep.subr.bf16.mxu0 0
      %287 = vmatpush1.bf16.msra.mxu0 0
      %288 = vmatprep.subr.bf16.mxu0 0
      %289 = vmatpush1.bf16.msra.mxu0 0
      %290 = vmatprep.subr.bf16.mxu0 0
      %291 = vmatpush1.bf16.msra.mxu0 0
      %292 = vmatprep.subr.bf16.mxu0 0
      %293 = vmatpush1.bf16.msra.mxu0 0
      %294 = vmatprep.subr.bf16.mxu0 0
      %295 = vmatpush1.bf16.msra.mxu0 0
      %296 = vmatprep.subr.bf16.mxu0 0
      %297 = vmatpush1.bf16.msra.mxu0 0
      %298 = vmatprep.subr.bf16.mxu0 0
      %299 = vmatpush1.bf16.msra.mxu0 0
      %300 = vmatprep.subr.bf16.mxu0 0
      %301 = vmatpush1.bf16.msra.mxu0 0
      %302 = vmatprep.subr.bf16.mxu0 0
      %303 = vmatpush1.bf16.msra.mxu0 0
      %304 = vmatprep.subr.bf16.mxu0 0
      %305 = vmatpush1.bf16.msra.mxu0 0
      %306 = vmatprep.mubr.bf16.mxu0 0
      %307 = vmatmul.mubr.bf16.gmra.mrb[0].mxu0 %v263
      %v308 = vpop.f32.mrb[0].mxu0
      %v309 = vadd.f32 0.0, %v308
      %v310 = vpop.f32.mrb[0].mxu0
      %v311 = vpop.f32.mrb[0].mxu0
      %v312 = vadd.f32 0.0, %v311
      %v313 = vpop.f32.mrb[0].mxu0
      %314 = vmatprep.mubr.bf16.mxu0 0
      %315 = vmatmul.mubr.bf16.gmra.mrb[0].mxu0 %v266
      %v316 = vpop.f32.mrb[0].mxu0
      %v317 = vadd.f32 0.0, %v316
      %v318 = vpop.f32.mrb[0].mxu0
      %v319 = vpop.f32.mrb[0].mxu0
      %v320 = vadd.f32 0.0, %v319
      %v321 = vpop.f32.mrb[0].mxu0
      %322 = vmatprep.mubr.bf16.mxu0 0
      %323 = vmatmul.mubr.bf16.gmra.mrb[0].mxu0 %v269
      %v324 = vpop.f32.mrb[0].mxu0
      %v325 = vadd.f32 0.0, %v324
      %v326 = vpop.f32.mrb[0].mxu0
      %v327 = vpop.f32.mrb[0].mxu0
      %v328 = vadd.f32 0.0, %v327
      %v329 = vpop.f32.mrb[0].mxu0
      %330 = vmatprep.mubr.bf16.mxu0 0
      %331 = vmatmul.mubr.bf16.gmra.mrb[0].mxu0 %v272
      %v332 = vpop.f32.mrb[0].mxu0
      %v333 = vadd.f32 0.0, %v332
      %v334 = vpop.f32.mrb[0].mxu0
      %v335 = vpop.f32.mrb[0].mxu0
      %v336 = vadd.f32 0.0, %v335
      %v337 = vpop.f32.mrb[0].mxu0
      %338 = vdwg.mxu0
      %v347 = vunpack.c.l.b16 %v183
      %v348 = vunpack.c.l.b16 %v184
      %v349 = vunpack.c.l.b16 %v185
      %v350 = vunpack.c.l.b16 %v186
      %v351 = vunpack.c.l.b16 %v187
      %v352 = vunpack.c.l.b16 %v188
      %v353 = vunpack.c.l.b16 %v189
      %v354 = vunpack.c.l.b16 %v190
      %v355 = vpack.c.b16 %v348, %v347
      %v356 = vpack.c.b16 %v350, %v349
      %v357 = vpack.c.b16 %v352, %v351
      %v358 = vpack.c.b16 %v354, %v353
      %v367 = vunpack.c.l.b16 %v191
      %v368 = vunpack.c.l.b16 %v192
      %v369 = vunpack.c.l.b16 %v193
      %v370 = vunpack.c.l.b16 %v194
      %v371 = vunpack.c.l.b16 %v195
      %v372 = vunpack.c.l.b16 %v196
      %v373 = vunpack.c.l.b16 %v197
      %v374 = vunpack.c.l.b16 %v198
      %v375 = vpack.c.b16 %v368, %v367
      %v376 = vpack.c.b16 %v370, %v369
      %v377 = vpack.c.b16 %v372, %v371
      %v378 = vpack.c.b16 %v374, %v373
      %v384 = vsel %vm261, %v355, 0
      %v387 = vsel %vm261, %v356, 0
      %v390 = vsel %vm261, %v357, 0
      %v393 = vsel %vm261, %v358, 0
      %395 = vmatprep.subr.bf16.mxu0 0
      %396 = vmatpush1.bf16.msra.mxu0 %v375
      %397 = vmatprep.subr.bf16.mxu0 0
      %398 = vmatpush1.bf16.msra.mxu0 %v376
      %399 = vmatprep.subr.bf16.mxu0 0
      %400 = vmatpush1.bf16.msra.mxu0 %v377
      %401 = vmatprep.subr.bf16.mxu0 0
      %402 = vmatpush1.bf16.msra.mxu0 %v378
      %403 = vmatprep.subr.bf16.mxu0 0
      %404 = vmatpush1.bf16.msra.mxu0 0
      %405 = vmatprep.subr.bf16.mxu0 0
      %406 = vmatpush1.bf16.msra.mxu0 0
      %407 = vmatprep.subr.bf16.mxu0 0
      %408 = vmatpush1.bf16.msra.mxu0 0
      %409 = vmatprep.subr.bf16.mxu0 0
      %410 = vmatpush1.bf16.msra.mxu0 0
      %411 = vmatprep.subr.bf16.mxu0 0
      %412 = vmatpush1.bf16.msra.mxu0 0
      %413 = vmatprep.subr.bf16.mxu0 0
      %414 = vmatpush1.bf16.msra.mxu0 0
      %415 = vmatprep.subr.bf16.mxu0 0
      %416 = vmatpush1.bf16.msra.mxu0 0
      %417 = vmatprep.subr.bf16.mxu0 0
      %418 = vmatpush1.bf16.msra.mxu0 0
      %419 = vmatprep.subr.bf16.mxu0 0
      %420 = vmatpush1.bf16.msra.mxu0 0
      %421 = vmatprep.subr.bf16.mxu0 0
      %422 = vmatpush1.bf16.msra.mxu0 0
      %423 = vmatprep.subr.bf16.mxu0 0
      %424 = vmatpush1.bf16.msra.mxu0 0
      %425 = vmatprep.subr.bf16.mxu0 0
      %426 = vmatpush1.bf16.msra.mxu0 0
      %427 = vmatprep.mubr.bf16.mxu0 0
      %428 = vmatmul.mubr.bf16.gmra.mrb[0].mxu0 %v384
      %v429 = vpop.f32.mrb[0].mxu0
      %v430 = vadd.f32 %v309, %v429
      %v431 = vpop.f32.mrb[0].mxu0
      %v432 = vpop.f32.mrb[0].mxu0
      %v433 = vadd.f32 %v312, %v432
      %v434 = vpop.f32.mrb[0].mxu0
      %435 = vmatprep.mubr.bf16.mxu0 0
      %436 = vmatmul.mubr.bf16.gmra.mrb[0].mxu0 %v387
      %v437 = vpop.f32.mrb[0].mxu0
      %v438 = vadd.f32 %v317, %v437
      %v439 = vpop.f32.mrb[0].mxu0
      %v440 = vpop.f32.mrb[0].mxu0
      %v441 = vadd.f32 %v320, %v440
      %v442 = vpop.f32.mrb[0].mxu0
      %443 = vmatprep.mubr.bf16.mxu0 0
      %444 = vmatmul.mubr.bf16.gmra.mrb[0].mxu0 %v390
      %v445 = vpop.f32.mrb[0].mxu0
      %v446 = vadd.f32 %v325, %v445
      %v447 = vpop.f32.mrb[0].mxu0
      %v448 = vpop.f32.mrb[0].mxu0
      %v449 = vadd.f32 %v328, %v448
      %v450 = vpop.f32.mrb[0].mxu0
      %451 = vmatprep.mubr.bf16.mxu0 0
      %452 = vmatmul.mubr.bf16.gmra.mrb[0].mxu0 %v393
      %v453 = vpop.f32.mrb[0].mxu0
      %v454 = vadd.f32 %v333, %v453
      %v455 = vpop.f32.mrb[0].mxu0
      %v456 = vpop.f32.mrb[0].mxu0
      %v457 = vadd.f32 %v336, %v456
      %v458 = vpop.f32.mrb[0].mxu0
      %459 = vdwg.mxu0
      %v460 = vld [vmem:[%s172] sm:$0xf]
      %v461 = vld [vmem:[%s172 + $0x4] sm:$0x1]
      %v462 = vld [vmem:[%s172 + $0x8] sm:$0xf]
      %v463 = vld [vmem:[%s172 + $0xc] sm:$0x1]
      %v464 = vld [vmem:[%s172 + $0x10] sm:$0xf]
      %v465 = vld [vmem:[%s172 + $0x14] sm:$0x1]
      %v466 = vld [vmem:[%s172 + $0x18] sm:$0xf]
      %v467 = vld [vmem:[%s172 + $0x1c] sm:$0x1]
      %v468 = vld [vmem:[%s172 + $0x20] sm:$0xf]
      %v469 = vld [vmem:[%s172 + $0x24] sm:$0x1]
      %v470 = vld [vmem:[%s172 + $0x28] sm:$0xf]
      %v471 = vld [vmem:[%s172 + $0x2c] sm:$0x1]
      %v472 = vld [vmem:[%s172 + $0x30] sm:$0xf]
      %v473 = vld [vmem:[%s172 + $0x34] sm:$0x1]
      %v474 = vld [vmem:[%s172 + $0x38] sm:$0xf]
      %v475 = vld [vmem:[%s172 + $0x3c] sm:$0x1]
      %vm476 = vsmask.f32 3328
      %vm477 = vsmask.f32 7440
      %vm478 = vmor %vm476, %vm477
      %v480 = vshrl.u32 %v460, 16
      %v482 = vrot.slane %v480, 4
      %v483 = vshll.u32 %v460, 16
      %v485 = vrot.slane %v483, 5
      %v486 = vor.u32 %v482, %v485
      %v487 = vrot.slane %v486, 4
      %v489 = vshll.u32 %v461, 16
      %v491 = vrot.slane %v489, 5
      %v492 = vsel %vm478, %v487, %v491
      %v494 = vshrl.u32 %v462, 16
      %v496 = vrot.slane %v494, 4
      %v497 = vshll.u32 %v462, 16
      %v499 = vrot.slane %v497, 5
      %v500 = vor.u32 %v496, %v499
      %v501 = vrot.slane %v500, 4
      %v503 = vshll.u32 %v463, 16
      %v505 = vrot.slane %v503, 5
      %v506 = vsel %vm478, %v501, %v505
      %v508 = vshrl.u32 %v464, 16
      %v510 = vrot.slane %v508, 4
      %v511 = vshll.u32 %v464, 16
      %v513 = vrot.slane %v511, 5
      %v514 = vor.u32 %v510, %v513
      %v515 = vrot.slane %v514, 4
      %v517 = vshll.u32 %v465, 16
      %v519 = vrot.slane %v517, 5
      %v520 = vsel %vm478, %v515, %v519
      %v522 = vshrl.u32 %v466, 16
      %v524 = vrot.slane %v522, 4
      %v525 = vshll.u32 %v466, 16
      %v527 = vrot.slane %v525, 5
      %v528 = vor.u32 %v524, %v527
      %v529 = vrot.slane %v528, 4
      %v531 = vshll.u32 %v467, 16
      %v533 = vrot.slane %v531, 5
      %v534 = vsel %vm478, %v529, %v533
      %v536 = vshrl.u32 %v468, 16
      %v538 = vrot.slane %v536, 4
      %v539 = vshll.u32 %v468, 16
      %v541 = vrot.slane %v539, 5
      %v542 = vor.u32 %v538, %v541
      %v543 = vrot.slane %v542, 4
      %v545 = vshll.u32 %v469, 16
      %v547 = vrot.slane %v545, 5
      %v548 = vsel %vm478, %v543, %v547
      %v550 = vshrl.u32 %v470, 16
      %v552 = vrot.slane %v550, 4
      %v553 = vshll.u32 %v470, 16
      %v555 = vrot.slane %v553, 5
      %v556 = vor.u32 %v552, %v555
      %v557 = vrot.slane %v556, 4
      %v559 = vshll.u32 %v471, 16
      %v561 = vrot.slane %v559, 5
      %v562 = vsel %vm478, %v557, %v561
      %v564 = vshrl.u32 %v472, 16
      %v566 = vrot.slane %v564, 4
      %v567 = vshll.u32 %v472, 16
      %v569 = vrot.slane %v567, 5
      %v570 = vor.u32 %v566, %v569
      %v571 = vrot.slane %v570, 4
      %v573 = vshll.u32 %v473, 16
      %v575 = vrot.slane %v573, 5
      %v576 = vsel %vm478, %v571, %v575
      %v578 = vshrl.u32 %v474, 16
      %v580 = vrot.slane %v578, 4
      %v581 = vshll.u32 %v474, 16
      %v583 = vrot.slane %v581, 5
      %v584 = vor.u32 %v580, %v583
      %v585 = vrot.slane %v584, 4
      %v587 = vshll.u32 %v475, 16
      %v589 = vrot.slane %v587, 5
      %v590 = vsel %vm478, %v585, %v589
      %s591 = scalar_lea.vmem %s1, 64
      %v592 = vld [vmem:[%s591] sm:$0xf]
      %v593 = vld [vmem:[%s591 + $0x4] sm:$0xf]
      %v594 = vld [vmem:[%s591 + $0x8] sm:$0xf]
      %v595 = vld [vmem:[%s591 + $0xc] sm:$0xf]
      %v596 = vld [vmem:[%s591 + $0x10] sm:$0xf]
      %v597 = vld [vmem:[%s591 + $0x14] sm:$0xf]
      %v598 = vld [vmem:[%s591 + $0x18] sm:$0xf]
      %v599 = vld [vmem:[%s591 + $0x1c] sm:$0xf]
      %v600 = vunpack.c.l.b16 %v492
      %v601 = vunpack.c.l.b16 %v506
      %v602 = vunpack.c.l.b16 %v520
      %v603 = vunpack.c.l.b16 %v534
      %v604 = vunpack.c.l.b16 %v548
      %v605 = vunpack.c.l.b16 %v562
      %v606 = vunpack.c.l.b16 %v576
      %v607 = vunpack.c.l.b16 %v590
      %v608 = vpack.c.b16 %v601, %v600
      %v609 = vpack.c.b16 %v603, %v602
      %v610 = vpack.c.b16 %v605, %v604
      %v611 = vpack.c.b16 %v607, %v606
      %v620 = vunpack.c.l.b16 %v592
      %v621 = vunpack.c.l.b16 %v593
      %v622 = vunpack.c.l.b16 %v594
      %v623 = vunpack.c.l.b16 %v595
      %v624 = vunpack.c.l.b16 %v596
      %v625 = vunpack.c.l.b16 %v597
      %v626 = vunpack.c.l.b16 %v598
      %v627 = vunpack.c.l.b16 %v599
      %v628 = vpack.c.b16 %v621, %v620
      %v629 = vpack.c.b16 %v623, %v622
      %v630 = vpack.c.b16 %v625, %v624
      %v631 = vpack.c.b16 %v627, %v626
      %v637 = vsel %vm261, %v608, 0
      %v640 = vsel %vm261, %v609, 0
      %v643 = vsel %vm261, %v610, 0
      %v646 = vsel %vm261, %v611, 0
      %648 = vmatprep.subr.bf16.mxu0 0
      %649 = vmatpush1.bf16.msra.mxu0 %v628
      %650 = vmatprep.subr.bf16.mxu0 0
      %651 = vmatpush1.bf16.msra.mxu0 %v629
      %652 = vmatprep.subr.bf16.mxu0 0
      %653 = vmatpush1.bf16.msra.mxu0 %v630
      %654 = vmatprep.subr.bf16.mxu0 0
      %655 = vmatpush1.bf16.msra.mxu0 %v631
      %656 = vmatprep.subr.bf16.mxu0 0
      %657 = vmatpush1.bf16.msra.mxu0 0
      %658 = vmatprep.subr.bf16.mxu0 0
      %659 = vmatpush1.bf16.msra.mxu0 0
      %660 = vmatprep.subr.bf16.mxu0 0
      %661 = vmatpush1.bf16.msra.mxu0 0
      %662 = vmatprep.subr.bf16.mxu0 0
      %663 = vmatpush1.bf16.msra.mxu0 0
      %664 = vmatprep.subr.bf16.mxu0 0
      %665 = vmatpush1.bf16.msra.mxu0 0
      %666 = vmatprep.subr.bf16.mxu0 0
      %667 = vmatpush1.bf16.msra.mxu0 0
      %668 = vmatprep.subr.bf16.mxu0 0
      %669 = vmatpush1.bf16.msra.mxu0 0
      %670 = vmatprep.subr.bf16.mxu0 0
      %671 = vmatpush1.bf16.msra.mxu0 0
      %672 = vmatprep.subr.bf16.mxu0 0
      %673 = vmatpush1.bf16.msra.mxu0 0
      %674 = vmatprep.subr.bf16.mxu0 0
      %675 = vmatpush1.bf16.msra.mxu0 0
      %676 = vmatprep.subr.bf16.mxu0 0
      %677 = vmatpush1.bf16.msra.mxu0 0
      %678 = vmatprep.subr.bf16.mxu0 0
      %679 = vmatpush1.bf16.msra.mxu0 0
      %680 = vmatprep.mubr.bf16.mxu0 0
      %681 = vmatmul.mubr.bf16.gmra.mrb[0].mxu0 %v637
      %v682 = vpop.f32.mrb[0].mxu0
      %v683 = vadd.f32 0.0, %v682
      %v684 = vpop.f32.mrb[0].mxu0
      %v685 = vpop.f32.mrb[0].mxu0
      %v686 = vadd.f32 0.0, %v685
      %v687 = vpop.f32.mrb[0].mxu0
      %688 = vmatprep.mubr.bf16.mxu0 0
      %689 = vmatmul.mubr.bf16.gmra.mrb[0].mxu0 %v640
      %v690 = vpop.f32.mrb[0].mxu0
      %v691 = vadd.f32 0.0, %v690
      %v692 = vpop.f32.mrb[0].mxu0
      %v693 = vpop.f32.mrb[0].mxu0
      %v694 = vadd.f32 0.0, %v693
      %v695 = vpop.f32.mrb[0].mxu0
      %696 = vmatprep.mubr.bf16.mxu0 0
      %697 = vmatmul.mubr.bf16.gmra.mrb[0].mxu0 %v643
      %v698 = vpop.f32.mrb[0].mxu0
      %v699 = vadd.f32 0.0, %v698
      %v700 = vpop.f32.mrb[0].mxu0
      %v701 = vpop.f32.mrb[0].mxu0
      %v702 = vadd.f32 0.0, %v701
      %v703 = vpop.f32.mrb[0].mxu0
      %704 = vmatprep.mubr.bf16.mxu0 0
      %705 = vmatmul.mubr.bf16.gmra.mrb[0].mxu0 %v646
      %v706 = vpop.f32.mrb[0].mxu0
      %v707 = vadd.f32 0.0, %v706
      %v708 = vpop.f32.mrb[0].mxu0
      %v709 = vpop.f32.mrb[0].mxu0
      %v710 = vadd.f32 0.0, %v709
      %v711 = vpop.f32.mrb[0].mxu0
      %712 = vdwg.mxu0
      %v713 = vadd.f32 %v430, %v683
      %v714 = vadd.f32 %v433, %v686
      %v715 = vadd.f32 %v438, %v691
      %v716 = vadd.f32 %v441, %v694
      %v717 = vadd.f32 %v446, %v699
      %v718 = vadd.f32 %v449, %v702
      %v719 = vadd.f32 %v454, %v707
      %v720 = vadd.f32 %v457, %v710
      %s721 = scalar_lea.vmem %s172, 144
      %v722 = vld [vmem:[%s721] sm:$0xf]
      %v723 = vld [vmem:[%s721 + $0x8] sm:$0xf]
      %v724 = vld [vmem:[%s721 + $0x10] sm:$0xf]
      %v725 = vld [vmem:[%s721 + $0x18] sm:$0xf]
      %v726 = vld [vmem:[%s721 + $0x20] sm:$0xf]
      %v727 = vld [vmem:[%s721 + $0x28] sm:$0xf]
      %v728 = vld [vmem:[%s721 + $0x30] sm:$0xf]
      %v729 = vld [vmem:[%s721 + $0x38] sm:$0xf]
      %s730 = scalar_lea.vmem %s1, 96
      %v731 = vld [vmem:[%s730] sm:$0xf]
      %v732 = vld [vmem:[%s730 + $0x4] sm:$0xf]
      %v733 = vld [vmem:[%s730 + $0x8] sm:$0xf]
      %v734 = vld [vmem:[%s730 + $0xc] sm:$0xf]
      %v735 = vld [vmem:[%s730 + $0x10] sm:$0xf]
      %v736 = vld [vmem:[%s730 + $0x14] sm:$0xf]
      %v737 = vld [vmem:[%s730 + $0x18] sm:$0xf]
      %v738 = vld [vmem:[%s730 + $0x1c] sm:$0xf]
      %v747 = vunpack.c.l.b16 %v722
      %v748 = vunpack.c.l.b16 %v723
      %v749 = vunpack.c.l.b16 %v724
      %v750 = vunpack.c.l.b16 %v725
      %v751 = vunpack.c.l.b16 %v726
      %v752 = vunpack.c.l.b16 %v727
      %v753 = vunpack.c.l.b16 %v728
      %v754 = vunpack.c.l.b16 %v729
      %v755 = vpack.c.b16 %v748, %v747
      %v756 = vpack.c.b16 %v750, %v749
      %v757 = vpack.c.b16 %v752, %v751
      %v758 = vpack.c.b16 %v754, %v753
      %v767 = vunpack.c.l.b16 %v731
      %v768 = vunpack.c.l.b16 %v732
      %v769 = vunpack.c.l.b16 %v733
      %v770 = vunpack.c.l.b16 %v734
      %v771 = vunpack.c.l.b16 %v735
      %v772 = vunpack.c.l.b16 %v736
      %v773 = vunpack.c.l.b16 %v737
      %v774 = vunpack.c.l.b16 %v738
      %v775 = vpack.c.b16 %v768, %v767
      %v776 = vpack.c.b16 %v770, %v769
      %v777 = vpack.c.b16 %v772, %v771
      %v778 = vpack.c.b16 %v774, %v773
      %v784 = vsel %vm261, %v755, 0
      %v787 = vsel %vm261, %v756, 0
      %v790 = vsel %vm261, %v757, 0
      %v793 = vsel %vm261, %v758, 0
      %795 = vmatprep.subr.bf16.mxu0 0
      %796 = vmatpush1.bf16.msra.mxu0 %v775
      %797 = vmatprep.subr.bf16.mxu0 0
      %798 = vmatpush1.bf16.msra.mxu0 %v776
      %799 = vmatprep.subr.bf16.mxu0 0
      %800 = vmatpush1.bf16.msra.mxu0 %v777
      %801 = vmatprep.subr.bf16.mxu0 0
      %802 = vmatpush1.bf16.msra.mxu0 %v778
      %803 = vmatprep.subr.bf16.mxu0 0
      %804 = vmatpush1.bf16.msra.mxu0 0
      %805 = vmatprep.subr.bf16.mxu0 0
      %806 = vmatpush1.bf16.msra.mxu0 0
      %807 = vmatprep.subr.bf16.mxu0 0
      %808 = vmatpush1.bf16.msra.mxu0 0
      %809 = vmatprep.subr.bf16.mxu0 0
      %810 = vmatpush1.bf16.msra.mxu0 0
      %811 = vmatprep.subr.bf16.mxu0 0
      %812 = vmatpush1.bf16.msra.mxu0 0
      %813 = vmatprep.subr.bf16.mxu0 0
      %814 = vmatpush1.bf16.msra.mxu0 0
      %815 = vmatprep.subr.bf16.mxu0 0
      %816 = vmatpush1.bf16.msra.mxu0 0
      %817 = vmatprep.subr.bf16.mxu0 0
      %818 = vmatpush1.bf16.msra.mxu0 0
      %819 = vmatprep.subr.bf16.mxu0 0
      %820 = vmatpush1.bf16.msra.mxu0 0
      %821 = vmatprep.subr.bf16.mxu0 0
      %822 = vmatpush1.bf16.msra.mxu0 0
      %823 = vmatprep.subr.bf16.mxu0 0
      %824 = vmatpush1.bf16.msra.mxu0 0
      %825 = vmatprep.subr.bf16.mxu0 0
      %826 = vmatpush1.bf16.msra.mxu0 0
      %827 = vmatprep.mubr.bf16.mxu0 0
      %828 = vmatmul.mubr.bf16.gmra.mrb[0].mxu0 %v784
      %v829 = vpop.f32.mrb[0].mxu0
      %v830 = vadd.f32 0.0, %v829
      %v831 = vpop.f32.mrb[0].mxu0
      %v832 = vpop.f32.mrb[0].mxu0
      %v833 = vadd.f32 0.0, %v832
      %v834 = vpop.f32.mrb[0].mxu0
      %835 = vmatprep.mubr.bf16.mxu0 0
      %836 = vmatmul.mubr.bf16.gmra.mrb[0].mxu0 %v787
      %v837 = vpop.f32.mrb[0].mxu0
      %v838 = vadd.f32 0.0, %v837
      %v839 = vpop.f32.mrb[0].mxu0
      %v840 = vpop.f32.mrb[0].mxu0
      %v841 = vadd.f32 0.0, %v840
      %v842 = vpop.f32.mrb[0].mxu0
      %843 = vmatprep.mubr.bf16.mxu0 0
      %844 = vmatmul.mubr.bf16.gmra.mrb[0].mxu0 %v790
      %v845 = vpop.f32.mrb[0].mxu0
      %v846 = vadd.f32 0.0, %v845
      %v847 = vpop.f32.mrb[0].mxu0
      %v848 = vpop.f32.mrb[0].mxu0
      %v849 = vadd.f32 0.0, %v848
      %v850 = vpop.f32.mrb[0].mxu0
      %851 = vmatprep.mubr.bf16.mxu0 0
      %852 = vmatmul.mubr.bf16.gmra.mrb[0].mxu0 %v793
      %v853 = vpop.f32.mrb[0].mxu0
      %v854 = vadd.f32 0.0, %v853
      %v855 = vpop.f32.mrb[0].mxu0
      %v856 = vpop.f32.mrb[0].mxu0
      %v857 = vadd.f32 0.0, %v856
      %v858 = vpop.f32.mrb[0].mxu0
      %859 = vdwg.mxu0
      %v860 = vadd.f32 %v713, %v830
      %v861 = vadd.f32 %v714, %v833
      %v862 = vadd.f32 %v715, %v838
      %v863 = vadd.f32 %v716, %v841
      %v864 = vadd.f32 %v717, %v846
      %v865 = vadd.f32 %v718, %v849
      %v866 = vadd.f32 %v719, %v854
      %v867 = vadd.f32 %v720, %v857
      %s868 = scalar_lea.vmem %s172, 216
      %v869 = vld [vmem:[%s868] sm:$0xf]
      %v870 = vld [vmem:[%s868 + $0x8] sm:$0xf]
      %v871 = vld [vmem:[%s868 + $0x10] sm:$0xf]
      %v872 = vld [vmem:[%s868 + $0x18] sm:$0xf]
      %v873 = vld [vmem:[%s868 + $0x20] sm:$0xf]
      %v874 = vld [vmem:[%s868 + $0x28] sm:$0xf]
      %v875 = vld [vmem:[%s868 + $0x30] sm:$0xf]
      %v876 = vld [vmem:[%s868 + $0x38] sm:$0xf]
      %s877 = scalar_lea.vmem %s1, 128
      %v878 = vld [vmem:[%s877] sm:$0xf]
      %v879 = vld [vmem:[%s877 + $0x4] sm:$0xf]
      %v880 = vld [vmem:[%s877 + $0x8] sm:$0xf]
      %v881 = vld [vmem:[%s877 + $0xc] sm:$0xf]
      %v882 = vld [vmem:[%s877 + $0x10] sm:$0xf]
      %v883 = vld [vmem:[%s877 + $0x14] sm:$0xf]
      %v884 = vld [vmem:[%s877 + $0x18] sm:$0xf]
      %v885 = vld [vmem:[%s877 + $0x1c] sm:$0xf]
      %v894 = vunpack.c.l.b16 %v869
      %v895 = vunpack.c.l.b16 %v870
      %v896 = vunpack.c.l.b16 %v871
      %v897 = vunpack.c.l.b16 %v872
      %v898 = vunpack.c.l.b16 %v873
      %v899 = vunpack.c.l.b16 %v874
      %v900 = vunpack.c.l.b16 %v875
      %v901 = vunpack.c.l.b16 %v876
      %v902 = vpack.c.b16 %v895, %v894
      %v903 = vpack.c.b16 %v897, %v896
      %v904 = vpack.c.b16 %v899, %v898
      %v905 = vpack.c.b16 %v901, %v900
      %v914 = vunpack.c.l.b16 %v878
      %v915 = vunpack.c.l.b16 %v879
      %v916 = vunpack.c.l.b16 %v880
      %v917 = vunpack.c.l.b16 %v881
      %v918 = vunpack.c.l.b16 %v882
      %v919 = vunpack.c.l.b16 %v883
      %v920 = vunpack.c.l.b16 %v884
      %v921 = vunpack.c.l.b16 %v885
      %v922 = vpack.c.b16 %v915, %v914
      %v923 = vpack.c.b16 %v917, %v916
      %v924 = vpack.c.b16 %v919, %v918
      %v925 = vpack.c.b16 %v921, %v920
      %v931 = vsel %vm261, %v902, 0
      %v934 = vsel %vm261, %v903, 0
      %v937 = vsel %vm261, %v904, 0
      %v940 = vsel %vm261, %v905, 0
      %942 = vmatprep.subr.bf16.mxu0 0
      %943 = vmatpush1.bf16.msra.mxu0 %v922
      %944 = vmatprep.subr.bf16.mxu0 0
      %945 = vmatpush1.bf16.msra.mxu0 %v923
      %946 = vmatprep.subr.bf16.mxu0 0
      %947 = vmatpush1.bf16.msra.mxu0 %v924
      %948 = vmatprep.subr.bf16.mxu0 0
      %949 = vmatpush1.bf16.msra.mxu0 %v925
      %950 = vmatprep.subr.bf16.mxu0 0
      %951 = vmatpush1.bf16.msra.mxu0 0
      %952 = vmatprep.subr.bf16.mxu0 0
      %953 = vmatpush1.bf16.msra.mxu0 0
      %954 = vmatprep.subr.bf16.mxu0 0
      %955 = vmatpush1.bf16.msra.mxu0 0
      %956 = vmatprep.subr.bf16.mxu0 0
      %957 = vmatpush1.bf16.msra.mxu0 0
      %958 = vmatprep.subr.bf16.mxu0 0
      %959 = vmatpush1.bf16.msra.mxu0 0
      %960 = vmatprep.subr.bf16.mxu0 0
      %961 = vmatpush1.bf16.msra.mxu0 0
      %962 = vmatprep.subr.bf16.mxu0 0
      %963 = vmatpush1.bf16.msra.mxu0 0
      %964 = vmatprep.subr.bf16.mxu0 0
      %965 = vmatpush1.bf16.msra.mxu0 0
      %966 = vmatprep.subr.bf16.mxu0 0
      %967 = vmatpush1.bf16.msra.mxu0 0
      %968 = vmatprep.subr.bf16.mxu0 0
      %969 = vmatpush1.bf16.msra.mxu0 0
      %970 = vmatprep.subr.bf16.mxu0 0
      %971 = vmatpush1.bf16.msra.mxu0 0
      %972 = vmatprep.subr.bf16.mxu0 0
      %973 = vmatpush1.bf16.msra.mxu0 0
      %974 = vmatprep.mubr.bf16.mxu0 0
      %975 = vmatmul.mubr.bf16.gmra.mrb[0].mxu0 %v931
      %v976 = vpop.f32.mrb[0].mxu0
      %v977 = vadd.f32 0.0, %v976
      %v978 = vpop.f32.mrb[0].mxu0
      %v979 = vpop.f32.mrb[0].mxu0
      %v980 = vadd.f32 0.0, %v979
      %v981 = vpop.f32.mrb[0].mxu0
      %982 = vmatprep.mubr.bf16.mxu0 0
      %983 = vmatmul.mubr.bf16.gmra.mrb[0].mxu0 %v934
      %v984 = vpop.f32.mrb[0].mxu0
      %v985 = vadd.f32 0.0, %v984
      %v986 = vpop.f32.mrb[0].mxu0
      %v987 = vpop.f32.mrb[0].mxu0
      %v988 = vadd.f32 0.0, %v987
      %v989 = vpop.f32.mrb[0].mxu0
      %990 = vmatprep.mubr.bf16.mxu0 0
      %991 = vmatmul.mubr.bf16.gmra.mrb[0].mxu0 %v937
      %v992 = vpop.f32.mrb[0].mxu0
      %v993 = vadd.f32 0.0, %v992
      %v994 = vpop.f32.mrb[0].mxu0
      %v995 = vpop.f32.mrb[0].mxu0
      %v996 = vadd.f32 0.0, %v995
      %v997 = vpop.f32.mrb[0].mxu0
      %998 = vmatprep.mubr.bf16.mxu0 0
      %999 = vmatmul.mubr.bf16.gmra.mrb[0].mxu0 %v940
      %v1000 = vpop.f32.mrb[0].mxu0
      %v1001 = vadd.f32 0.0, %v1000
      %v1002 = vpop.f32.mrb[0].mxu0
      %v1003 = vpop.f32.mrb[0].mxu0
      %v1004 = vadd.f32 0.0, %v1003
      %v1005 = vpop.f32.mrb[0].mxu0
      %1006 = vdwg.mxu0
      %v1007 = vadd.f32 %v860, %v977
      %v1008 = vadd.f32 %v861, %v980
      %v1009 = vadd.f32 %v862, %v985
      %v1010 = vadd.f32 %v863, %v988
      %v1011 = vadd.f32 %v864, %v993
      %v1012 = vadd.f32 %v865, %v996
      %v1013 = vadd.f32 %v866, %v1001
      %v1014 = vadd.f32 %v867, %v1004
      %v1015 = vld [vmem:[%s721] sm:$0xf]
      %v1016 = vld [vmem:[%s721 + $0x4] sm:$0x1]
      %v1017 = vld [vmem:[%s721 + $0x8] sm:$0xf]
      %v1018 = vld [vmem:[%s721 + $0xc] sm:$0x1]
      %v1019 = vld [vmem:[%s721 + $0x10] sm:$0xf]
      %v1020 = vld [vmem:[%s721 + $0x14] sm:$0x1]
      %v1021 = vld [vmem:[%s721 + $0x18] sm:$0xf]
      %v1022 = vld [vmem:[%s721 + $0x1c] sm:$0x1]
      %v1023 = vld [vmem:[%s721 + $0x20] sm:$0xf]
      %v1024 = vld [vmem:[%s721 + $0x24] sm:$0x1]
      %v1025 = vld [vmem:[%s721 + $0x28] sm:$0xf]
      %v1026 = vld [vmem:[%s721 + $0x2c] sm:$0x1]
      %v1027 = vld [vmem:[%s721 + $0x30] sm:$0xf]
      %v1028 = vld [vmem:[%s721 + $0x34] sm:$0x1]
      %v1029 = vld [vmem:[%s721 + $0x38] sm:$0xf]
      %v1030 = vld [vmem:[%s721 + $0x3c] sm:$0x1]
      %v1032 = vshrl.u32 %v1015, 16
      %v1034 = vrot.slane %v1032, 4
      %v1035 = vshll.u32 %v1015, 16
      %v1037 = vrot.slane %v1035, 5
      %v1038 = vor.u32 %v1034, %v1037
      %v1039 = vrot.slane %v1038, 4
      %v1041 = vshll.u32 %v1016, 16
      %v1043 = vrot.slane %v1041, 5
      %v1044 = vsel %vm478, %v1039, %v1043
      %v1046 = vshrl.u32 %v1017, 16
      %v1048 = vrot.slane %v1046, 4
      %v1049 = vshll.u32 %v1017, 16
      %v1051 = vrot.slane %v1049, 5
      %v1052 = vor.u32 %v1048, %v1051
      %v1053 = vrot.slane %v1052, 4
      %v1055 = vshll.u32 %v1018, 16
      %v1057 = vrot.slane %v1055, 5
      %v1058 = vsel %vm478, %v1053, %v1057
      %v1060 = vshrl.u32 %v1019, 16
      %v1062 = vrot.slane %v1060, 4
      %v1063 = vshll.u32 %v1019, 16
      %v1065 = vrot.slane %v1063, 5
      %v1066 = vor.u32 %v1062, %v1065
      %v1067 = vrot.slane %v1066, 4
      %v1069 = vshll.u32 %v1020, 16
      %v1071 = vrot.slane %v1069, 5
      %v1072 = vsel %vm478, %v1067, %v1071
      %v1074 = vshrl.u32 %v1021, 16
      %v1076 = vrot.slane %v1074, 4
      %v1077 = vshll.u32 %v1021, 16
      %v1079 = vrot.slane %v1077, 5
      %v1080 = vor.u32 %v1076, %v1079
      %v1081 = vrot.slane %v1080, 4
      %v1083 = vshll.u32 %v1022, 16
      %v1085 = vrot.slane %v1083, 5
      %v1086 = vsel %vm478, %v1081, %v1085
      %v1088 = vshrl.u32 %v1023, 16
      %v1090 = vrot.slane %v1088, 4
      %v1091 = vshll.u32 %v1023, 16
      %v1093 = vrot.slane %v1091, 5
      %v1094 = vor.u32 %v1090, %v1093
      %v1095 = vrot.slane %v1094, 4
      %v1097 = vshll.u32 %v1024, 16
      %v1099 = vrot.slane %v1097, 5
      %v1100 = vsel %vm478, %v1095, %v1099
      %v1102 = vshrl.u32 %v1025, 16
      %v1104 = vrot.slane %v1102, 4
      %v1105 = vshll.u32 %v1025, 16
      %v1107 = vrot.slane %v1105, 5
      %v1108 = vor.u32 %v1104, %v1107
      %v1109 = vrot.slane %v1108, 4
      %v1111 = vshll.u32 %v1026, 16
      %v1113 = vrot.slane %v1111, 5
      %v1114 = vsel %vm478, %v1109, %v1113
      %v1116 = vshrl.u32 %v1027, 16
      %v1118 = vrot.slane %v1116, 4
      %v1119 = vshll.u32 %v1027, 16
      %v1121 = vrot.slane %v1119, 5
      %v1122 = vor.u32 %v1118, %v1121
      %v1123 = vrot.slane %v1122, 4
      %v1125 = vshll.u32 %v1028, 16
      %v1127 = vrot.slane %v1125, 5
      %v1128 = vsel %vm478, %v1123, %v1127
      %v1130 = vshrl.u32 %v1029, 16
      %v1132 = vrot.slane %v1130, 4
      %v1133 = vshll.u32 %v1029, 16
      %v1135 = vrot.slane %v1133, 5
      %v1136 = vor.u32 %v1132, %v1135
      %v1137 = vrot.slane %v1136, 4
      %v1139 = vshll.u32 %v1030, 16
      %v1141 = vrot.slane %v1139, 5
      %v1142 = vsel %vm478, %v1137, %v1141
      %s1143 = scalar_lea.vmem %s1, 160
      %v1144 = vld [vmem:[%s1143] sm:$0xf]
      %v1145 = vld [vmem:[%s1143 + $0x4] sm:$0xf]
      %v1146 = vld [vmem:[%s1143 + $0x8] sm:$0xf]
      %v1147 = vld [vmem:[%s1143 + $0xc] sm:$0xf]
      %v1148 = vld [vmem:[%s1143 + $0x10] sm:$0xf]
      %v1149 = vld [vmem:[%s1143 + $0x14] sm:$0xf]
      %v1150 = vld [vmem:[%s1143 + $0x18] sm:$0xf]
      %v1151 = vld [vmem:[%s1143 + $0x1c] sm:$0xf]
      %v1152 = vunpack.c.l.b16 %v1044
      %v1153 = vunpack.c.l.b16 %v1058
      %v1154 = vunpack.c.l.b16 %v1072
      %v1155 = vunpack.c.l.b16 %v1086
      %v1156 = vunpack.c.l.b16 %v1100
      %v1157 = vunpack.c.l.b16 %v1114
      %v1158 = vunpack.c.l.b16 %v1128
      %v1159 = vunpack.c.l.b16 %v1142
      %v1160 = vpack.c.b16 %v1153, %v1152
      %v1161 = vpack.c.b16 %v1155, %v1154
      %v1162 = vpack.c.b16 %v1157, %v1156
      %v1163 = vpack.c.b16 %v1159, %v1158
      %v1172 = vunpack.c.l.b16 %v1144
      %v1173 = vunpack.c.l.b16 %v1145
      %v1174 = vunpack.c.l.b16 %v1146
      %v1175 = vunpack.c.l.b16 %v1147
      %v1176 = vunpack.c.l.b16 %v1148
      %v1177 = vunpack.c.l.b16 %v1149
      %v1178 = vunpack.c.l.b16 %v1150
      %v1179 = vunpack.c.l.b16 %v1151
      %v1180 = vpack.c.b16 %v1173, %v1172
      %v1181 = vpack.c.b16 %v1175, %v1174
      %v1182 = vpack.c.b16 %v1177, %v1176
      %v1183 = vpack.c.b16 %v1179, %v1178
      %v1189 = vsel %vm261, %v1160, 0
      %v1192 = vsel %vm261, %v1161, 0
      %v1195 = vsel %vm261, %v1162, 0
      %v1198 = vsel %vm261, %v1163, 0
      %1200 = vmatprep.subr.bf16.mxu0 0
      %1201 = vmatpush1.bf16.msra.mxu0 %v1180
      %1202 = vmatprep.subr.bf16.mxu0 0
      %1203 = vmatpush1.bf16.msra.mxu0 %v1181
      %1204 = vmatprep.subr.bf16.mxu0 0
      %1205 = vmatpush1.bf16.msra.mxu0 %v1182
      %1206 = vmatprep.subr.bf16.mxu0 0
      %1207 = vmatpush1.bf16.msra.mxu0 %v1183
      %1208 = vmatprep.subr.bf16.mxu0 0
      %1209 = vmatpush1.bf16.msra.mxu0 0
      %1210 = vmatprep.subr.bf16.mxu0 0
      %1211 = vmatpush1.bf16.msra.mxu0 0
      %1212 = vmatprep.subr.bf16.mxu0 0
      %1213 = vmatpush1.bf16.msra.mxu0 0
      %1214 = vmatprep.subr.bf16.mxu0 0
      %1215 = vmatpush1.bf16.msra.mxu0 0
      %1216 = vmatprep.subr.bf16.mxu0 0
      %1217 = vmatpush1.bf16.msra.mxu0 0
      %1218 = vmatprep.subr.bf16.mxu0 0
      %1219 = vmatpush1.bf16.msra.mxu0 0
      %1220 = vmatprep.subr.bf16.mxu0 0
      %1221 = vmatpush1.bf16.msra.mxu0 0
      %1222 = vmatprep.subr.bf16.mxu0 0
      %1223 = vmatpush1.bf16.msra.mxu0 0
      %1224 = vmatprep.subr.bf16.mxu0 0
      %1225 = vmatpush1.bf16.msra.mxu0 0
      %1226 = vmatprep.subr.bf16.mxu0 0
      %1227 = vmatpush1.bf16.msra.mxu0 0
      %1228 = vmatprep.subr.bf16.mxu0 0
      %1229 = vmatpush1.bf16.msra.mxu0 0
      %1230 = vmatprep.subr.bf16.mxu0 0
      %1231 = vmatpush1.bf16.msra.mxu0 0
      %1232 = vmatprep.mubr.bf16.mxu0 0
      %1233 = vmatmul.mubr.bf16.gmra.mrb[0].mxu0 %v1189
      %v1234 = vpop.f32.mrb[0].mxu0
      %v1235 = vadd.f32 0.0, %v1234
      %v1236 = vpop.f32.mrb[0].mxu0
      %v1237 = vpop.f32.mrb[0].mxu0
      %v1238 = vadd.f32 0.0, %v1237
      %v1239 = vpop.f32.mrb[0].mxu0
      %1240 = vmatprep.mubr.bf16.mxu0 0
      %1241 = vmatmul.mubr.bf16.gmra.mrb[0].mxu0 %v1192
      %v1242 = vpop.f32.mrb[0].mxu0
      %v1243 = vadd.f32 0.0, %v1242
      %v1244 = vpop.f32.mrb[0].mxu0
      %v1245 = vpop.f32.mrb[0].mxu0
      %v1246 = vadd.f32 0.0, %v1245
      %v1247 = vpop.f32.mrb[0].mxu0
      %1248 = vmatprep.mubr.bf16.mxu0 0
      %1249 = vmatmul.mubr.bf16.gmra.mrb[0].mxu0 %v1195
      %v1250 = vpop.f32.mrb[0].mxu0
      %v1251 = vadd.f32 0.0, %v1250
      %v1252 = vpop.f32.mrb[0].mxu0
      %v1253 = vpop.f32.mrb[0].mxu0
      %v1254 = vadd.f32 0.0, %v1253
      %v1255 = vpop.f32.mrb[0].mxu0
      %1256 = vmatprep.mubr.bf16.mxu0 0
      %1257 = vmatmul.mubr.bf16.gmra.mrb[0].mxu0 %v1198
      %v1258 = vpop.f32.mrb[0].mxu0
      %v1259 = vadd.f32 0.0, %v1258
      %v1260 = vpop.f32.mrb[0].mxu0
      %v1261 = vpop.f32.mrb[0].mxu0
      %v1262 = vadd.f32 0.0, %v1261
      %v1263 = vpop.f32.mrb[0].mxu0
      %1264 = vdwg.mxu0
      %v1265 = vadd.f32 %v1007, %v1235
      %v1266 = vadd.f32 %v1008, %v1238
      %v1267 = vadd.f32 %v1009, %v1243
      %v1268 = vadd.f32 %v1010, %v1246
      %v1269 = vadd.f32 %v1011, %v1251
      %v1270 = vadd.f32 %v1012, %v1254
      %v1271 = vadd.f32 %v1013, %v1259
      %v1272 = vadd.f32 %v1014, %v1262
      %s1273 = scalar_lea.vmem %s172, 8
      %v1274 = vld [vmem:[%s1273] sm:$0xf]
      %v1275 = vld [vmem:[%s1273 + $0x8] sm:$0xf]
      %v1276 = vld [vmem:[%s1273 + $0x10] sm:$0xf]
      %v1277 = vld [vmem:[%s1273 + $0x18] sm:$0xf]
      %v1278 = vld [vmem:[%s1273 + $0x20] sm:$0xf]
      %v1279 = vld [vmem:[%s1273 + $0x28] sm:$0xf]
      %v1280 = vld [vmem:[%s1273 + $0x30] sm:$0xf]
      %v1281 = vld [vmem:[%s1273 + $0x38] sm:$0xf]
      %s1282 = scalar_lea.vmem %s1, 192
      %v1283 = vld [vmem:[%s1282] sm:$0xf]
      %v1284 = vld [vmem:[%s1282 + $0x4] sm:$0xf]
      %v1285 = vld [vmem:[%s1282 + $0x8] sm:$0xf]
      %v1286 = vld [vmem:[%s1282 + $0xc] sm:$0xf]
      %v1287 = vld [vmem:[%s1282 + $0x10] sm:$0xf]
      %v1288 = vld [vmem:[%s1282 + $0x14] sm:$0xf]
      %v1289 = vld [vmem:[%s1282 + $0x18] sm:$0xf]
      %v1290 = vld [vmem:[%s1282 + $0x1c] sm:$0xf]
      %v1299 = vunpack.c.l.b16 %v1274
      %v1300 = vunpack.c.l.b16 %v1275
      %v1301 = vunpack.c.l.b16 %v1276
      %v1302 = vunpack.c.l.b16 %v1277
      %v1303 = vunpack.c.l.b16 %v1278
      %v1304 = vunpack.c.l.b16 %v1279
      %v1305 = vunpack.c.l.b16 %v1280
      %v1306 = vunpack.c.l.b16 %v1281
      %v1307 = vpack.c.b16 %v1300, %v1299
      %v1308 = vpack.c.b16 %v1302, %v1301
      %v1309 = vpack.c.b16 %v1304, %v1303
      %v1310 = vpack.c.b16 %v1306, %v1305
      %v1319 = vunpack.c.l.b16 %v1283
      %v1320 = vunpack.c.l.b16 %v1284
      %v1321 = vunpack.c.l.b16 %v1285
      %v1322 = vunpack.c.l.b16 %v1286
      %v1323 = vunpack.c.l.b16 %v1287
      %v1324 = vunpack.c.l.b16 %v1288
      %v1325 = vunpack.c.l.b16 %v1289
      %v1326 = vunpack.c.l.b16 %v1290
      %v1327 = vpack.c.b16 %v1320, %v1319
      %v1328 = vpack.c.b16 %v1322, %v1321
      %v1329 = vpack.c.b16 %v1324, %v1323
      %v1330 = vpack.c.b16 %v1326, %v1325
      %v1336 = vsel %vm261, %v1307, 0
      %v1339 = vsel %vm261, %v1308, 0
      %v1342 = vsel %vm261, %v1309, 0
      %v1345 = vsel %vm261, %v1310, 0
      %1347 = vmatprep.subr.bf16.mxu0 0
      %1348 = vmatpush1.bf16.msra.mxu0 %v1327
      %1349 = vmatprep.subr.bf16.mxu0 0
      %1350 = vmatpush1.bf16.msra.mxu0 %v1328
      %1351 = vmatprep.subr.bf16.mxu0 0
      %1352 = vmatpush1.bf16.msra.mxu0 %v1329
      %1353 = vmatprep.subr.bf16.mxu0 0
      %1354 = vmatpush1.bf16.msra.mxu0 %v1330
      %1355 = vmatprep.subr.bf16.mxu0 0
      %1356 = vmatpush1.bf16.msra.mxu0 0
      %1357 = vmatprep.subr.bf16.mxu0 0
      %1358 = vmatpush1.bf16.msra.mxu0 0
      %1359 = vmatprep.subr.bf16.mxu0 0
      %1360 = vmatpush1.bf16.msra.mxu0 0
      %1361 = vmatprep.subr.bf16.mxu0 0
      %1362 = vmatpush1.bf16.msra.mxu0 0
      %1363 = vmatprep.subr.bf16.mxu0 0
      %1364 = vmatpush1.bf16.msra.mxu0 0
      %1365 = vmatprep.subr.bf16.mxu0 0
      %1366 = vmatpush1.bf16.msra.mxu0 0
      %1367 = vmatprep.subr.bf16.mxu0 0
      %1368 = vmatpush1.bf16.msra.mxu0 0
      %1369 = vmatprep.subr.bf16.mxu0 0
      %1370 = vmatpush1.bf16.msra.mxu0 0
      %1371 = vmatprep.subr.bf16.mxu0 0
      %1372 = vmatpush1.bf16.msra.mxu0 0
      %1373 = vmatprep.subr.bf16.mxu0 0
      %1374 = vmatpush1.bf16.msra.mxu0 0
      %1375 = vmatprep.subr.bf16.mxu0 0
      %1376 = vmatpush1.bf16.msra.mxu0 0
      %1377 = vmatprep.subr.bf16.mxu0 0
      %1378 = vmatpush1.bf16.msra.mxu0 0
      %1379 = vmatprep.mubr.bf16.mxu0 0
      %1380 = vmatmul.mubr.bf16.gmra.mrb[0].mxu0 %v1336
      %v1381 = vpop.f32.mrb[0].mxu0
      %v1382 = vadd.f32 0.0, %v1381
      %v1383 = vpop.f32.mrb[0].mxu0
      %v1384 = vpop.f32.mrb[0].mxu0
      %v1385 = vadd.f32 0.0, %v1384
      %v1386 = vpop.f32.mrb[0].mxu0
      %1387 = vmatprep.mubr.bf16.mxu0 0
      %1388 = vmatmul.mubr.bf16.gmra.mrb[0].mxu0 %v1339
      %v1389 = vpop.f32.mrb[0].mxu0
      %v1390 = vadd.f32 0.0, %v1389
      %v1391 = vpop.f32.mrb[0].mxu0
      %v1392 = vpop.f32.mrb[0].mxu0
      %v1393 = vadd.f32 0.0, %v1392
      %v1394 = vpop.f32.mrb[0].mxu0
      %1395 = vmatprep.mubr.bf16.mxu0 0
      %1396 = vmatmul.mubr.bf16.gmra.mrb[0].mxu0 %v1342
      %v1397 = vpop.f32.mrb[0].mxu0
      %v1398 = vadd.f32 0.0, %v1397
      %v1399 = vpop.f32.mrb[0].mxu0
      %v1400 = vpop.f32.mrb[0].mxu0
      %v1401 = vadd.f32 0.0, %v1400
      %v1402 = vpop.f32.mrb[0].mxu0
      %1403 = vmatprep.mubr.bf16.mxu0 0
      %1404 = vmatmul.mubr.bf16.gmra.mrb[0].mxu0 %v1345
      %v1405 = vpop.f32.mrb[0].mxu0
      %v1406 = vadd.f32 0.0, %v1405
      %v1407 = vpop.f32.mrb[0].mxu0
      %v1408 = vpop.f32.mrb[0].mxu0
      %v1409 = vadd.f32 0.0, %v1408
      %v1410 = vpop.f32.mrb[0].mxu0
      %1411 = vdwg.mxu0
      %v1412 = vadd.f32 %v1265, %v1382
      %v1413 = vadd.f32 %v1266, %v1385
      %v1414 = vadd.f32 %v1267, %v1390
      %v1415 = vadd.f32 %v1268, %v1393
      %v1416 = vadd.f32 %v1269, %v1398
      %v1417 = vadd.f32 %v1270, %v1401
      %v1418 = vadd.f32 %v1271, %v1406
      %v1419 = vadd.f32 %v1272, %v1409
      %s1420 = scalar_lea.vmem %s172, 80
      %v1421 = vld [vmem:[%s1420] sm:$0xf]
      %v1422 = vld [vmem:[%s1420 + $0x8] sm:$0xf]
      %v1423 = vld [vmem:[%s1420 + $0x10] sm:$0xf]
      %v1424 = vld [vmem:[%s1420 + $0x18] sm:$0xf]
      %v1425 = vld [vmem:[%s1420 + $0x20] sm:$0xf]
      %v1426 = vld [vmem:[%s1420 + $0x28] sm:$0xf]
      %v1427 = vld [vmem:[%s1420 + $0x30] sm:$0xf]
      %v1428 = vld [vmem:[%s1420 + $0x38] sm:$0xf]
      %s1429 = scalar_lea.vmem %s1, 224
      %v1430 = vld [vmem:[%s1429] sm:$0xf]
      %v1431 = vld [vmem:[%s1429 + $0x4] sm:$0xf]
      %v1432 = vld [vmem:[%s1429 + $0x8] sm:$0xf]
      %v1433 = vld [vmem:[%s1429 + $0xc] sm:$0xf]
      %v1434 = vld [vmem:[%s1429 + $0x10] sm:$0xf]
      %v1435 = vld [vmem:[%s1429 + $0x14] sm:$0xf]
      %v1436 = vld [vmem:[%s1429 + $0x18] sm:$0xf]
      %v1437 = vld [vmem:[%s1429 + $0x1c] sm:$0xf]
      %v1446 = vunpack.c.l.b16 %v1421
      %v1447 = vunpack.c.l.b16 %v1422
      %v1448 = vunpack.c.l.b16 %v1423
      %v1449 = vunpack.c.l.b16 %v1424
      %v1450 = vunpack.c.l.b16 %v1425
      %v1451 = vunpack.c.l.b16 %v1426
      %v1452 = vunpack.c.l.b16 %v1427
      %v1453 = vunpack.c.l.b16 %v1428
      %v1454 = vpack.c.b16 %v1447, %v1446
      %v1455 = vpack.c.b16 %v1449, %v1448
      %v1456 = vpack.c.b16 %v1451, %v1450
      %v1457 = vpack.c.b16 %v1453, %v1452
      %v1466 = vunpack.c.l.b16 %v1430
      %v1467 = vunpack.c.l.b16 %v1431
      %v1468 = vunpack.c.l.b16 %v1432
      %v1469 = vunpack.c.l.b16 %v1433
      %v1470 = vunpack.c.l.b16 %v1434
      %v1471 = vunpack.c.l.b16 %v1435
      %v1472 = vunpack.c.l.b16 %v1436
      %v1473 = vunpack.c.l.b16 %v1437
      %v1474 = vpack.c.b16 %v1467, %v1466
      %v1475 = vpack.c.b16 %v1469, %v1468
      %v1476 = vpack.c.b16 %v1471, %v1470
      %v1477 = vpack.c.b16 %v1473, %v1472
      %v1483 = vsel %vm261, %v1454, 0
      %v1486 = vsel %vm261, %v1455, 0
      %v1489 = vsel %vm261, %v1456, 0
      %v1492 = vsel %vm261, %v1457, 0
      %1494 = vmatprep.subr.bf16.mxu0 0
      %1495 = vmatpush1.bf16.msra.mxu0 %v1474
      %1496 = vmatprep.subr.bf16.mxu0 0
      %1497 = vmatpush1.bf16.msra.mxu0 %v1475
      %1498 = vmatprep.subr.bf16.mxu0 0
      %1499 = vmatpush1.bf16.msra.mxu0 %v1476
      %1500 = vmatprep.subr.bf16.mxu0 0
      %1501 = vmatpush1.bf16.msra.mxu0 %v1477
      %1502 = vmatprep.subr.bf16.mxu0 0
      %1503 = vmatpush1.bf16.msra.mxu0 0
      %1504 = vmatprep.subr.bf16.mxu0 0
      %1505 = vmatpush1.bf16.msra.mxu0 0
      %1506 = vmatprep.subr.bf16.mxu0 0
      %1507 = vmatpush1.bf16.msra.mxu0 0
      %1508 = vmatprep.subr.bf16.mxu0 0
      %1509 = vmatpush1.bf16.msra.mxu0 0
      %1510 = vmatprep.subr.bf16.mxu0 0
      %1511 = vmatpush1.bf16.msra.mxu0 0
      %1512 = vmatprep.subr.bf16.mxu0 0
      %1513 = vmatpush1.bf16.msra.mxu0 0
      %1514 = vmatprep.subr.bf16.mxu0 0
      %1515 = vmatpush1.bf16.msra.mxu0 0
      %1516 = vmatprep.subr.bf16.mxu0 0
      %1517 = vmatpush1.bf16.msra.mxu0 0
      %1518 = vmatprep.subr.bf16.mxu0 0
      %1519 = vmatpush1.bf16.msra.mxu0 0
      %1520 = vmatprep.subr.bf16.mxu0 0
      %1521 = vmatpush1.bf16.msra.mxu0 0
      %1522 = vmatprep.subr.bf16.mxu0 0
      %1523 = vmatpush1.bf16.msra.mxu0 0
      %1524 = vmatprep.subr.bf16.mxu0 0
      %1525 = vmatpush1.bf16.msra.mxu0 0
      %1526 = vmatprep.mubr.bf16.mxu0 0
      %1527 = vmatmul.mubr.bf16.gmra.mrb[0].mxu0 %v1483
      %v1528 = vpop.f32.mrb[0].mxu0
      %v1529 = vadd.f32 0.0, %v1528
      %v1530 = vpop.f32.mrb[0].mxu0
      %v1531 = vpop.f32.mrb[0].mxu0
      %v1532 = vadd.f32 0.0, %v1531
      %v1533 = vpop.f32.mrb[0].mxu0
      %1534 = vmatprep.mubr.bf16.mxu0 0
      %1535 = vmatmul.mubr.bf16.gmra.mrb[0].mxu0 %v1486
      %v1536 = vpop.f32.mrb[0].mxu0
      %v1537 = vadd.f32 0.0, %v1536
      %v1538 = vpop.f32.mrb[0].mxu0
      %v1539 = vpop.f32.mrb[0].mxu0
      %v1540 = vadd.f32 0.0, %v1539
      %v1541 = vpop.f32.mrb[0].mxu0
      %1542 = vmatprep.mubr.bf16.mxu0 0
      %1543 = vmatmul.mubr.bf16.gmra.mrb[0].mxu0 %v1489
      %v1544 = vpop.f32.mrb[0].mxu0
      %v1545 = vadd.f32 0.0, %v1544
      %v1546 = vpop.f32.mrb[0].mxu0
      %v1547 = vpop.f32.mrb[0].mxu0
      %v1548 = vadd.f32 0.0, %v1547
      %v1549 = vpop.f32.mrb[0].mxu0
      %1550 = vmatprep.mubr.bf16.mxu0 0
      %1551 = vmatmul.mubr.bf16.gmra.mrb[0].mxu0 %v1492
      %v1552 = vpop.f32.mrb[0].mxu0
      %v1553 = vadd.f32 0.0, %v1552
      %v1554 = vpop.f32.mrb[0].mxu0
      %v1555 = vpop.f32.mrb[0].mxu0
      %v1556 = vadd.f32 0.0, %v1555
      %v1557 = vpop.f32.mrb[0].mxu0
      %1558 = vdwg.mxu0
      %v1559 = vadd.f32 %v1412, %v1529
      %v1560 = vadd.f32 %v1413, %v1532
      %v1561 = vadd.f32 %v1414, %v1537
      %v1562 = vadd.f32 %v1415, %v1540
      %v1563 = vadd.f32 %v1416, %v1545
      %v1564 = vadd.f32 %v1417, %v1548
      %v1565 = vadd.f32 %v1418, %v1553
      %v1566 = vadd.f32 %v1419, %v1556
      %v1567 = vld [vmem:[%s1273] sm:$0xf]
      %v1568 = vld [vmem:[%s1273 + $0x4] sm:$0x1]
      %v1569 = vld [vmem:[%s1273 + $0x8] sm:$0xf]
      %v1570 = vld [vmem:[%s1273 + $0xc] sm:$0x1]
      %v1571 = vld [vmem:[%s1273 + $0x10] sm:$0xf]
      %v1572 = vld [vmem:[%s1273 + $0x14] sm:$0x1]
      %v1573 = vld [vmem:[%s1273 + $0x18] sm:$0xf]
      %v1574 = vld [vmem:[%s1273 + $0x1c] sm:$0x1]
      %v1575 = vld [vmem:[%s1273 + $0x20] sm:$0xf]
      %v1576 = vld [vmem:[%s1273 + $0x24] sm:$0x1]
      %v1577 = vld [vmem:[%s1273 + $0x28] sm:$0xf]
      %v1578 = vld [vmem:[%s1273 + $0x2c] sm:$0x1]
      %v1579 = vld [vmem:[%s1273 + $0x30] sm:$0xf]
      %v1580 = vld [vmem:[%s1273 + $0x34] sm:$0x1]
      %v1581 = vld [vmem:[%s1273 + $0x38] sm:$0xf]
      %v1582 = vld [vmem:[%s1273 + $0x3c] sm:$0x1]
      %v1584 = vshrl.u32 %v1567, 16
      %v1586 = vrot.slane %v1584, 4
      %v1587 = vshll.u32 %v1567, 16
      %v1589 = vrot.slane %v1587, 5
      %v1590 = vor.u32 %v1586, %v1589
      %v1591 = vrot.slane %v1590, 4
      %v1593 = vshll.u32 %v1568, 16
      %v1595 = vrot.slane %v1593, 5
      %v1596 = vsel %vm478, %v1591, %v1595
      %v1598 = vshrl.u32 %v1569, 16
      %v1600 = vrot.slane %v1598, 4
      %v1601 = vshll.u32 %v1569, 16
      %v1603 = vrot.slane %v1601, 5
      %v1604 = vor.u32 %v1600, %v1603
      %v1605 = vrot.slane %v1604, 4
      %v1607 = vshll.u32 %v1570, 16
      %v1609 = vrot.slane %v1607, 5
      %v1610 = vsel %vm478, %v1605, %v1609
      %v1612 = vshrl.u32 %v1571, 16
      %v1614 = vrot.slane %v1612, 4
      %v1615 = vshll.u32 %v1571, 16
      %v1617 = vrot.slane %v1615, 5
      %v1618 = vor.u32 %v1614, %v1617
      %v1619 = vrot.slane %v1618, 4
      %v1621 = vshll.u32 %v1572, 16
      %v1623 = vrot.slane %v1621, 5
      %v1624 = vsel %vm478, %v1619, %v1623
      %v1626 = vshrl.u32 %v1573, 16
      %v1628 = vrot.slane %v1626, 4
      %v1629 = vshll.u32 %v1573, 16
      %v1631 = vrot.slane %v1629, 5
      %v1632 = vor.u32 %v1628, %v1631
      %v1633 = vrot.slane %v1632, 4
      %v1635 = vshll.u32 %v1574, 16
      %v1637 = vrot.slane %v1635, 5
      %v1638 = vsel %vm478, %v1633, %v1637
      %v1640 = vshrl.u32 %v1575, 16
      %v1642 = vrot.slane %v1640, 4
      %v1643 = vshll.u32 %v1575, 16
      %v1645 = vrot.slane %v1643, 5
      %v1646 = vor.u32 %v1642, %v1645
      %v1647 = vrot.slane %v1646, 4
      %v1649 = vshll.u32 %v1576, 16
      %v1651 = vrot.slane %v1649, 5
      %v1652 = vsel %vm478, %v1647, %v1651
      %v1654 = vshrl.u32 %v1577, 16
      %v1656 = vrot.slane %v1654, 4
      %v1657 = vshll.u32 %v1577, 16
      %v1659 = vrot.slane %v1657, 5
      %v1660 = vor.u32 %v1656, %v1659
      %v1661 = vrot.slane %v1660, 4
      %v1663 = vshll.u32 %v1578, 16
      %v1665 = vrot.slane %v1663, 5
      %v1666 = vsel %vm478, %v1661, %v1665
      %v1668 = vshrl.u32 %v1579, 16
      %v1670 = vrot.slane %v1668, 4
      %v1671 = vshll.u32 %v1579, 16
      %v1673 = vrot.slane %v1671, 5
      %v1674 = vor.u32 %v1670, %v1673
      %v1675 = vrot.slane %v1674, 4
      %v1677 = vshll.u32 %v1580, 16
      %v1679 = vrot.slane %v1677, 5
      %v1680 = vsel %vm478, %v1675, %v1679
      %v1682 = vshrl.u32 %v1581, 16
      %v1684 = vrot.slane %v1682, 4
      %v1685 = vshll.u32 %v1581, 16
      %v1687 = vrot.slane %v1685, 5
      %v1688 = vor.u32 %v1684, %v1687
      %v1689 = vrot.slane %v1688, 4
      %v1691 = vshll.u32 %v1582, 16
      %v1693 = vrot.slane %v1691, 5
      %v1694 = vsel %vm478, %v1689, %v1693
      %s1695 = scalar_lea.vmem %s1, 256
      %v1696 = vld [vmem:[%s1695] sm:$0xf]
      %v1697 = vld [vmem:[%s1695 + $0x4] sm:$0xf]
      %v1698 = vld [vmem:[%s1695 + $0x8] sm:$0xf]
      %v1699 = vld [vmem:[%s1695 + $0xc] sm:$0xf]
      %v1700 = vld [vmem:[%s1695 + $0x10] sm:$0xf]
      %v1701 = vld [vmem:[%s1695 + $0x14] sm:$0xf]
      %v1702 = vld [vmem:[%s1695 + $0x18] sm:$0xf]
      %v1703 = vld [vmem:[%s1695 + $0x1c] sm:$0xf]
      %v1704 = vunpack.c.l.b16 %v1596
      %v1705 = vunpack.c.l.b16 %v1610
      %v1706 = vunpack.c.l.b16 %v1624
      %v1707 = vunpack.c.l.b16 %v1638
      %v1708 = vunpack.c.l.b16 %v1652
      %v1709 = vunpack.c.l.b16 %v1666
      %v1710 = vunpack.c.l.b16 %v1680
      %v1711 = vunpack.c.l.b16 %v1694
      %v1712 = vpack.c.b16 %v1705, %v1704
      %v1713 = vpack.c.b16 %v1707, %v1706
      %v1714 = vpack.c.b16 %v1709, %v1708
      %v1715 = vpack.c.b16 %v1711, %v1710
      %v1724 = vunpack.c.l.b16 %v1696
      %v1725 = vunpack.c.l.b16 %v1697
      %v1726 = vunpack.c.l.b16 %v1698
      %v1727 = vunpack.c.l.b16 %v1699
      %v1728 = vunpack.c.l.b16 %v1700
      %v1729 = vunpack.c.l.b16 %v1701
      %v1730 = vunpack.c.l.b16 %v1702
      %v1731 = vunpack.c.l.b16 %v1703
      %v1732 = vpack.c.b16 %v1725, %v1724
      %v1733 = vpack.c.b16 %v1727, %v1726
      %v1734 = vpack.c.b16 %v1729, %v1728
      %v1735 = vpack.c.b16 %v1731, %v1730
      %v1741 = vsel %vm261, %v1712, 0
      %v1744 = vsel %vm261, %v1713, 0
      %v1747 = vsel %vm261, %v1714, 0
      %v1750 = vsel %vm261, %v1715, 0
      %1752 = vmatprep.subr.bf16.mxu0 0
      %1753 = vmatpush1.bf16.msra.mxu0 %v1732
      %1754 = vmatprep.subr.bf16.mxu0 0
      %1755 = vmatpush1.bf16.msra.mxu0 %v1733
      %1756 = vmatprep.subr.bf16.mxu0 0
      %1757 = vmatpush1.bf16.msra.mxu0 %v1734
      %1758 = vmatprep.subr.bf16.mxu0 0
      %1759 = vmatpush1.bf16.msra.mxu0 %v1735
      %1760 = vmatprep.subr.bf16.mxu0 0
      %1761 = vmatpush1.bf16.msra.mxu0 0
      %1762 = vmatprep.subr.bf16.mxu0 0
      %1763 = vmatpush1.bf16.msra.mxu0 0
      %1764 = vmatprep.subr.bf16.mxu0 0
      %1765 = vmatpush1.bf16.msra.mxu0 0
      %1766 = vmatprep.subr.bf16.mxu0 0
      %1767 = vmatpush1.bf16.msra.mxu0 0
      %1768 = vmatprep.subr.bf16.mxu0 0
      %1769 = vmatpush1.bf16.msra.mxu0 0
      %1770 = vmatprep.subr.bf16.mxu0 0
      %1771 = vmatpush1.bf16.msra.mxu0 0
      %1772 = vmatprep.subr.bf16.mxu0 0
      %1773 = vmatpush1.bf16.msra.mxu0 0
      %1774 = vmatprep.subr.bf16.mxu0 0
      %1775 = vmatpush1.bf16.msra.mxu0 0
      %1776 = vmatprep.subr.bf16.mxu0 0
      %1777 = vmatpush1.bf16.msra.mxu0 0
      %1778 = vmatprep.subr.bf16.mxu0 0
      %1779 = vmatpush1.bf16.msra.mxu0 0
      %1780 = vmatprep.subr.bf16.mxu0 0
      %1781 = vmatpush1.bf16.msra.mxu0 0
      %1782 = vmatprep.subr.bf16.mxu0 0
      %1783 = vmatpush1.bf16.msra.mxu0 0
      %1784 = vmatprep.mubr.bf16.mxu0 0
      %1785 = vmatmul.mubr.bf16.gmra.mrb[0].mxu0 %v1741
      %v1786 = vpop.f32.mrb[0].mxu0
      %v1787 = vadd.f32 0.0, %v1786
      %v1788 = vpop.f32.mrb[0].mxu0
      %v1789 = vpop.f32.mrb[0].mxu0
      %v1790 = vadd.f32 0.0, %v1789
      %v1791 = vpop.f32.mrb[0].mxu0
      %1792 = vmatprep.mubr.bf16.mxu0 0
      %1793 = vmatmul.mubr.bf16.gmra.mrb[0].mxu0 %v1744
      %v1794 = vpop.f32.mrb[0].mxu0
      %v1795 = vadd.f32 0.0, %v1794
      %v1796 = vpop.f32.mrb[0].mxu0
      %v1797 = vpop.f32.mrb[0].mxu0
      %v1798 = vadd.f32 0.0, %v1797
      %v1799 = vpop.f32.mrb[0].mxu0
      %1800 = vmatprep.mubr.bf16.mxu0 0
      %1801 = vmatmul.mubr.bf16.gmra.mrb[0].mxu0 %v1747
      %v1802 = vpop.f32.mrb[0].mxu0
      %v1803 = vadd.f32 0.0, %v1802
      %v1804 = vpop.f32.mrb[0].mxu0
      %v1805 = vpop.f32.mrb[0].mxu0
      %v1806 = vadd.f32 0.0, %v1805
      %v1807 = vpop.f32.mrb[0].mxu0
      %1808 = vmatprep.mubr.bf16.mxu0 0
      %1809 = vmatmul.mubr.bf16.gmra.mrb[0].mxu0 %v1750
      %v1810 = vpop.f32.mrb[0].mxu0
      %v1811 = vadd.f32 0.0, %v1810
      %v1812 = vpop.f32.mrb[0].mxu0
      %v1813 = vpop.f32.mrb[0].mxu0
      %v1814 = vadd.f32 0.0, %v1813
      %v1815 = vpop.f32.mrb[0].mxu0
      %1816 = vdwg.mxu0
      %v1817 = vadd.f32 %v1559, %v1787
      %v1818 = vadd.f32 %v1560, %v1790
      %v1819 = vadd.f32 %v1561, %v1795
      %v1820 = vadd.f32 %v1562, %v1798
      %v1821 = vadd.f32 %v1563, %v1803
      %v1822 = vadd.f32 %v1564, %v1806
      %v1823 = vadd.f32 %v1565, %v1811
      %v1824 = vadd.f32 %v1566, %v1814
      %1825 = vst [vmem:[%s177] sm:$0xff] %v1817
      %1826 = vst [vmem:[%s177 + $0x8] sm:$0xff] %v1818
      %1827 = vst [vmem:[%s177 + $0x10] sm:$0xff] %v1819
      %1828 = vst [vmem:[%s177 + $0x18] sm:$0xff] %v1820
      %1829 = vst [vmem:[%s177 + $0x20] sm:$0xff] %v1821
      %1830 = vst [vmem:[%s177 + $0x28] sm:$0xff] %v1822
      %1831 = vst [vmem:[%s177 + $0x30] sm:$0xff] %v1823
      %1832 = vst [vmem:[%s177 + $0x38] sm:$0xff] %v1824
      %v1833 = vadd.f32 %v1817, %v1818
      %v1834 = vadd.f32 %v1833, %v1819
      %v1835 = vadd.f32 %v1834, %v1820
      %v1836 = vadd.f32 %v1835, %v1821
      %v1837 = vadd.f32 %v1836, %v1822
      %v1838 = vadd.f32 %v1837, %v1823
      %v1839 = vadd.f32 %v1838, %v1824
      %v1840 = vrot.slane %v1839, 4
      %v1841 = vadd.f32 %v1839, %v1840
      %v1842 = vrot.slane %v1841, 2
      %v1843 = vadd.f32 %v1841, %v1842
      %v1844 = vrot.slane %v1843, 1
      %v1845 = vadd.f32 %v1843, %v1844
      %1846 = vst [vmem:[%s181] sm:$0x1] %v1845
      %v1847 = vmul.f32 %v1817, %v1817
      %v1848 = vmul.f32 %v1818, %v1818
      %v1849 = vmul.f32 %v1819, %v1819
      %v1850 = vmul.f32 %v1820, %v1820
      %v1851 = vmul.f32 %v1821, %v1821
      %v1852 = vmul.f32 %v1822, %v1822
      %v1853 = vmul.f32 %v1823, %v1823
      %v1854 = vmul.f32 %v1824, %v1824
      %v1855 = vadd.f32 %v1847, %v1848
      %v1856 = vadd.f32 %v1855, %v1849
      %v1857 = vadd.f32 %v1856, %v1850
      %v1858 = vadd.f32 %v1857, %v1851
      %v1859 = vadd.f32 %v1858, %v1852
      %v1860 = vadd.f32 %v1859, %v1853
      %v1861 = vadd.f32 %v1860, %v1854
      %v1862 = vrot.slane %v1861, 4
      %v1863 = vadd.f32 %v1861, %v1862
      %v1864 = vrot.slane %v1863, 2
      %v1865 = vadd.f32 %v1863, %v1864
      %v1866 = vrot.slane %v1865, 1
      %v1867 = vadd.f32 %v1865, %v1866
      %1868 = vst [vmem:[%s181 + $0x1] sm:$0x1] %v1867
      %p1869 = scmp.lt.s32.totalorder %s15, 1
      %s1870 = scalar_select %p1869, %s15, 1
      %s1871 = smul.addr %s1870, 8
      %s1872 = smul.addr %s1871, 8
      %s1873 = scalar_lea.vmem %s2, %s1872
      %p1874 = scmp.lt.s32.totalorder %s15, 1
      %s1875 = scalar_select %p1874, %s15, 1
      %s1876 = smul.addr %s1875, 2
      %s1877 = scalar_lea.vmem %s3, %s1876
      // Predicated region
      $region29: #{basic_block_forward.3} parent=27 // pred_check
        %p1878 = pneg %p80
      $region30: #{basic_block_forward.3} parent=27 // pred_check_branch
        %1880 = sbr.rel (%p1878) target = $region32
      $region31: #{basic_block_forward.3} parent=27 // pred_region
        _
      $region32: #{basic_block_forward.3} parent=27 // pred_fallthru
        _
      // Predicated region
      $region33: #{basic_block_forward.3} parent=27 // pred_check
        %p1881 = pneg %p106
      $region34: #{basic_block_forward.3} parent=27 // pred_check_branch
        %1883 = sbr.rel (%p1881) target = $region36
      $region35: #{basic_block_forward.3} parent=27 // pred_region
        _
      $region36: #{basic_block_forward.3} parent=27 // pred_fallthru
        _
    $region28: #{basic_block_forward.3} parent=5 // pred_fallthru
      _
    %p1884 = scmp.le.s32.totalorder 2, %s10
    // Predicated region
    $region37: #{basic_block_forward.3} parent=5 // pred_check
      %p1885 = pneg %p1884
    $region38: #{basic_block_forward.3} parent=5 // pred_check_branch
      %1887 = sbr.rel (%p1885) target = $region40
    $region39: #{basic_block_forward.3} parent=5 // pred_region
      %s1888 = ssub.s32 %s10, 2
      // Predicated region
      $region41: #{basic_block_forward.3} parent=39 // pred_check
        %p1889 = pneg %p86
      $region42: #{basic_block_forward.3} parent=39 // pred_check_branch
        %1891 = sbr.rel (%p1889) target = $region44
      $region43: #{basic_block_forward.3} parent=39 // pred_region
        %p1892 = scmp.lt.s32.totalorder %s16, 1
        %s1893 = scalar_select %p1892, %s16, 1
        %s1894 = smul.addr %s1893, 8
        %s1895 = smul.addr %s1894, 8
        %s1896 = scalar_lea.vmem %s2, %s1895
      $region44: #{basic_block_forward.3} parent=39 // pred_fallthru
        _
      // Predicated region
      $region45: #{basic_block_forward.3} parent=39 // pred_check
        %p1897 = pneg %p112
      $region46: #{basic_block_forward.3} parent=39 // pred_check_branch
        %1899 = sbr.rel (%p1897) target = $region48
      $region47: #{basic_block_forward.3} parent=39 // pred_region
        %p1900 = scmp.lt.s32.totalorder %s16, 1
        %s1901 = scalar_select %p1900, %s16, 1
        %s1902 = smul.addr %s1901, 2
        %s1903 = scalar_lea.vmem %s3, %s1902
      $region48: #{basic_block_forward.3} parent=39 // pred_fallthru
        _
    $region40: #{basic_block_forward.3} parent=5 // pred_fallthru
      _
  $region6: #{basic_block_forward.3} parent=0 // loop_footer
    %s14 = sadd.s32 1, %s10
  $region7: #{basic_block_forward.3} parent=0 // loop_footer_branch
    %9 = sbr.rel target = $region3
  $region8: #{basic_block_forward.3} parent=0 // loop_exit
    _

</llo_original>
